<compile_context>
chip_gen: v5e
topology: v5e:2x2
jax: 0.10.0
libtpu: 0.0.40
codegen_flags: <defaults>
</compile_context>

<pallas_src>
import functools
import math

import jax
import jax.numpy as jnp
import numpy as np
from jax.experimental import pallas as pl
from jax.experimental.pallas import tpu as pltpu


def _round_up(x, m):
    return ((x + m - 1) // m) * m


# ----------------------------------------------------------------------------
# Fused multi-layer GRU recurrence kernel (grid over time chunks).
# ----------------------------------------------------------------------------
def _make_fused_gru_kernel(num_layers, hp, tchunk, seq_len):
    """Builds the kernel. Ref order (positional):
       gx_ref    : (tchunk, B, 3*Hp) f32   precomputed layer-0 input gates
       whh_ref   : (L, Hp, 3*Hp)           hidden weights, gate order [r|z|n]
       bhn_ref   : (L, 1, Hp)        f32   b_hn (stays inside the r-gated term)
       h0_ref    : (L, B, Hp)        f32   initial hidden state
      [wih_ref   : (L-1, Hp, 3*Hp)]        input weights of layers 1..L-1
      [brest_ref : (L-1, 1, 3*Hp)   f32]   folded biases of layers 1..L-1
       y_ref     : (tchunk, B, Hp)         per-step output of the LAST layer
       hn_ref    : (L, B, Hp)        f32   final hidden state per layer
       h_scratch : (L, B, Hp)        f32   recurrent state (persists over chunks)
    """

    def kernel(gx_ref, whh_ref, bhn_ref, h0_ref, *rest):
        if num_layers > 1:
            wih_ref, brest_ref, y_ref, hn_ref, h_scratch = rest
        else:
            y_ref, hn_ref, h_scratch = rest

        c = pl.program_id(0)

        # Initialize the recurrent state on the first chunk.
        @pl.when(c == 0)
        def _():
            h_scratch[...] = h0_ref[...].astype(jnp.float32)

        # Time-invariant operands, hoisted out of the recurrence (loaded once
        # per chunk; Mosaic keeps big values in VMEM-backed temporaries).
        whh = [whh_ref[l] for l in range(num_layers)]
        bhn = [bhn_ref[l].astype(jnp.float32) for l in range(num_layers)]
        if num_layers > 1:
            wih = [wih_ref[l] for l in range(num_layers - 1)]
            brest = [brest_ref[l].astype(jnp.float32)
                     for l in range(num_layers - 1)]

        def gru_cell(gx, h_prev, whh_l, bhn_l):
            # One fused (B,Hp)@(Hp,3Hp) MXU dot for all three gates, f32 acc.
            # TODO(synk): matmul_push_rhs once per chunk instead of re-feeding
            #             the weights into the systolic array every step.
            gh = jnp.dot(h_prev.astype(whh_l.dtype), whh_l,
                         preferred_element_type=jnp.float32)
            r = jax.nn.sigmoid(gx[:, :hp] + gh[:, :hp])
            z = jax.nn.sigmoid(gx[:, hp:2 * hp] + gh[:, hp:2 * hp])
            n = jnp.tanh(gx[:, 2 * hp:] + r * (gh[:, 2 * hp:] + bhn_l))
            return (1.0 - z) * n + z * h_prev

        def step(i, hs):
            t = c * tchunk + i
            valid = t < seq_len          # mask padded tail steps (Tp > T)
            gates = gx_ref[i]            # (B, 3Hp) f32, biases folded in
            new_hs = []
            for l in range(num_layers):
                h_new = gru_cell(gates, hs[l], whh[l], bhn[l])
                h_new = jnp.where(valid, h_new, hs[l])
                new_hs.append(h_new)
                if l + 1 < num_layers:
                    # Next layer's input projection: resident weights, fused
                    # with its folded biases.
                    gates = jnp.dot(h_new.astype(wih[l].dtype), wih[l],
                                    preferred_element_type=jnp.float32) + brest[l]
            y_ref[i] = new_hs[-1].astype(y_ref.dtype)
            return tuple(new_hs)

        h_init = tuple(h_scratch[l] for l in range(num_layers))
        h_last = jax.lax.fori_loop(0, tchunk, step, h_init, unroll=True)
        for l in range(num_layers):
            h_scratch[l] = h_last[l]
        hn_ref[...] = h_scratch[...]

    return kernel


# ----------------------------------------------------------------------------
# Wrapper: hoisted layer-0 projection + single fused Pallas recurrence call.
# ----------------------------------------------------------------------------
@functools.partial(jax.jit, static_argnames=("tchunk",))
def cpcar_gru_forward(x_tm, wih0_cat, b_fold0, whh_all, bhn_all,
                      wih_rest, b_rest, h0, *, tchunk=32):
    """x_tm: (T,B,Din) time-major. Returns (y, h_n): (T,B,H), (L,B,H)."""
    T, B, Din = x_tm.shape
    L, Hp, _ = whh_all.shape
    H = h0.shape[-1]

    # Hoisted layer-0 input projection: one big MXU matmul over all T steps,
    # T*B rows packed into the M/sublane dim, biases folded in, f32 acc.
    gx = jnp.dot(x_tm.reshape(T * B, Din).astype(wih0_cat.dtype), wih0_cat,
                 preferred_element_type=jnp.float32) + b_fold0
    gx = gx.reshape(T, B, 3 * Hp)

    h0p = h0.astype(jnp.float32)
    if Hp != H:
        h0p = jnp.pad(h0p, ((0, 0), (0, 0), (0, Hp - H)))

    # Chunk the time axis; padded tail steps are masked inside the kernel.
    tchunk = max(1, min(tchunk, T))
    n_chunks = pl.cdiv(T, tchunk)
    Tp = n_chunks * tchunk
    if Tp != T:
        gx = jnp.pad(gx, ((0, Tp - T), (0, 0), (0, 0)))

    kernel = _make_fused_gru_kernel(L, Hp, tchunk, T)

    def const_spec(shape):
        return pl.BlockSpec(shape, lambda c: (0, 0, 0))

    in_specs = [
        pl.BlockSpec((tchunk, B, 3 * Hp), lambda c: (c, 0, 0)),  # gx per chunk
        const_spec((L, Hp, 3 * Hp)),                             # whh_all
        const_spec((L, 1, Hp)),                                  # bhn_all
        const_spec((L, B, Hp)),                                  # h0
    ]
    inputs = [gx, whh_all, bhn_all, h0p]
    if L > 1:
        in_specs += [const_spec((L - 1, Hp, 3 * Hp)),            # wih layers>=1
                     const_spec((L - 1, 1, 3 * Hp))]             # biases >=1
        inputs += [wih_rest, b_rest]

    y, h_n = pl.pallas_call(
        kernel,
        out_shape=(jax.ShapeDtypeStruct((Tp, B, Hp), x_tm.dtype),
                   jax.ShapeDtypeStruct((L, B, Hp), jnp.float32)),
        grid_spec=pltpu.PrefetchScalarGridSpec(
            num_scalar_prefetch=0,
            grid=(n_chunks,),
            in_specs=in_specs,
            out_specs=[pl.BlockSpec((tchunk, B, Hp), lambda c: (c, 0, 0)),
                       const_spec((L, B, Hp))],
            scratch_shapes=[pltpu.VMEM((L, B, Hp), jnp.float32)],
        ),
        compiler_params=pltpu.CompilerParams(
            dimension_semantics=("arbitrary",)),  # time axis is a recurrence
    )(*inputs)

    return y[:T, :, :H], h_n[:, :, :H]


# ----------------------------------------------------------------------------
# CPCAR module (JAX glue around the fused Pallas GRU kernel).
# ----------------------------------------------------------------------------
class CPCAR:
    def __init__(self, dimEncoded, dimOutput, keepHidden, nLevelsGRU,
                 mode='GRU', reverse=False, *, key,
                 param_dtype=jnp.bfloat16, tchunk=32):
        # TODO(synk): only mode='GRU' (the default of the reference module) is
        # implemented as a Pallas kernel; LSTM/RNN variants are not provided.
        assert mode == 'GRU', "only GRU mode is implemented"
        self.RESIDUAL_STD = 0.1
        self.dimEncoded = dimEncoded
        self.dimOutput = dimOutput
        self.nLevels = nLevelsGRU
        self.keepHidden = keepHidden
        self.reverse = reverse
        self.hidden = None
        self.tchunk = tchunk

        H = dimOutput
        Hp = _round_up(H, 128)     # lane-align gate slices & output stores
        self.H, self.Hp = H, Hp

        # Deterministic PyTorch-style init: U(-1/sqrt(H), 1/sqrt(H)).
        k = 1.0 / math.sqrt(dimOutput)
        self.master_params = []    # f32, per-gate layout, for the reference check
        wih_cats, whh_cats, b_folds, bhns = [], [], [], []
        for layer in range(nLevelsGRU):
            din = dimEncoded if layer == 0 else dimOutput
            key, k1, k2, k3, k4 = jax.random.split(key, 5)
            wih = jax.random.uniform(k1, (3, din, H), jnp.float32, -k, k)
            whh = jax.random.uniform(k2, (3, H, H), jnp.float32, -k, k)
            bih = jax.random.uniform(k3, (3, H), jnp.float32, -k, k)
            bhh = jax.random.uniform(k4, (3, H), jnp.float32, -k, k)
            self.master_params.append((wih, whh, bih, bhh))

            # Kernel layout: gate-concatenated [r|z|n], zero-padded to Hp.
            # Padded rows/cols/biases are exact zeros -> padded hidden lanes
            # stay identically 0 through the recurrence.
            pad_c = Hp - H
            pad_r = 0 if layer == 0 else pad_c     # layers>=1 take (B,Hp) input
            wih_cat = jnp.concatenate(
                [jnp.pad(wih[g], ((0, pad_r), (0, pad_c))) for g in range(3)],
                axis=1)
            whh_cat = jnp.concatenate(
                [jnp.pad(whh[g], ((0, pad_c), (0, pad_c))) for g in range(3)],
                axis=1)
            b_fold = jnp.concatenate([
                jnp.pad(bih[0] + bhh[0], (0, pad_c)),
                jnp.pad(bih[1] + bhh[1], (0, pad_c)),
                jnp.pad(bih[2], (0, pad_c)),
            ])
            bhn = jnp.pad(bhh[2], (0, pad_c))[None, :]           # (1, Hp)

            wih_cats.append(wih_cat.astype(param_dtype))
            whh_cats.append(whh_cat.astype(param_dtype))
            b_folds.append(b_fold)                               # f32
            bhns.append(bhn)                                     # f32

        self.wih0_cat = wih_cats[0]                              # (Din, 3Hp)
        self.b_fold0 = b_folds[0]                                # (3Hp,)
        self.whh_all = jnp.stack(whh_cats, axis=0)               # (L, Hp, 3Hp)
        self.bhn_all = jnp.stack(bhns, axis=0)                   # (L, 1, Hp)
        if nLevelsGRU > 1:
            self.wih_rest = jnp.stack(wih_cats[1:], axis=0)      # (L-1, Hp, 3Hp)
            self.b_rest = jnp.stack([b[None, :] for b in b_folds[1:]],
                                    axis=0)                      # (L-1, 1, 3Hp)
        else:
            self.wih_rest = None
            self.b_rest = None

    def getDimOutput(self):
        return self.dimOutput

    def __call__(self, x):
        # x: (B, T, dimEncoded), batch-first, matching torch batch_first=True.
        B, T, _ = x.shape
        if self.reverse:
            x = jnp.flip(x, axis=1)

        x_tm = jnp.transpose(x, (1, 0, 2))       # (T, B, D) time-major

        if self.hidden is not None:
            h0 = self.hidden                     # (L, B, H) from previous call
        else:
            h0 = jnp.zeros((self.nLevels, B, self.H), jnp.float32)

        y_tm, h_n = cpcar_gru_forward(
            x_tm, self.wih0_cat, self.b_fold0, self.whh_all, self.bhn_all,
            self.wih_rest, self.b_rest, h0, tchunk=self.tchunk)

        if self.keepHidden:
            self.hidden = jax.lax.stop_gradient(h_n)

        out = jnp.transpose(y_tm, (1, 0, 2))     # back to (B, T, H)
        if self.reverse:
            out = jnp.flip(out, axis=1)
        return out


# ----------------------------------------------------------------------------
# Pure-JAX reference (lax.scan, f32 everywhere) for correctness checking.
# ----------------------------------------------------------------------------
def gru_reference(x, params, reverse=False):
    if reverse:
        x = jnp.flip(x, axis=1)
    B = x.shape[0]
    inp = jnp.swapaxes(x, 0, 1)                  # (T, B, D)
    finals = []
    for (wih, whh, bih, bhh) in params:
        H = whh.shape[-1]
        h0 = jnp.zeros((B, H), jnp.float32)

        def step(h, xt, wih=wih, whh=whh, bih=bih, bhh=bhh):
            gi = [xt @ wih[g] + bih[g] for g in range(3)]
            gh = [h @ whh[g] + bhh[g] for g in range(3)]
            r = jax.nn.sigmoid(gi[0] + gh[0])
            z = jax.nn.sigmoid(gi[1] + gh[1])
            n = jnp.tanh(gi[2] + r * gh[2])
            h_new = (1.0 - z) * n + z * h
            return h_new, h_new

        h_last, ys = jax.lax.scan(step, h0, inp)
        finals.append(h_last)
        inp = ys
    out = jnp.swapaxes(inp, 0, 1)
    if reverse:
        out = jnp.flip(out, axis=1)
    return out, jnp.stack(finals, axis=0)


if __name__ == "__main__":
    key = jax.random.PRNGKey(0)
    k_model, k_x, k_x2 = jax.random.split(key, 3)

    B, T = 2, 8
    dimEncoded, dimOutput, nLevelsGRU = 16, 32, 2

    x = jax.random.normal(k_x, (B, T, dimEncoded), jnp.float32)

    # 1) Exact-math check: f32 weights in the kernel path vs the f32 reference,
    #    including the final hidden state (validates padded-step masking).
    model_f32 = CPCAR(dimEncoded, dimOutput, keepHidden=True,
                      nLevelsGRU=nLevelsGRU, mode='GRU', reverse=False,
                      key=k_model, param_dtype=jnp.float32)
    out_f32 = jax.block_until_ready(model_f32(x))
    assert out_f32.shape == (B, T, dimOutput), out_f32.shape
    assert model_f32.hidden.shape == (nLevelsGRU, B, dimOutput)

    ref, ref_hn = gru_reference(x, model_f32.master_params, reverse=False)
    ref = jax.block_until_ready(ref)
    np.testing.assert_allclose(np.asarray(out_f32), np.asarray(ref),
                               rtol=1e-3, atol=1e-3)
    np.testing.assert_allclose(np.asarray(model_f32.hidden), np.asarray(ref_hn),
                               rtol=1e-3, atol=1e-3)

    # 2) Default path: bf16 weights (MXU bf16 throughput), f32 state/gate math.
    #    NOTE: bf16 rounding compounds over the recurrence; validate at
    #    realistic CPC T (~128+) before shipping the bf16 path.
    model = CPCAR(dimEncoded, dimOutput, keepHidden=True,
                  nLevelsGRU=nLevelsGRU, mode='GRU', reverse=False,
                  key=k_model)
    out = jax.block_until_ready(model(x))
    assert out.shape == (B, T, dimOutput), out.shape
    assert model.hidden.shape == (nLevelsGRU, B, dimOutput)
    np.testing.assert_allclose(np.asarray(out), np.asarray(ref),
                               rtol=3e-2, atol=3e-2)

    # 3) Multi-chunk + padded-tail path: T not a multiple of tchunk.
    T2 = 40
    x2 = jax.random.normal(k_x2, (B, T2, dimEncoded), jnp.float32)
    model_chunk = CPCAR(dimEncoded, dimOutput, keepHidden=False,
                        nLevelsGRU=nLevelsGRU, mode='GRU', reverse=False,
                        key=k_model, param_dtype=jnp.float32, tchunk=16)
    out_chunk = jax.block_until_ready(model_chunk(x2))
    ref2, _ = gru_reference(x2, model_chunk.master_params, reverse=False)
    np.testing.assert_allclose(np.asarray(out_chunk), np.asarray(ref2),
                               rtol=1e-3, atol=1e-3)

    # 4) Single-layer path (no in-kernel input projection branch).
    model_1 = CPCAR(dimEncoded, dimOutput, keepHidden=False,
                    nLevelsGRU=1, mode='GRU', reverse=False,
                    key=k_model, param_dtype=jnp.float32)
    out_1 = jax.block_until_ready(model_1(x))
    ref1, _ = gru_reference(x, model_1.master_params, reverse=False)
    np.testing.assert_allclose(np.asarray(out_1), np.asarray(ref1),
                               rtol=1e-3, atol=1e-3)

    print("KERNEL_OK")
</pallas_src>

<mosaic_0001>
module attributes {stable_mosaic.version = 11 : i64} {
  func.func @kernel(%arg0: i32, %arg1: memref<8x2x384xf32, #tpu.memory_space<vmem>>, %arg2: memref<2x128x384xf32, #tpu.memory_space<vmem>>, %arg3: memref<2x1x128xf32, #tpu.memory_space<vmem>>, %arg4: memref<2x2x128xf32, #tpu.memory_space<vmem>>, %arg5: memref<1x128x384xf32, #tpu.memory_space<vmem>>, %arg6: memref<1x1x384xf32, #tpu.memory_space<vmem>>, %arg7: memref<8x2x128xf32, #tpu.memory_space<vmem>>, %arg8: memref<2x2x128xf32, #tpu.memory_space<vmem>>, %arg9: memref<2x2x128xf32, #tpu.memory_space<vmem>>) attributes {dimension_semantics = [#tpu.dimension_semantics<arbitrary>], iteration_bounds = array<i64: 1>, scalar_prefetch = 0 : i64, scratch_operands = 1 : i64, tpu.core_type = #tpu.core_type<tc>, window_params = [{transform_indices = @transform_0, window_bounds = array<i64: 8, 2, 384>}, {pipeline_mode = #tpu.pipeline_mode<synchronous>, transform_indices = @transform_1, window_bounds = array<i64: 2, 128, 384>}, {pipeline_mode = #tpu.pipeline_mode<synchronous>, transform_indices = @transform_2, window_bounds = array<i64: 2, 1, 128>}, {pipeline_mode = #tpu.pipeline_mode<synchronous>, transform_indices = @transform_3, window_bounds = array<i64: 2, 2, 128>}, {pipeline_mode = #tpu.pipeline_mode<synchronous>, transform_indices = @transform_4, window_bounds = array<i64: 1, 128, 384>}, {pipeline_mode = #tpu.pipeline_mode<synchronous>, transform_indices = @transform_5, window_bounds = array<i64: 1, 1, 384>}, {transform_indices = @transform_6, window_bounds = array<i64: 8, 2, 128>}, {pipeline_mode = #tpu.pipeline_mode<synchronous>, transform_indices = @transform_7, window_bounds = array<i64: 2, 2, 128>}]} {
    %c0_i32 = arith.constant 0 : i32
    %0 = arith.cmpi eq, %arg0, %c0_i32 : i32
    %1 = arith.extui %0 : i1 to i32
    %c0_i32_0 = arith.constant 0 : i32
    %2 = arith.cmpi ne, %1, %c0_i32_0 : i32
    scf.if %2 {
      %c0_155 = arith.constant 0 : index
      %c0_156 = arith.constant 0 : index
      %c0_157 = arith.constant 0 : index
      %611 = vector.load %arg4[%c0_155, %c0_156, %c0_157] : memref<2x2x128xf32, #tpu.memory_space<vmem>>, vector<2x2x128xf32>
      %c0_158 = arith.constant 0 : index
      %c0_159 = arith.constant 0 : index
      %c0_160 = arith.constant 0 : index
      %612 = vector.load %arg9[%c0_158, %c0_159, %c0_160] : memref<2x2x128xf32, #tpu.memory_space<vmem>>, vector<2x2x128xf32>
      tpu.vector_store %arg9[%c0_158, %c0_159, %c0_160], %611 {strides = array<i32>} : memref<2x2x128xf32, #tpu.memory_space<vmem>>, vector<2x2x128xf32>,
    } else {
    }
    %c0 = arith.constant 0 : index
    %c0_1 = arith.constant 0 : index
    %c0_2 = arith.constant 0 : index
    %3 = vector.load %arg2[%c0, %c0_1, %c0_2] : memref<2x128x384xf32, #tpu.memory_space<vmem>>, vector<1x128x384xf32>
    %4 = vector.shape_cast %3 : vector<1x128x384xf32> to vector<128x384xf32>
    %c1 = arith.constant 1 : index
    %c0_3 = arith.constant 0 : index
    %c0_4 = arith.constant 0 : index
    %5 = vector.load %arg2[%c1, %c0_3, %c0_4] : memref<2x128x384xf32, #tpu.memory_space<vmem>>, vector<1x128x384xf32>
    %6 = vector.shape_cast %5 : vector<1x128x384xf32> to vector<128x384xf32>
    %c0_5 = arith.constant 0 : index
    %c0_6 = arith.constant 0 : index
    %c0_7 = arith.constant 0 : index
    %7 = vector.load %arg3[%c0_5, %c0_6, %c0_7] : memref<2x1x128xf32, #tpu.memory_space<vmem>>, vector<1x1x128xf32>
    %8 = vector.shape_cast %7 : vector<1x1x128xf32> to vector<1x128xf32>
    %c1_8 = arith.constant 1 : index
    %c0_9 = arith.constant 0 : index
    %c0_10 = arith.constant 0 : index
    %9 = vector.load %arg3[%c1_8, %c0_9, %c0_10] : memref<2x1x128xf32, #tpu.memory_space<vmem>>, vector<1x1x128xf32>
    %10 = vector.shape_cast %9 : vector<1x1x128xf32> to vector<1x128xf32>
    %c0_11 = arith.constant 0 : index
    %c0_12 = arith.constant 0 : index
    %c0_13 = arith.constant 0 : index
    %11 = vector.load %arg5[%c0_11, %c0_12, %c0_13] : memref<1x128x384xf32, #tpu.memory_space<vmem>>, vector<1x128x384xf32>
    %12 = vector.shape_cast %11 : vector<1x128x384xf32> to vector<128x384xf32>
    %c0_14 = arith.constant 0 : index
    %c0_15 = arith.constant 0 : index
    %c0_16 = arith.constant 0 : index
    %13 = vector.load %arg6[%c0_14, %c0_15, %c0_16] : memref<1x1x384xf32, #tpu.memory_space<vmem>>, vector<1x1x384xf32>
    %14 = vector.shape_cast %13 : vector<1x1x384xf32> to vector<1x384xf32>
    %c0_17 = arith.constant 0 : index
    %c0_18 = arith.constant 0 : index
    %c0_19 = arith.constant 0 : index
    %15 = vector.load %arg9[%c0_17, %c0_18, %c0_19] : memref<2x2x128xf32, #tpu.memory_space<vmem>>, vector<1x2x128xf32>
    %16 = vector.shape_cast %15 : vector<1x2x128xf32> to vector<2x128xf32>
    %c1_20 = arith.constant 1 : index
    %c0_21 = arith.constant 0 : index
    %c0_22 = arith.constant 0 : index
    %17 = vector.load %arg9[%c1_20, %c0_21, %c0_22] : memref<2x2x128xf32, #tpu.memory_space<vmem>>, vector<1x2x128xf32>
    %18 = vector.shape_cast %17 : vector<1x2x128xf32> to vector<2x128xf32>
    %c0_i32_23 = arith.constant 0 : i32
    %c8_i32 = arith.constant 8 : i32
    %19 = arith.muli %arg0, %c8_i32 : i32
    %20 = arith.addi %19, %c0_i32_23 : i32
    %c8_i32_24 = arith.constant 8 : i32
    %21 = arith.cmpi slt, %20, %c8_i32_24 : i32
    %22 = arith.index_cast %c0_i32_23 : i32 to index
    %c0_25 = arith.constant 0 : index
    %c0_26 = arith.constant 0 : index
    %23 = vector.load %arg1[%22, %c0_25, %c0_26] : memref<8x2x384xf32, #tpu.memory_space<vmem>>, vector<1x2x384xf32>
    %24 = vector.shape_cast %23 : vector<1x2x384xf32> to vector<2x384xf32>
    %cst = arith.constant dense<0.000000e+00> : vector<2x384xf32>
    %25 = tpu.matmul %16, %4, %cst {dimension_numbers = #tpu.dot_dimension_numbers<[1], [0], [0], [1], [0, 0, 1, 1], [], []>} : vector<2x128xf32>, vector<128x384xf32>, vector<2x384xf32> -> vector<2x384xf32>
    %26 = vector.extract_strided_slice %24 {offsets = [0, 0], sizes = [2, 128], strides = [1, 1]} : vector<2x384xf32> to vector<2x128xf32>
    %27 = vector.extract_strided_slice %25 {offsets = [0, 0], sizes = [2, 128], strides = [1, 1]} : vector<2x384xf32> to vector<2x128xf32>
    %28 = arith.addf %26, %27 : vector<2x128xf32>
    %29 = arith.negf %28 : vector<2x128xf32>
    %30 = math.exp %29 : vector<2x128xf32>
    %cst_27 = arith.constant 1.000000e+00 : f32
    %31 = vector.broadcast %cst_27 : f32 to vector<2x128xf32>
    %32 = arith.addf %31, %30 : vector<2x128xf32>
    %33 = arith.divf %31, %32 : vector<2x128xf32>
    %34 = vector.extract_strided_slice %24 {offsets = [0, 128], sizes = [2, 128], strides = [1, 1]} : vector<2x384xf32> to vector<2x128xf32>
    %35 = vector.extract_strided_slice %25 {offsets = [0, 128], sizes = [2, 128], strides = [1, 1]} : vector<2x384xf32> to vector<2x128xf32>
    %36 = arith.addf %34, %35 : vector<2x128xf32>
    %37 = arith.negf %36 : vector<2x128xf32>
    %38 = math.exp %37 : vector<2x128xf32>
    %cst_28 = arith.constant 1.000000e+00 : f32
    %39 = vector.broadcast %cst_28 : f32 to vector<2x128xf32>
    %40 = arith.addf %39, %38 : vector<2x128xf32>
    %41 = arith.divf %39, %40 : vector<2x128xf32>
    %42 = vector.extract_strided_slice %24 {offsets = [0, 256], sizes = [2, 128], strides = [1, 1]} : vector<2x384xf32> to vector<2x128xf32>
    %43 = vector.extract_strided_slice %25 {offsets = [0, 256], sizes = [2, 128], strides = [1, 1]} : vector<2x384xf32> to vector<2x128xf32>
    %44 = vector.broadcast %8 : vector<1x128xf32> to vector<2x128xf32>
    %45 = arith.addf %43, %44 : vector<2x128xf32>
    %46 = arith.mulf %33, %45 : vector<2x128xf32>
    %47 = arith.addf %42, %46 : vector<2x128xf32>
    %48 = math.tanh %47 : vector<2x128xf32>
    %cst_29 = arith.constant 1.000000e+00 : f32
    %49 = vector.broadcast %cst_29 : f32 to vector<2x128xf32>
    %50 = arith.subf %49, %41 : vector<2x128xf32>
    %51 = arith.mulf %50, %48 : vector<2x128xf32>
    %52 = arith.mulf %41, %16 : vector<2x128xf32>
    %53 = arith.addf %51, %52 : vector<2x128xf32>
    %54 = arith.select %21, %53, %16 : vector<2x128xf32>
    %cst_30 = arith.constant dense<0.000000e+00> : vector<2x384xf32>
    %55 = tpu.matmul %54, %12, %cst_30 {dimension_numbers = #tpu.dot_dimension_numbers<[1], [0], [0], [1], [0, 0, 1, 1], [], []>} : vector<2x128xf32>, vector<128x384xf32>, vector<2x384xf32> -> vector<2x384xf32>
    %56 = vector.broadcast %14 : vector<1x384xf32> to vector<2x384xf32>
    %57 = arith.addf %55, %56 : vector<2x384xf32>
    %cst_31 = arith.constant dense<0.000000e+00> : vector<2x384xf32>
    %58 = tpu.matmul %18, %6, %cst_31 {dimension_numbers = #tpu.dot_dimension_numbers<[1], [0], [0], [1], [0, 0, 1, 1], [], []>} : vector<2x128xf32>, vector<128x384xf32>, vector<2x384xf32> -> vector<2x384xf32>
    %59 = vector.extract_strided_slice %57 {offsets = [0, 0], sizes = [2, 128], strides = [1, 1]} : vector<2x384xf32> to vector<2x128xf32>
    %60 = vector.extract_strided_slice %58 {offsets = [0, 0], sizes = [2, 128], strides = [1, 1]} : vector<2x384xf32> to vector<2x128xf32>
    %61 = arith.addf %59, %60 : vector<2x128xf32>
    %62 = arith.negf %61 : vector<2x128xf32>
    %63 = math.exp %62 : vector<2x128xf32>
    %cst_32 = arith.constant 1.000000e+00 : f32
    %64 = vector.broadcast %cst_32 : f32 to vector<2x128xf32>
    %65 = arith.addf %64, %63 : vector<2x128xf32>
    %66 = arith.divf %64, %65 : vector<2x128xf32>
    %67 = vector.extract_strided_slice %57 {offsets = [0, 128], sizes = [2, 128], strides = [1, 1]} : vector<2x384xf32> to vector<2x128xf32>
    %68 = vector.extract_strided_slice %58 {offsets = [0, 128], sizes = [2, 128], strides = [1, 1]} : vector<2x384xf32> to vector<2x128xf32>
    %69 = arith.addf %67, %68 : vector<2x128xf32>
    %70 = arith.negf %69 : vector<2x128xf32>
    %71 = math.exp %70 : vector<2x128xf32>
    %cst_33 = arith.constant 1.000000e+00 : f32
    %72 = vector.broadcast %cst_33 : f32 to vector<2x128xf32>
    %73 = arith.addf %72, %71 : vector<2x128xf32>
    %74 = arith.divf %72, %73 : vector<2x128xf32>
    %75 = vector.extract_strided_slice %57 {offsets = [0, 256], sizes = [2, 128], strides = [1, 1]} : vector<2x384xf32> to vector<2x128xf32>
    %76 = vector.extract_strided_slice %58 {offsets = [0, 256], sizes = [2, 128], strides = [1, 1]} : vector<2x384xf32> to vector<2x128xf32>
    %77 = vector.broadcast %10 : vector<1x128xf32> to vector<2x128xf32>
    %78 = arith.addf %76, %77 : vector<2x128xf32>
    %79 = arith.mulf %66, %78 : vector<2x128xf32>
    %80 = arith.addf %75, %79 : vector<2x128xf32>
    %81 = math.tanh %80 : vector<2x128xf32>
    %cst_34 = arith.constant 1.000000e+00 : f32
    %82 = vector.broadcast %cst_34 : f32 to vector<2x128xf32>
    %83 = arith.subf %82, %74 : vector<2x128xf32>
    %84 = arith.mulf %83, %81 : vector<2x128xf32>
    %85 = arith.mulf %74, %18 : vector<2x128xf32>
    %86 = arith.addf %84, %85 : vector<2x128xf32>
    %87 = arith.select %21, %86, %18 : vector<2x128xf32>
    %88 = arith.index_cast %c0_i32_23 : i32 to index
    %c0_35 = arith.constant 0 : index
    %c0_36 = arith.constant 0 : index
    %89 = vector.load %arg7[%88, %c0_35, %c0_36] : memref<8x2x128xf32, #tpu.memory_space<vmem>>, vector<1x2x128xf32>
    %90 = vector.shape_cast %89 : vector<1x2x128xf32> to vector<2x128xf32>
    %91 = vector.shape_cast %87 : vector<2x128xf32> to vector<1x2x128xf32>
    tpu.vector_store %arg7[%88, %c0_35, %c0_36], %91 {strides = array<i32>} : memref<8x2x128xf32, #tpu.memory_space<vmem>>, vector<1x2x128xf32>,
    %c1_i32 = arith.constant 1 : i32
    %c8_i32_37 = arith.constant 8 : i32
    %92 = arith.muli %arg0, %c8_i32_37 : i32
    %93 = arith.addi %92, %c1_i32 : i32
    %c8_i32_38 = arith.constant 8 : i32
    %94 = arith.cmpi slt, %93, %c8_i32_38 : i32
    %95 = arith.index_cast %c1_i32 : i32 to index
    %c0_39 = arith.constant 0 : index
    %c0_40 = arith.constant 0 : index
    %96 = vector.load %arg1[%95, %c0_39, %c0_40] : memref<8x2x384xf32, #tpu.memory_space<vmem>>, vector<1x2x384xf32>
    %97 = vector.shape_cast %96 : vector<1x2x384xf32> to vector<2x384xf32>
    %cst_41 = arith.constant dense<0.000000e+00> : vector<2x384xf32>
    %98 = tpu.matmul %54, %4, %cst_41 {dimension_numbers = #tpu.dot_dimension_numbers<[1], [0], [0], [1], [0, 0, 1, 1], [], []>} : vector<2x128xf32>, vector<128x384xf32>, vector<2x384xf32> -> vector<2x384xf32>
    %99 = vector.extract_strided_slice %97 {offsets = [0, 0], sizes = [2, 128], strides = [1, 1]} : vector<2x384xf32> to vector<2x128xf32>
    %100 = vector.extract_strided_slice %98 {offsets = [0, 0], sizes = [2, 128], strides = [1, 1]} : vector<2x384xf32> to vector<2x128xf32>
    %101 = arith.addf %99, %100 : vector<2x128xf32>
    %102 = arith.negf %101 : vector<2x128xf32>
    %103 = math.exp %102 : vector<2x128xf32>
    %cst_42 = arith.constant 1.000000e+00 : f32
    %104 = vector.broadcast %cst_42 : f32 to vector<2x128xf32>
    %105 = arith.addf %104, %103 : vector<2x128xf32>
    %106 = arith.divf %104, %105 : vector<2x128xf32>
    %107 = vector.extract_strided_slice %97 {offsets = [0, 128], sizes = [2, 128], strides = [1, 1]} : vector<2x384xf32> to vector<2x128xf32>
    %108 = vector.extract_strided_slice %98 {offsets = [0, 128], sizes = [2, 128], strides = [1, 1]} : vector<2x384xf32> to vector<2x128xf32>
    %109 = arith.addf %107, %108 : vector<2x128xf32>
    %110 = arith.negf %109 : vector<2x128xf32>
    %111 = math.exp %110 : vector<2x128xf32>
    %cst_43 = arith.constant 1.000000e+00 : f32
    %112 = vector.broadcast %cst_43 : f32 to vector<2x128xf32>
    %113 = arith.addf %112, %111 : vector<2x128xf32>
    %114 = arith.divf %112, %113 : vector<2x128xf32>
    %115 = vector.extract_strided_slice %97 {offsets = [0, 256], sizes = [2, 128], strides = [1, 1]} : vector<2x384xf32> to vector<2x128xf32>
    %116 = vector.extract_strided_slice %98 {offsets = [0, 256], sizes = [2, 128], strides = [1, 1]} : vector<2x384xf32> to vector<2x128xf32>
    %117 = vector.broadcast %8 : vector<1x128xf32> to vector<2x128xf32>
    %118 = arith.addf %116, %117 : vector<2x128xf32>
    %119 = arith.mulf %106, %118 : vector<2x128xf32>
    %120 = arith.addf %115, %119 : vector<2x128xf32>
    %121 = math.tanh %120 : vector<2x128xf32>
    %cst_44 = arith.constant 1.000000e+00 : f32
    %122 = vector.broadcast %cst_44 : f32 to vector<2x128xf32>
    %123 = arith.subf %122, %114 : vector<2x128xf32>
    %124 = arith.mulf %123, %121 : vector<2x128xf32>
    %125 = arith.mulf %114, %54 : vector<2x128xf32>
    %126 = arith.addf %124, %125 : vector<2x128xf32>
    %127 = arith.select %94, %126, %54 : vector<2x128xf32>
    %cst_45 = arith.constant dense<0.000000e+00> : vector<2x384xf32>
    %128 = tpu.matmul %127, %12, %cst_45 {dimension_numbers = #tpu.dot_dimension_numbers<[1], [0], [0], [1], [0, 0, 1, 1], [], []>} : vector<2x128xf32>, vector<128x384xf32>, vector<2x384xf32> -> vector<2x384xf32>
    %129 = vector.broadcast %14 : vector<1x384xf32> to vector<2x384xf32>
    %130 = arith.addf %128, %129 : vector<2x384xf32>
    %cst_46 = arith.constant dense<0.000000e+00> : vector<2x384xf32>
    %131 = tpu.matmul %87, %6, %cst_46 {dimension_numbers = #tpu.dot_dimension_numbers<[1], [0], [0], [1], [0, 0, 1, 1], [], []>} : vector<2x128xf32>, vector<128x384xf32>, vector<2x384xf32> -> vector<2x384xf32>
    %132 = vector.extract_strided_slice %130 {offsets = [0, 0], sizes = [2, 128], strides = [1, 1]} : vector<2x384xf32> to vector<2x128xf32>
    %133 = vector.extract_strided_slice %131 {offsets = [0, 0], sizes = [2, 128], strides = [1, 1]} : vector<2x384xf32> to vector<2x128xf32>
    %134 = arith.addf %132, %133 : vector<2x128xf32>
    %135 = arith.negf %134 : vector<2x128xf32>
    %136 = math.exp %135 : vector<2x128xf32>
    %cst_47 = arith.constant 1.000000e+00 : f32
    %137 = vector.broadcast %cst_47 : f32 to vector<2x128xf32>
    %138 = arith.addf %137, %136 : vector<2x128xf32>
    %139 = arith.divf %137, %138 : vector<2x128xf32>
    %140 = vector.extract_strided_slice %130 {offsets = [0, 128], sizes = [2, 128], strides = [1, 1]} : vector<2x384xf32> to vector<2x128xf32>
    %141 = vector.extract_strided_slice %131 {offsets = [0, 128], sizes = [2, 128], strides = [1, 1]} : vector<2x384xf32> to vector<2x128xf32>
    %142 = arith.addf %140, %141 : vector<2x128xf32>
    %143 = arith.negf %142 : vector<2x128xf32>
    %144 = math.exp %143 : vector<2x128xf32>
    %cst_48 = arith.constant 1.000000e+00 : f32
    %145 = vector.broadcast %cst_48 : f32 to vector<2x128xf32>
    %146 = arith.addf %145, %144 : vector<2x128xf32>
    %147 = arith.divf %145, %146 : vector<2x128xf32>
    %148 = vector.extract_strided_slice %130 {offsets = [0, 256], sizes = [2, 128], strides = [1, 1]} : vector<2x384xf32> to vector<2x128xf32>
    %149 = vector.extract_strided_slice %131 {offsets = [0, 256], sizes = [2, 128], strides = [1, 1]} : vector<2x384xf32> to vector<2x128xf32>
    %150 = vector.broadcast %10 : vector<1x128xf32> to vector<2x128xf32>
    %151 = arith.addf %149, %150 : vector<2x128xf32>
    %152 = arith.mulf %139, %151 : vector<2x128xf32>
    %153 = arith.addf %148, %152 : vector<2x128xf32>
    %154 = math.tanh %153 : vector<2x128xf32>
    %cst_49 = arith.constant 1.000000e+00 : f32
    %155 = vector.broadcast %cst_49 : f32 to vector<2x128xf32>
    %156 = arith.subf %155, %147 : vector<2x128xf32>
    %157 = arith.mulf %156, %154 : vector<2x128xf32>
    %158 = arith.mulf %147, %87 : vector<2x128xf32>
    %159 = arith.addf %157, %158 : vector<2x128xf32>
    %160 = arith.select %94, %159, %87 : vector<2x128xf32>
    %161 = arith.index_cast %c1_i32 : i32 to index
    %c0_50 = arith.constant 0 : index
    %c0_51 = arith.constant 0 : index
    %162 = vector.load %arg7[%161, %c0_50, %c0_51] : memref<8x2x128xf32, #tpu.memory_space<vmem>>, vector<1x2x128xf32>
    %163 = vector.shape_cast %162 : vector<1x2x128xf32> to vector<2x128xf32>
    %164 = vector.shape_cast %160 : vector<2x128xf32> to vector<1x2x128xf32>
    tpu.vector_store %arg7[%161, %c0_50, %c0_51], %164 {strides = array<i32>} : memref<8x2x128xf32, #tpu.memory_space<vmem>>, vector<1x2x128xf32>,
    %c2_i32 = arith.constant 2 : i32
    %c8_i32_52 = arith.constant 8 : i32
    %165 = arith.muli %arg0, %c8_i32_52 : i32
    %166 = arith.addi %165, %c2_i32 : i32
    %c8_i32_53 = arith.constant 8 : i32
    %167 = arith.cmpi slt, %166, %c8_i32_53 : i32
    %168 = arith.index_cast %c2_i32 : i32 to index
    %c0_54 = arith.constant 0 : index
    %c0_55 = arith.constant 0 : index
    %169 = vector.load %arg1[%168, %c0_54, %c0_55] : memref<8x2x384xf32, #tpu.memory_space<vmem>>, vector<1x2x384xf32>
    %170 = vector.shape_cast %169 : vector<1x2x384xf32> to vector<2x384xf32>
    %cst_56 = arith.constant dense<0.000000e+00> : vector<2x384xf32>
    %171 = tpu.matmul %127, %4, %cst_56 {dimension_numbers = #tpu.dot_dimension_numbers<[1], [0], [0], [1], [0, 0, 1, 1], [], []>} : vector<2x128xf32>, vector<128x384xf32>, vector<2x384xf32> -> vector<2x384xf32>
    %172 = vector.extract_strided_slice %170 {offsets = [0, 0], sizes = [2, 128], strides = [1, 1]} : vector<2x384xf32> to vector<2x128xf32>
    %173 = vector.extract_strided_slice %171 {offsets = [0, 0], sizes = [2, 128], strides = [1, 1]} : vector<2x384xf32> to vector<2x128xf32>
    %174 = arith.addf %172, %173 : vector<2x128xf32>
    %175 = arith.negf %174 : vector<2x128xf32>
    %176 = math.exp %175 : vector<2x128xf32>
    %cst_57 = arith.constant 1.000000e+00 : f32
    %177 = vector.broadcast %cst_57 : f32 to vector<2x128xf32>
    %178 = arith.addf %177, %176 : vector<2x128xf32>
    %179 = arith.divf %177, %178 : vector<2x128xf32>
    %180 = vector.extract_strided_slice %170 {offsets = [0, 128], sizes = [2, 128], strides = [1, 1]} : vector<2x384xf32> to vector<2x128xf32>
    %181 = vector.extract_strided_slice %171 {offsets = [0, 128], sizes = [2, 128], strides = [1, 1]} : vector<2x384xf32> to vector<2x128xf32>
    %182 = arith.addf %180, %181 : vector<2x128xf32>
    %183 = arith.negf %182 : vector<2x128xf32>
    %184 = math.exp %183 : vector<2x128xf32>
    %cst_58 = arith.constant 1.000000e+00 : f32
    %185 = vector.broadcast %cst_58 : f32 to vector<2x128xf32>
    %186 = arith.addf %185, %184 : vector<2x128xf32>
    %187 = arith.divf %185, %186 : vector<2x128xf32>
    %188 = vector.extract_strided_slice %170 {offsets = [0, 256], sizes = [2, 128], strides = [1, 1]} : vector<2x384xf32> to vector<2x128xf32>
    %189 = vector.extract_strided_slice %171 {offsets = [0, 256], sizes = [2, 128], strides = [1, 1]} : vector<2x384xf32> to vector<2x128xf32>
    %190 = vector.broadcast %8 : vector<1x128xf32> to vector<2x128xf32>
    %191 = arith.addf %189, %190 : vector<2x128xf32>
    %192 = arith.mulf %179, %191 : vector<2x128xf32>
    %193 = arith.addf %188, %192 : vector<2x128xf32>
    %194 = math.tanh %193 : vector<2x128xf32>
    %cst_59 = arith.constant 1.000000e+00 : f32
    %195 = vector.broadcast %cst_59 : f32 to vector<2x128xf32>
    %196 = arith.subf %195, %187 : vector<2x128xf32>
    %197 = arith.mulf %196, %194 : vector<2x128xf32>
    %198 = arith.mulf %187, %127 : vector<2x128xf32>
    %199 = arith.addf %197, %198 : vector<2x128xf32>
    %200 = arith.select %167, %199, %127 : vector<2x128xf32>
    %cst_60 = arith.constant dense<0.000000e+00> : vector<2x384xf32>
    %201 = tpu.matmul %200, %12, %cst_60 {dimension_numbers = #tpu.dot_dimension_numbers<[1], [0], [0], [1], [0, 0, 1, 1], [], []>} : vector<2x128xf32>, vector<128x384xf32>, vector<2x384xf32> -> vector<2x384xf32>
    %202 = vector.broadcast %14 : vector<1x384xf32> to vector<2x384xf32>
    %203 = arith.addf %201, %202 : vector<2x384xf32>
    %cst_61 = arith.constant dense<0.000000e+00> : vector<2x384xf32>
    %204 = tpu.matmul %160, %6, %cst_61 {dimension_numbers = #tpu.dot_dimension_numbers<[1], [0], [0], [1], [0, 0, 1, 1], [], []>} : vector<2x128xf32>, vector<128x384xf32>, vector<2x384xf32> -> vector<2x384xf32>
    %205 = vector.extract_strided_slice %203 {offsets = [0, 0], sizes = [2, 128], strides = [1, 1]} : vector<2x384xf32> to vector<2x128xf32>
    %206 = vector.extract_strided_slice %204 {offsets = [0, 0], sizes = [2, 128], strides = [1, 1]} : vector<2x384xf32> to vector<2x128xf32>
    %207 = arith.addf %205, %206 : vector<2x128xf32>
    %208 = arith.negf %207 : vector<2x128xf32>
    %209 = math.exp %208 : vector<2x128xf32>
    %cst_62 = arith.constant 1.000000e+00 : f32
    %210 = vector.broadcast %cst_62 : f32 to vector<2x128xf32>
    %211 = arith.addf %210, %209 : vector<2x128xf32>
    %212 = arith.divf %210, %211 : vector<2x128xf32>
    %213 = vector.extract_strided_slice %203 {offsets = [0, 128], sizes = [2, 128], strides = [1, 1]} : vector<2x384xf32> to vector<2x128xf32>
    %214 = vector.extract_strided_slice %204 {offsets = [0, 128], sizes = [2, 128], strides = [1, 1]} : vector<2x384xf32> to vector<2x128xf32>
    %215 = arith.addf %213, %214 : vector<2x128xf32>
    %216 = arith.negf %215 : vector<2x128xf32>
    %217 = math.exp %216 : vector<2x128xf32>
    %cst_63 = arith.constant 1.000000e+00 : f32
    %218 = vector.broadcast %cst_63 : f32 to vector<2x128xf32>
    %219 = arith.addf %218, %217 : vector<2x128xf32>
    %220 = arith.divf %218, %219 : vector<2x128xf32>
    %221 = vector.extract_strided_slice %203 {offsets = [0, 256], sizes = [2, 128], strides = [1, 1]} : vector<2x384xf32> to vector<2x128xf32>
    %222 = vector.extract_strided_slice %204 {offsets = [0, 256], sizes = [2, 128], strides = [1, 1]} : vector<2x384xf32> to vector<2x128xf32>
    %223 = vector.broadcast %10 : vector<1x128xf32> to vector<2x128xf32>
    %224 = arith.addf %222, %223 : vector<2x128xf32>
    %225 = arith.mulf %212, %224 : vector<2x128xf32>
    %226 = arith.addf %221, %225 : vector<2x128xf32>
    %227 = math.tanh %226 : vector<2x128xf32>
    %cst_64 = arith.constant 1.000000e+00 : f32
    %228 = vector.broadcast %cst_64 : f32 to vector<2x128xf32>
    %229 = arith.subf %228, %220 : vector<2x128xf32>
    %230 = arith.mulf %229, %227 : vector<2x128xf32>
    %231 = arith.mulf %220, %160 : vector<2x128xf32>
    %232 = arith.addf %230, %231 : vector<2x128xf32>
    %233 = arith.select %167, %232, %160 : vector<2x128xf32>
    %234 = arith.index_cast %c2_i32 : i32 to index
    %c0_65 = arith.constant 0 : index
    %c0_66 = arith.constant 0 : index
    %235 = vector.load %arg7[%234, %c0_65, %c0_66] : memref<8x2x128xf32, #tpu.memory_space<vmem>>, vector<1x2x128xf32>
    %236 = vector.shape_cast %235 : vector<1x2x128xf32> to vector<2x128xf32>
    %237 = vector.shape_cast %233 : vector<2x128xf32> to vector<1x2x128xf32>
    tpu.vector_store %arg7[%234, %c0_65, %c0_66], %237 {strides = array<i32>} : memref<8x2x128xf32, #tpu.memory_space<vmem>>, vector<1x2x128xf32>,
    %c3_i32 = arith.constant 3 : i32
    %c8_i32_67 = arith.constant 8 : i32
    %238 = arith.muli %arg0, %c8_i32_67 : i32
    %239 = arith.addi %238, %c3_i32 : i32
    %c8_i32_68 = arith.constant 8 : i32
    %240 = arith.cmpi slt, %239, %c8_i32_68 : i32
    %241 = arith.index_cast %c3_i32 : i32 to index
    %c0_69 = arith.constant 0 : index
    %c0_70 = arith.constant 0 : index
    %242 = vector.load %arg1[%241, %c0_69, %c0_70] : memref<8x2x384xf32, #tpu.memory_space<vmem>>, vector<1x2x384xf32>
    %243 = vector.shape_cast %242 : vector<1x2x384xf32> to vector<2x384xf32>
    %cst_71 = arith.constant dense<0.000000e+00> : vector<2x384xf32>
    %244 = tpu.matmul %200, %4, %cst_71 {dimension_numbers = #tpu.dot_dimension_numbers<[1], [0], [0], [1], [0, 0, 1, 1], [], []>} : vector<2x128xf32>, vector<128x384xf32>, vector<2x384xf32> -> vector<2x384xf32>
    %245 = vector.extract_strided_slice %243 {offsets = [0, 0], sizes = [2, 128], strides = [1, 1]} : vector<2x384xf32> to vector<2x128xf32>
    %246 = vector.extract_strided_slice %244 {offsets = [0, 0], sizes = [2, 128], strides = [1, 1]} : vector<2x384xf32> to vector<2x128xf32>
    %247 = arith.addf %245, %246 : vector<2x128xf32>
    %248 = arith.negf %247 : vector<2x128xf32>
    %249 = math.exp %248 : vector<2x128xf32>
    %cst_72 = arith.constant 1.000000e+00 : f32
    %250 = vector.broadcast %cst_72 : f32 to vector<2x128xf32>
    %251 = arith.addf %250, %249 : vector<2x128xf32>
    %252 = arith.divf %250, %251 : vector<2x128xf32>
    %253 = vector.extract_strided_slice %243 {offsets = [0, 128], sizes = [2, 128], strides = [1, 1]} : vector<2x384xf32> to vector<2x128xf32>
    %254 = vector.extract_strided_slice %244 {offsets = [0, 128], sizes = [2, 128], strides = [1, 1]} : vector<2x384xf32> to vector<2x128xf32>
    %255 = arith.addf %253, %254 : vector<2x128xf32>
    %256 = arith.negf %255 : vector<2x128xf32>
    %257 = math.exp %256 : vector<2x128xf32>
    %cst_73 = arith.constant 1.000000e+00 : f32
    %258 = vector.broadcast %cst_73 : f32 to vector<2x128xf32>
    %259 = arith.addf %258, %257 : vector<2x128xf32>
    %260 = arith.divf %258, %259 : vector<2x128xf32>
    %261 = vector.extract_strided_slice %243 {offsets = [0, 256], sizes = [2, 128], strides = [1, 1]} : vector<2x384xf32> to vector<2x128xf32>
    %262 = vector.extract_strided_slice %244 {offsets = [0, 256], sizes = [2, 128], strides = [1, 1]} : vector<2x384xf32> to vector<2x128xf32>
    %263 = vector.broadcast %8 : vector<1x128xf32> to vector<2x128xf32>
    %264 = arith.addf %262, %263 : vector<2x128xf32>
    %265 = arith.mulf %252, %264 : vector<2x128xf32>
    %266 = arith.addf %261, %265 : vector<2x128xf32>
    %267 = math.tanh %266 : vector<2x128xf32>
    %cst_74 = arith.constant 1.000000e+00 : f32
    %268 = vector.broadcast %cst_74 : f32 to vector<2x128xf32>
    %269 = arith.subf %268, %260 : vector<2x128xf32>
    %270 = arith.mulf %269, %267 : vector<2x128xf32>
    %271 = arith.mulf %260, %200 : vector<2x128xf32>
    %272 = arith.addf %270, %271 : vector<2x128xf32>
    %273 = arith.select %240, %272, %200 : vector<2x128xf32>
    %cst_75 = arith.constant dense<0.000000e+00> : vector<2x384xf32>
    %274 = tpu.matmul %273, %12, %cst_75 {dimension_numbers = #tpu.dot_dimension_numbers<[1], [0], [0], [1], [0, 0, 1, 1], [], []>} : vector<2x128xf32>, vector<128x384xf32>, vector<2x384xf32> -> vector<2x384xf32>
    %275 = vector.broadcast %14 : vector<1x384xf32> to vector<2x384xf32>
    %276 = arith.addf %274, %275 : vector<2x384xf32>
    %cst_76 = arith.constant dense<0.000000e+00> : vector<2x384xf32>
    %277 = tpu.matmul %233, %6, %cst_76 {dimension_numbers = #tpu.dot_dimension_numbers<[1], [0], [0], [1], [0, 0, 1, 1], [], []>} : vector<2x128xf32>, vector<128x384xf32>, vector<2x384xf32> -> vector<2x384xf32>
    %278 = vector.extract_strided_slice %276 {offsets = [0, 0], sizes = [2, 128], strides = [1, 1]} : vector<2x384xf32> to vector<2x128xf32>
    %279 = vector.extract_strided_slice %277 {offsets = [0, 0], sizes = [2, 128], strides = [1, 1]} : vector<2x384xf32> to vector<2x128xf32>
    %280 = arith.addf %278, %279 : vector<2x128xf32>
    %281 = arith.negf %280 : vector<2x128xf32>
    %282 = math.exp %281 : vector<2x128xf32>
    %cst_77 = arith.constant 1.000000e+00 : f32
    %283 = vector.broadcast %cst_77 : f32 to vector<2x128xf32>
    %284 = arith.addf %283, %282 : vector<2x128xf32>
    %285 = arith.divf %283, %284 : vector<2x128xf32>
    %286 = vector.extract_strided_slice %276 {offsets = [0, 128], sizes = [2, 128], strides = [1, 1]} : vector<2x384xf32> to vector<2x128xf32>
    %287 = vector.extract_strided_slice %277 {offsets = [0, 128], sizes = [2, 128], strides = [1, 1]} : vector<2x384xf32> to vector<2x128xf32>
    %288 = arith.addf %286, %287 : vector<2x128xf32>
    %289 = arith.negf %288 : vector<2x128xf32>
    %290 = math.exp %289 : vector<2x128xf32>
    %cst_78 = arith.constant 1.000000e+00 : f32
    %291 = vector.broadcast %cst_78 : f32 to vector<2x128xf32>
    %292 = arith.addf %291, %290 : vector<2x128xf32>
    %293 = arith.divf %291, %292 : vector<2x128xf32>
    %294 = vector.extract_strided_slice %276 {offsets = [0, 256], sizes = [2, 128], strides = [1, 1]} : vector<2x384xf32> to vector<2x128xf32>
    %295 = vector.extract_strided_slice %277 {offsets = [0, 256], sizes = [2, 128], strides = [1, 1]} : vector<2x384xf32> to vector<2x128xf32>
    %296 = vector.broadcast %10 : vector<1x128xf32> to vector<2x128xf32>
    %297 = arith.addf %295, %296 : vector<2x128xf32>
    %298 = arith.mulf %285, %297 : vector<2x128xf32>
    %299 = arith.addf %294, %298 : vector<2x128xf32>
    %300 = math.tanh %299 : vector<2x128xf32>
    %cst_79 = arith.constant 1.000000e+00 : f32
    %301 = vector.broadcast %cst_79 : f32 to vector<2x128xf32>
    %302 = arith.subf %301, %293 : vector<2x128xf32>
    %303 = arith.mulf %302, %300 : vector<2x128xf32>
    %304 = arith.mulf %293, %233 : vector<2x128xf32>
    %305 = arith.addf %303, %304 : vector<2x128xf32>
    %306 = arith.select %240, %305, %233 : vector<2x128xf32>
    %307 = arith.index_cast %c3_i32 : i32 to index
    %c0_80 = arith.constant 0 : index
    %c0_81 = arith.constant 0 : index
    %308 = vector.load %arg7[%307, %c0_80, %c0_81] : memref<8x2x128xf32, #tpu.memory_space<vmem>>, vector<1x2x128xf32>
    %309 = vector.shape_cast %308 : vector<1x2x128xf32> to vector<2x128xf32>
    %310 = vector.shape_cast %306 : vector<2x128xf32> to vector<1x2x128xf32>
    tpu.vector_store %arg7[%307, %c0_80, %c0_81], %310 {strides = array<i32>} : memref<8x2x128xf32, #tpu.memory_space<vmem>>, vector<1x2x128xf32>,
    %c4_i32 = arith.constant 4 : i32
    %c8_i32_82 = arith.constant 8 : i32
    %311 = arith.muli %arg0, %c8_i32_82 : i32
    %312 = arith.addi %311, %c4_i32 : i32
    %c8_i32_83 = arith.constant 8 : i32
    %313 = arith.cmpi slt, %312, %c8_i32_83 : i32
    %314 = arith.index_cast %c4_i32 : i32 to index
    %c0_84 = arith.constant 0 : index
    %c0_85 = arith.constant 0 : index
    %315 = vector.load %arg1[%314, %c0_84, %c0_85] : memref<8x2x384xf32, #tpu.memory_space<vmem>>, vector<1x2x384xf32>
    %316 = vector.shape_cast %315 : vector<1x2x384xf32> to vector<2x384xf32>
    %cst_86 = arith.constant dense<0.000000e+00> : vector<2x384xf32>
    %317 = tpu.matmul %273, %4, %cst_86 {dimension_numbers = #tpu.dot_dimension_numbers<[1], [0], [0], [1], [0, 0, 1, 1], [], []>} : vector<2x128xf32>, vector<128x384xf32>, vector<2x384xf32> -> vector<2x384xf32>
    %318 = vector.extract_strided_slice %316 {offsets = [0, 0], sizes = [2, 128], strides = [1, 1]} : vector<2x384xf32> to vector<2x128xf32>
    %319 = vector.extract_strided_slice %317 {offsets = [0, 0], sizes = [2, 128], strides = [1, 1]} : vector<2x384xf32> to vector<2x128xf32>
    %320 = arith.addf %318, %319 : vector<2x128xf32>
    %321 = arith.negf %320 : vector<2x128xf32>
    %322 = math.exp %321 : vector<2x128xf32>
    %cst_87 = arith.constant 1.000000e+00 : f32
    %323 = vector.broadcast %cst_87 : f32 to vector<2x128xf32>
    %324 = arith.addf %323, %322 : vector<2x128xf32>
    %325 = arith.divf %323, %324 : vector<2x128xf32>
    %326 = vector.extract_strided_slice %316 {offsets = [0, 128], sizes = [2, 128], strides = [1, 1]} : vector<2x384xf32> to vector<2x128xf32>
    %327 = vector.extract_strided_slice %317 {offsets = [0, 128], sizes = [2, 128], strides = [1, 1]} : vector<2x384xf32> to vector<2x128xf32>
    %328 = arith.addf %326, %327 : vector<2x128xf32>
    %329 = arith.negf %328 : vector<2x128xf32>
    %330 = math.exp %329 : vector<2x128xf32>
    %cst_88 = arith.constant 1.000000e+00 : f32
    %331 = vector.broadcast %cst_88 : f32 to vector<2x128xf32>
    %332 = arith.addf %331, %330 : vector<2x128xf32>
    %333 = arith.divf %331, %332 : vector<2x128xf32>
    %334 = vector.extract_strided_slice %316 {offsets = [0, 256], sizes = [2, 128], strides = [1, 1]} : vector<2x384xf32> to vector<2x128xf32>
    %335 = vector.extract_strided_slice %317 {offsets = [0, 256], sizes = [2, 128], strides = [1, 1]} : vector<2x384xf32> to vector<2x128xf32>
    %336 = vector.broadcast %8 : vector<1x128xf32> to vector<2x128xf32>
    %337 = arith.addf %335, %336 : vector<2x128xf32>
    %338 = arith.mulf %325, %337 : vector<2x128xf32>
    %339 = arith.addf %334, %338 : vector<2x128xf32>
    %340 = math.tanh %339 : vector<2x128xf32>
    %cst_89 = arith.constant 1.000000e+00 : f32
    %341 = vector.broadcast %cst_89 : f32 to vector<2x128xf32>
    %342 = arith.subf %341, %333 : vector<2x128xf32>
    %343 = arith.mulf %342, %340 : vector<2x128xf32>
    %344 = arith.mulf %333, %273 : vector<2x128xf32>
    %345 = arith.addf %343, %344 : vector<2x128xf32>
    %346 = arith.select %313, %345, %273 : vector<2x128xf32>
    %cst_90 = arith.constant dense<0.000000e+00> : vector<2x384xf32>
    %347 = tpu.matmul %346, %12, %cst_90 {dimension_numbers = #tpu.dot_dimension_numbers<[1], [0], [0], [1], [0, 0, 1, 1], [], []>} : vector<2x128xf32>, vector<128x384xf32>, vector<2x384xf32> -> vector<2x384xf32>
    %348 = vector.broadcast %14 : vector<1x384xf32> to vector<2x384xf32>
    %349 = arith.addf %347, %348 : vector<2x384xf32>
    %cst_91 = arith.constant dense<0.000000e+00> : vector<2x384xf32>
    %350 = tpu.matmul %306, %6, %cst_91 {dimension_numbers = #tpu.dot_dimension_numbers<[1], [0], [0], [1], [0, 0, 1, 1], [], []>} : vector<2x128xf32>, vector<128x384xf32>, vector<2x384xf32> -> vector<2x384xf32>
    %351 = vector.extract_strided_slice %349 {offsets = [0, 0], sizes = [2, 128], strides = [1, 1]} : vector<2x384xf32> to vector<2x128xf32>
    %352 = vector.extract_strided_slice %350 {offsets = [0, 0], sizes = [2, 128], strides = [1, 1]} : vector<2x384xf32> to vector<2x128xf32>
    %353 = arith.addf %351, %352 : vector<2x128xf32>
    %354 = arith.negf %353 : vector<2x128xf32>
    %355 = math.exp %354 : vector<2x128xf32>
    %cst_92 = arith.constant 1.000000e+00 : f32
    %356 = vector.broadcast %cst_92 : f32 to vector<2x128xf32>
    %357 = arith.addf %356, %355 : vector<2x128xf32>
    %358 = arith.divf %356, %357 : vector<2x128xf32>
    %359 = vector.extract_strided_slice %349 {offsets = [0, 128], sizes = [2, 128], strides = [1, 1]} : vector<2x384xf32> to vector<2x128xf32>
    %360 = vector.extract_strided_slice %350 {offsets = [0, 128], sizes = [2, 128], strides = [1, 1]} : vector<2x384xf32> to vector<2x128xf32>
    %361 = arith.addf %359, %360 : vector<2x128xf32>
    %362 = arith.negf %361 : vector<2x128xf32>
    %363 = math.exp %362 : vector<2x128xf32>
    %cst_93 = arith.constant 1.000000e+00 : f32
    %364 = vector.broadcast %cst_93 : f32 to vector<2x128xf32>
    %365 = arith.addf %364, %363 : vector<2x128xf32>
    %366 = arith.divf %364, %365 : vector<2x128xf32>
    %367 = vector.extract_strided_slice %349 {offsets = [0, 256], sizes = [2, 128], strides = [1, 1]} : vector<2x384xf32> to vector<2x128xf32>
    %368 = vector.extract_strided_slice %350 {offsets = [0, 256], sizes = [2, 128], strides = [1, 1]} : vector<2x384xf32> to vector<2x128xf32>
    %369 = vector.broadcast %10 : vector<1x128xf32> to vector<2x128xf32>
    %370 = arith.addf %368, %369 : vector<2x128xf32>
    %371 = arith.mulf %358, %370 : vector<2x128xf32>
    %372 = arith.addf %367, %371 : vector<2x128xf32>
    %373 = math.tanh %372 : vector<2x128xf32>
    %cst_94 = arith.constant 1.000000e+00 : f32
    %374 = vector.broadcast %cst_94 : f32 to vector<2x128xf32>
    %375 = arith.subf %374, %366 : vector<2x128xf32>
    %376 = arith.mulf %375, %373 : vector<2x128xf32>
    %377 = arith.mulf %366, %306 : vector<2x128xf32>
    %378 = arith.addf %376, %377 : vector<2x128xf32>
    %379 = arith.select %313, %378, %306 : vector<2x128xf32>
    %380 = arith.index_cast %c4_i32 : i32 to index
    %c0_95 = arith.constant 0 : index
    %c0_96 = arith.constant 0 : index
    %381 = vector.load %arg7[%380, %c0_95, %c0_96] : memref<8x2x128xf32, #tpu.memory_space<vmem>>, vector<1x2x128xf32>
    %382 = vector.shape_cast %381 : vector<1x2x128xf32> to vector<2x128xf32>
    %383 = vector.shape_cast %379 : vector<2x128xf32> to vector<1x2x128xf32>
    tpu.vector_store %arg7[%380, %c0_95, %c0_96], %383 {strides = array<i32>} : memref<8x2x128xf32, #tpu.memory_space<vmem>>, vector<1x2x128xf32>,
    %c5_i32 = arith.constant 5 : i32
    %c8_i32_97 = arith.constant 8 : i32
    %384 = arith.muli %arg0, %c8_i32_97 : i32
    %385 = arith.addi %384, %c5_i32 : i32
    %c8_i32_98 = arith.constant 8 : i32
    %386 = arith.cmpi slt, %385, %c8_i32_98 : i32
    %387 = arith.index_cast %c5_i32 : i32 to index
    %c0_99 = arith.constant 0 : index
    %c0_100 = arith.constant 0 : index
    %388 = vector.load %arg1[%387, %c0_99, %c0_100] : memref<8x2x384xf32, #tpu.memory_space<vmem>>, vector<1x2x384xf32>
    %389 = vector.shape_cast %388 : vector<1x2x384xf32> to vector<2x384xf32>
    %cst_101 = arith.constant dense<0.000000e+00> : vector<2x384xf32>
    %390 = tpu.matmul %346, %4, %cst_101 {dimension_numbers = #tpu.dot_dimension_numbers<[1], [0], [0], [1], [0, 0, 1, 1], [], []>} : vector<2x128xf32>, vector<128x384xf32>, vector<2x384xf32> -> vector<2x384xf32>
    %391 = vector.extract_strided_slice %389 {offsets = [0, 0], sizes = [2, 128], strides = [1, 1]} : vector<2x384xf32> to vector<2x128xf32>
    %392 = vector.extract_strided_slice %390 {offsets = [0, 0], sizes = [2, 128], strides = [1, 1]} : vector<2x384xf32> to vector<2x128xf32>
    %393 = arith.addf %391, %392 : vector<2x128xf32>
    %394 = arith.negf %393 : vector<2x128xf32>
    %395 = math.exp %394 : vector<2x128xf32>
    %cst_102 = arith.constant 1.000000e+00 : f32
    %396 = vector.broadcast %cst_102 : f32 to vector<2x128xf32>
    %397 = arith.addf %396, %395 : vector<2x128xf32>
    %398 = arith.divf %396, %397 : vector<2x128xf32>
    %399 = vector.extract_strided_slice %389 {offsets = [0, 128], sizes = [2, 128], strides = [1, 1]} : vector<2x384xf32> to vector<2x128xf32>
    %400 = vector.extract_strided_slice %390 {offsets = [0, 128], sizes = [2, 128], strides = [1, 1]} : vector<2x384xf32> to vector<2x128xf32>
    %401 = arith.addf %399, %400 : vector<2x128xf32>
    %402 = arith.negf %401 : vector<2x128xf32>
    %403 = math.exp %402 : vector<2x128xf32>
    %cst_103 = arith.constant 1.000000e+00 : f32
    %404 = vector.broadcast %cst_103 : f32 to vector<2x128xf32>
    %405 = arith.addf %404, %403 : vector<2x128xf32>
    %406 = arith.divf %404, %405 : vector<2x128xf32>
    %407 = vector.extract_strided_slice %389 {offsets = [0, 256], sizes = [2, 128], strides = [1, 1]} : vector<2x384xf32> to vector<2x128xf32>
    %408 = vector.extract_strided_slice %390 {offsets = [0, 256], sizes = [2, 128], strides = [1, 1]} : vector<2x384xf32> to vector<2x128xf32>
    %409 = vector.broadcast %8 : vector<1x128xf32> to vector<2x128xf32>
    %410 = arith.addf %408, %409 : vector<2x128xf32>
    %411 = arith.mulf %398, %410 : vector<2x128xf32>
    %412 = arith.addf %407, %411 : vector<2x128xf32>
    %413 = math.tanh %412 : vector<2x128xf32>
    %cst_104 = arith.constant 1.000000e+00 : f32
    %414 = vector.broadcast %cst_104 : f32 to vector<2x128xf32>
    %415 = arith.subf %414, %406 : vector<2x128xf32>
    %416 = arith.mulf %415, %413 : vector<2x128xf32>
    %417 = arith.mulf %406, %346 : vector<2x128xf32>
    %418 = arith.addf %416, %417 : vector<2x128xf32>
    %419 = arith.select %386, %418, %346 : vector<2x128xf32>
    %cst_105 = arith.constant dense<0.000000e+00> : vector<2x384xf32>
    %420 = tpu.matmul %419, %12, %cst_105 {dimension_numbers = #tpu.dot_dimension_numbers<[1], [0], [0], [1], [0, 0, 1, 1], [], []>} : vector<2x128xf32>, vector<128x384xf32>, vector<2x384xf32> -> vector<2x384xf32>
    %421 = vector.broadcast %14 : vector<1x384xf32> to vector<2x384xf32>
    %422 = arith.addf %420, %421 : vector<2x384xf32>
    %cst_106 = arith.constant dense<0.000000e+00> : vector<2x384xf32>
    %423 = tpu.matmul %379, %6, %cst_106 {dimension_numbers = #tpu.dot_dimension_numbers<[1], [0], [0], [1], [0, 0, 1, 1], [], []>} : vector<2x128xf32>, vector<128x384xf32>, vector<2x384xf32> -> vector<2x384xf32>
    %424 = vector.extract_strided_slice %422 {offsets = [0, 0], sizes = [2, 128], strides = [1, 1]} : vector<2x384xf32> to vector<2x128xf32>
    %425 = vector.extract_strided_slice %423 {offsets = [0, 0], sizes = [2, 128], strides = [1, 1]} : vector<2x384xf32> to vector<2x128xf32>
    %426 = arith.addf %424, %425 : vector<2x128xf32>
    %427 = arith.negf %426 : vector<2x128xf32>
    %428 = math.exp %427 : vector<2x128xf32>
    %cst_107 = arith.constant 1.000000e+00 : f32
    %429 = vector.broadcast %cst_107 : f32 to vector<2x128xf32>
    %430 = arith.addf %429, %428 : vector<2x128xf32>
    %431 = arith.divf %429, %430 : vector<2x128xf32>
    %432 = vector.extract_strided_slice %422 {offsets = [0, 128], sizes = [2, 128], strides = [1, 1]} : vector<2x384xf32> to vector<2x128xf32>
    %433 = vector.extract_strided_slice %423 {offsets = [0, 128], sizes = [2, 128], strides = [1, 1]} : vector<2x384xf32> to vector<2x128xf32>
    %434 = arith.addf %432, %433 : vector<2x128xf32>
    %435 = arith.negf %434 : vector<2x128xf32>
    %436 = math.exp %435 : vector<2x128xf32>
    %cst_108 = arith.constant 1.000000e+00 : f32
    %437 = vector.broadcast %cst_108 : f32 to vector<2x128xf32>
    %438 = arith.addf %437, %436 : vector<2x128xf32>
    %439 = arith.divf %437, %438 : vector<2x128xf32>
    %440 = vector.extract_strided_slice %422 {offsets = [0, 256], sizes = [2, 128], strides = [1, 1]} : vector<2x384xf32> to vector<2x128xf32>
    %441 = vector.extract_strided_slice %423 {offsets = [0, 256], sizes = [2, 128], strides = [1, 1]} : vector<2x384xf32> to vector<2x128xf32>
    %442 = vector.broadcast %10 : vector<1x128xf32> to vector<2x128xf32>
    %443 = arith.addf %441, %442 : vector<2x128xf32>
    %444 = arith.mulf %431, %443 : vector<2x128xf32>
    %445 = arith.addf %440, %444 : vector<2x128xf32>
    %446 = math.tanh %445 : vector<2x128xf32>
    %cst_109 = arith.constant 1.000000e+00 : f32
    %447 = vector.broadcast %cst_109 : f32 to vector<2x128xf32>
    %448 = arith.subf %447, %439 : vector<2x128xf32>
    %449 = arith.mulf %448, %446 : vector<2x128xf32>
    %450 = arith.mulf %439, %379 : vector<2x128xf32>
    %451 = arith.addf %449, %450 : vector<2x128xf32>
    %452 = arith.select %386, %451, %379 : vector<2x128xf32>
    %453 = arith.index_cast %c5_i32 : i32 to index
    %c0_110 = arith.constant 0 : index
    %c0_111 = arith.constant 0 : index
    %454 = vector.load %arg7[%453, %c0_110, %c0_111] : memref<8x2x128xf32, #tpu.memory_space<vmem>>, vector<1x2x128xf32>
    %455 = vector.shape_cast %454 : vector<1x2x128xf32> to vector<2x128xf32>
    %456 = vector.shape_cast %452 : vector<2x128xf32> to vector<1x2x128xf32>
    tpu.vector_store %arg7[%453, %c0_110, %c0_111], %456 {strides = array<i32>} : memref<8x2x128xf32, #tpu.memory_space<vmem>>, vector<1x2x128xf32>,
    %c6_i32 = arith.constant 6 : i32
    %c8_i32_112 = arith.constant 8 : i32
    %457 = arith.muli %arg0, %c8_i32_112 : i32
    %458 = arith.addi %457, %c6_i32 : i32
    %c8_i32_113 = arith.constant 8 : i32
    %459 = arith.cmpi slt, %458, %c8_i32_113 : i32
    %460 = arith.index_cast %c6_i32 : i32 to index
    %c0_114 = arith.constant 0 : index
    %c0_115 = arith.constant 0 : index
    %461 = vector.load %arg1[%460, %c0_114, %c0_115] : memref<8x2x384xf32, #tpu.memory_space<vmem>>, vector<1x2x384xf32>
    %462 = vector.shape_cast %461 : vector<1x2x384xf32> to vector<2x384xf32>
    %cst_116 = arith.constant dense<0.000000e+00> : vector<2x384xf32>
    %463 = tpu.matmul %419, %4, %cst_116 {dimension_numbers = #tpu.dot_dimension_numbers<[1], [0], [0], [1], [0, 0, 1, 1], [], []>} : vector<2x128xf32>, vector<128x384xf32>, vector<2x384xf32> -> vector<2x384xf32>
    %464 = vector.extract_strided_slice %462 {offsets = [0, 0], sizes = [2, 128], strides = [1, 1]} : vector<2x384xf32> to vector<2x128xf32>
    %465 = vector.extract_strided_slice %463 {offsets = [0, 0], sizes = [2, 128], strides = [1, 1]} : vector<2x384xf32> to vector<2x128xf32>
    %466 = arith.addf %464, %465 : vector<2x128xf32>
    %467 = arith.negf %466 : vector<2x128xf32>
    %468 = math.exp %467 : vector<2x128xf32>
    %cst_117 = arith.constant 1.000000e+00 : f32
    %469 = vector.broadcast %cst_117 : f32 to vector<2x128xf32>
    %470 = arith.addf %469, %468 : vector<2x128xf32>
    %471 = arith.divf %469, %470 : vector<2x128xf32>
    %472 = vector.extract_strided_slice %462 {offsets = [0, 128], sizes = [2, 128], strides = [1, 1]} : vector<2x384xf32> to vector<2x128xf32>
    %473 = vector.extract_strided_slice %463 {offsets = [0, 128], sizes = [2, 128], strides = [1, 1]} : vector<2x384xf32> to vector<2x128xf32>
    %474 = arith.addf %472, %473 : vector<2x128xf32>
    %475 = arith.negf %474 : vector<2x128xf32>
    %476 = math.exp %475 : vector<2x128xf32>
    %cst_118 = arith.constant 1.000000e+00 : f32
    %477 = vector.broadcast %cst_118 : f32 to vector<2x128xf32>
    %478 = arith.addf %477, %476 : vector<2x128xf32>
    %479 = arith.divf %477, %478 : vector<2x128xf32>
    %480 = vector.extract_strided_slice %462 {offsets = [0, 256], sizes = [2, 128], strides = [1, 1]} : vector<2x384xf32> to vector<2x128xf32>
    %481 = vector.extract_strided_slice %463 {offsets = [0, 256], sizes = [2, 128], strides = [1, 1]} : vector<2x384xf32> to vector<2x128xf32>
    %482 = vector.broadcast %8 : vector<1x128xf32> to vector<2x128xf32>
    %483 = arith.addf %481, %482 : vector<2x128xf32>
    %484 = arith.mulf %471, %483 : vector<2x128xf32>
    %485 = arith.addf %480, %484 : vector<2x128xf32>
    %486 = math.tanh %485 : vector<2x128xf32>
    %cst_119 = arith.constant 1.000000e+00 : f32
    %487 = vector.broadcast %cst_119 : f32 to vector<2x128xf32>
    %488 = arith.subf %487, %479 : vector<2x128xf32>
    %489 = arith.mulf %488, %486 : vector<2x128xf32>
    %490 = arith.mulf %479, %419 : vector<2x128xf32>
    %491 = arith.addf %489, %490 : vector<2x128xf32>
    %492 = arith.select %459, %491, %419 : vector<2x128xf32>
    %cst_120 = arith.constant dense<0.000000e+00> : vector<2x384xf32>
    %493 = tpu.matmul %492, %12, %cst_120 {dimension_numbers = #tpu.dot_dimension_numbers<[1], [0], [0], [1], [0, 0, 1, 1], [], []>} : vector<2x128xf32>, vector<128x384xf32>, vector<2x384xf32> -> vector<2x384xf32>
    %494 = vector.broadcast %14 : vector<1x384xf32> to vector<2x384xf32>
    %495 = arith.addf %493, %494 : vector<2x384xf32>
    %cst_121 = arith.constant dense<0.000000e+00> : vector<2x384xf32>
    %496 = tpu.matmul %452, %6, %cst_121 {dimension_numbers = #tpu.dot_dimension_numbers<[1], [0], [0], [1], [0, 0, 1, 1], [], []>} : vector<2x128xf32>, vector<128x384xf32>, vector<2x384xf32> -> vector<2x384xf32>
    %497 = vector.extract_strided_slice %495 {offsets = [0, 0], sizes = [2, 128], strides = [1, 1]} : vector<2x384xf32> to vector<2x128xf32>
    %498 = vector.extract_strided_slice %496 {offsets = [0, 0], sizes = [2, 128], strides = [1, 1]} : vector<2x384xf32> to vector<2x128xf32>
    %499 = arith.addf %497, %498 : vector<2x128xf32>
    %500 = arith.negf %499 : vector<2x128xf32>
    %501 = math.exp %500 : vector<2x128xf32>
    %cst_122 = arith.constant 1.000000e+00 : f32
    %502 = vector.broadcast %cst_122 : f32 to vector<2x128xf32>
    %503 = arith.addf %502, %501 : vector<2x128xf32>
    %504 = arith.divf %502, %503 : vector<2x128xf32>
    %505 = vector.extract_strided_slice %495 {offsets = [0, 128], sizes = [2, 128], strides = [1, 1]} : vector<2x384xf32> to vector<2x128xf32>
    %506 = vector.extract_strided_slice %496 {offsets = [0, 128], sizes = [2, 128], strides = [1, 1]} : vector<2x384xf32> to vector<2x128xf32>
    %507 = arith.addf %505, %506 : vector<2x128xf32>
    %508 = arith.negf %507 : vector<2x128xf32>
    %509 = math.exp %508 : vector<2x128xf32>
    %cst_123 = arith.constant 1.000000e+00 : f32
    %510 = vector.broadcast %cst_123 : f32 to vector<2x128xf32>
    %511 = arith.addf %510, %509 : vector<2x128xf32>
    %512 = arith.divf %510, %511 : vector<2x128xf32>
    %513 = vector.extract_strided_slice %495 {offsets = [0, 256], sizes = [2, 128], strides = [1, 1]} : vector<2x384xf32> to vector<2x128xf32>
    %514 = vector.extract_strided_slice %496 {offsets = [0, 256], sizes = [2, 128], strides = [1, 1]} : vector<2x384xf32> to vector<2x128xf32>
    %515 = vector.broadcast %10 : vector<1x128xf32> to vector<2x128xf32>
    %516 = arith.addf %514, %515 : vector<2x128xf32>
    %517 = arith.mulf %504, %516 : vector<2x128xf32>
    %518 = arith.addf %513, %517 : vector<2x128xf32>
    %519 = math.tanh %518 : vector<2x128xf32>
    %cst_124 = arith.constant 1.000000e+00 : f32
    %520 = vector.broadcast %cst_124 : f32 to vector<2x128xf32>
    %521 = arith.subf %520, %512 : vector<2x128xf32>
    %522 = arith.mulf %521, %519 : vector<2x128xf32>
    %523 = arith.mulf %512, %452 : vector<2x128xf32>
    %524 = arith.addf %522, %523 : vector<2x128xf32>
    %525 = arith.select %459, %524, %452 : vector<2x128xf32>
    %526 = arith.index_cast %c6_i32 : i32 to index
    %c0_125 = arith.constant 0 : index
    %c0_126 = arith.constant 0 : index
    %527 = vector.load %arg7[%526, %c0_125, %c0_126] : memref<8x2x128xf32, #tpu.memory_space<vmem>>, vector<1x2x128xf32>
    %528 = vector.shape_cast %527 : vector<1x2x128xf32> to vector<2x128xf32>
    %529 = vector.shape_cast %525 : vector<2x128xf32> to vector<1x2x128xf32>
    tpu.vector_store %arg7[%526, %c0_125, %c0_126], %529 {strides = array<i32>} : memref<8x2x128xf32, #tpu.memory_space<vmem>>, vector<1x2x128xf32>,
    %c7_i32 = arith.constant 7 : i32
    %c8_i32_127 = arith.constant 8 : i32
    %530 = arith.muli %arg0, %c8_i32_127 : i32
    %531 = arith.addi %530, %c7_i32 : i32
    %c8_i32_128 = arith.constant 8 : i32
    %532 = arith.cmpi slt, %531, %c8_i32_128 : i32
    %533 = arith.index_cast %c7_i32 : i32 to index
    %c0_129 = arith.constant 0 : index
    %c0_130 = arith.constant 0 : index
    %534 = vector.load %arg1[%533, %c0_129, %c0_130] : memref<8x2x384xf32, #tpu.memory_space<vmem>>, vector<1x2x384xf32>
    %535 = vector.shape_cast %534 : vector<1x2x384xf32> to vector<2x384xf32>
    %cst_131 = arith.constant dense<0.000000e+00> : vector<2x384xf32>
    %536 = tpu.matmul %492, %4, %cst_131 {dimension_numbers = #tpu.dot_dimension_numbers<[1], [0], [0], [1], [0, 0, 1, 1], [], []>} : vector<2x128xf32>, vector<128x384xf32>, vector<2x384xf32> -> vector<2x384xf32>
    %537 = vector.extract_strided_slice %535 {offsets = [0, 0], sizes = [2, 128], strides = [1, 1]} : vector<2x384xf32> to vector<2x128xf32>
    %538 = vector.extract_strided_slice %536 {offsets = [0, 0], sizes = [2, 128], strides = [1, 1]} : vector<2x384xf32> to vector<2x128xf32>
    %539 = arith.addf %537, %538 : vector<2x128xf32>
    %540 = arith.negf %539 : vector<2x128xf32>
    %541 = math.exp %540 : vector<2x128xf32>
    %cst_132 = arith.constant 1.000000e+00 : f32
    %542 = vector.broadcast %cst_132 : f32 to vector<2x128xf32>
    %543 = arith.addf %542, %541 : vector<2x128xf32>
    %544 = arith.divf %542, %543 : vector<2x128xf32>
    %545 = vector.extract_strided_slice %535 {offsets = [0, 128], sizes = [2, 128], strides = [1, 1]} : vector<2x384xf32> to vector<2x128xf32>
    %546 = vector.extract_strided_slice %536 {offsets = [0, 128], sizes = [2, 128], strides = [1, 1]} : vector<2x384xf32> to vector<2x128xf32>
    %547 = arith.addf %545, %546 : vector<2x128xf32>
    %548 = arith.negf %547 : vector<2x128xf32>
    %549 = math.exp %548 : vector<2x128xf32>
    %cst_133 = arith.constant 1.000000e+00 : f32
    %550 = vector.broadcast %cst_133 : f32 to vector<2x128xf32>
    %551 = arith.addf %550, %549 : vector<2x128xf32>
    %552 = arith.divf %550, %551 : vector<2x128xf32>
    %553 = vector.extract_strided_slice %535 {offsets = [0, 256], sizes = [2, 128], strides = [1, 1]} : vector<2x384xf32> to vector<2x128xf32>
    %554 = vector.extract_strided_slice %536 {offsets = [0, 256], sizes = [2, 128], strides = [1, 1]} : vector<2x384xf32> to vector<2x128xf32>
    %555 = vector.broadcast %8 : vector<1x128xf32> to vector<2x128xf32>
    %556 = arith.addf %554, %555 : vector<2x128xf32>
    %557 = arith.mulf %544, %556 : vector<2x128xf32>
    %558 = arith.addf %553, %557 : vector<2x128xf32>
    %559 = math.tanh %558 : vector<2x128xf32>
    %cst_134 = arith.constant 1.000000e+00 : f32
    %560 = vector.broadcast %cst_134 : f32 to vector<2x128xf32>
    %561 = arith.subf %560, %552 : vector<2x128xf32>
    %562 = arith.mulf %561, %559 : vector<2x128xf32>
    %563 = arith.mulf %552, %492 : vector<2x128xf32>
    %564 = arith.addf %562, %563 : vector<2x128xf32>
    %565 = arith.select %532, %564, %492 : vector<2x128xf32>
    %cst_135 = arith.constant dense<0.000000e+00> : vector<2x384xf32>
    %566 = tpu.matmul %565, %12, %cst_135 {dimension_numbers = #tpu.dot_dimension_numbers<[1], [0], [0], [1], [0, 0, 1, 1], [], []>} : vector<2x128xf32>, vector<128x384xf32>, vector<2x384xf32> -> vector<2x384xf32>
    %567 = vector.broadcast %14 : vector<1x384xf32> to vector<2x384xf32>
    %568 = arith.addf %566, %567 : vector<2x384xf32>
    %cst_136 = arith.constant dense<0.000000e+00> : vector<2x384xf32>
    %569 = tpu.matmul %525, %6, %cst_136 {dimension_numbers = #tpu.dot_dimension_numbers<[1], [0], [0], [1], [0, 0, 1, 1], [], []>} : vector<2x128xf32>, vector<128x384xf32>, vector<2x384xf32> -> vector<2x384xf32>
    %570 = vector.extract_strided_slice %568 {offsets = [0, 0], sizes = [2, 128], strides = [1, 1]} : vector<2x384xf32> to vector<2x128xf32>
    %571 = vector.extract_strided_slice %569 {offsets = [0, 0], sizes = [2, 128], strides = [1, 1]} : vector<2x384xf32> to vector<2x128xf32>
    %572 = arith.addf %570, %571 : vector<2x128xf32>
    %573 = arith.negf %572 : vector<2x128xf32>
    %574 = math.exp %573 : vector<2x128xf32>
    %cst_137 = arith.constant 1.000000e+00 : f32
    %575 = vector.broadcast %cst_137 : f32 to vector<2x128xf32>
    %576 = arith.addf %575, %574 : vector<2x128xf32>
    %577 = arith.divf %575, %576 : vector<2x128xf32>
    %578 = vector.extract_strided_slice %568 {offsets = [0, 128], sizes = [2, 128], strides = [1, 1]} : vector<2x384xf32> to vector<2x128xf32>
    %579 = vector.extract_strided_slice %569 {offsets = [0, 128], sizes = [2, 128], strides = [1, 1]} : vector<2x384xf32> to vector<2x128xf32>
    %580 = arith.addf %578, %579 : vector<2x128xf32>
    %581 = arith.negf %580 : vector<2x128xf32>
    %582 = math.exp %581 : vector<2x128xf32>
    %cst_138 = arith.constant 1.000000e+00 : f32
    %583 = vector.broadcast %cst_138 : f32 to vector<2x128xf32>
    %584 = arith.addf %583, %582 : vector<2x128xf32>
    %585 = arith.divf %583, %584 : vector<2x128xf32>
    %586 = vector.extract_strided_slice %568 {offsets = [0, 256], sizes = [2, 128], strides = [1, 1]} : vector<2x384xf32> to vector<2x128xf32>
    %587 = vector.extract_strided_slice %569 {offsets = [0, 256], sizes = [2, 128], strides = [1, 1]} : vector<2x384xf32> to vector<2x128xf32>
    %588 = vector.broadcast %10 : vector<1x128xf32> to vector<2x128xf32>
    %589 = arith.addf %587, %588 : vector<2x128xf32>
    %590 = arith.mulf %577, %589 : vector<2x128xf32>
    %591 = arith.addf %586, %590 : vector<2x128xf32>
    %592 = math.tanh %591 : vector<2x128xf32>
    %cst_139 = arith.constant 1.000000e+00 : f32
    %593 = vector.broadcast %cst_139 : f32 to vector<2x128xf32>
    %594 = arith.subf %593, %585 : vector<2x128xf32>
    %595 = arith.mulf %594, %592 : vector<2x128xf32>
    %596 = arith.mulf %585, %525 : vector<2x128xf32>
    %597 = arith.addf %595, %596 : vector<2x128xf32>
    %598 = arith.select %532, %597, %525 : vector<2x128xf32>
    %599 = arith.index_cast %c7_i32 : i32 to index
    %c0_140 = arith.constant 0 : index
    %c0_141 = arith.constant 0 : index
    %600 = vector.load %arg7[%599, %c0_140, %c0_141] : memref<8x2x128xf32, #tpu.memory_space<vmem>>, vector<1x2x128xf32>
    %601 = vector.shape_cast %600 : vector<1x2x128xf32> to vector<2x128xf32>
    %602 = vector.shape_cast %598 : vector<2x128xf32> to vector<1x2x128xf32>
    tpu.vector_store %arg7[%599, %c0_140, %c0_141], %602 {strides = array<i32>} : memref<8x2x128xf32, #tpu.memory_space<vmem>>, vector<1x2x128xf32>,
    %c8_i32_142 = arith.constant 8 : i32
    %c0_143 = arith.constant 0 : index
    %c0_144 = arith.constant 0 : index
    %c0_145 = arith.constant 0 : index
    %603 = vector.load %arg9[%c0_143, %c0_144, %c0_145] : memref<2x2x128xf32, #tpu.memory_space<vmem>>, vector<1x2x128xf32>
    %604 = vector.shape_cast %603 : vector<1x2x128xf32> to vector<2x128xf32>
    %605 = vector.shape_cast %565 : vector<2x128xf32> to vector<1x2x128xf32>
    tpu.vector_store %arg9[%c0_143, %c0_144, %c0_145], %605 {strides = array<i32>} : memref<2x2x128xf32, #tpu.memory_space<vmem>>, vector<1x2x128xf32>,
    %c1_146 = arith.constant 1 : index
    %c0_147 = arith.constant 0 : index
    %c0_148 = arith.constant 0 : index
    %606 = vector.load %arg9[%c1_146, %c0_147, %c0_148] : memref<2x2x128xf32, #tpu.memory_space<vmem>>, vector<1x2x128xf32>
    %607 = vector.shape_cast %606 : vector<1x2x128xf32> to vector<2x128xf32>
    %608 = vector.shape_cast %598 : vector<2x128xf32> to vector<1x2x128xf32>
    tpu.vector_store %arg9[%c1_146, %c0_147, %c0_148], %608 {strides = array<i32>} : memref<2x2x128xf32, #tpu.memory_space<vmem>>, vector<1x2x128xf32>,
    %c0_149 = arith.constant 0 : index
    %c0_150 = arith.constant 0 : index
    %c0_151 = arith.constant 0 : index
    %609 = vector.load %arg9[%c0_149, %c0_150, %c0_151] : memref<2x2x128xf32, #tpu.memory_space<vmem>>, vector<2x2x128xf32>
    %c0_152 = arith.constant 0 : index
    %c0_153 = arith.constant 0 : index
    %c0_154 = arith.constant 0 : index
    %610 = vector.load %arg8[%c0_152, %c0_153, %c0_154] : memref<2x2x128xf32, #tpu.memory_space<vmem>>, vector<2x2x128xf32>
    tpu.vector_store %arg8[%c0_152, %c0_153, %c0_154], %609 {strides = array<i32>} : memref<2x2x128xf32, #tpu.memory_space<vmem>>, vector<2x2x128xf32>,
    return
  }
  func.func @transform_0(%arg0: i32) -> (i32, i32, i32) {
    %c0_i32 = arith.constant 0 : i32
    %c0_i32_0 = arith.constant 0 : i32
    %c0_i32_1 = arith.constant 0 : i32
    return %arg0, %c0_i32, %c0_i32_0 : i32, i32, i32
  }
  func.func @transform_1(%arg0: i32) -> (i32, i32, i32) {
    %c0_i32 = arith.constant 0 : i32
    %c0_i32_0 = arith.constant 0 : i32
    %c0_i32_1 = arith.constant 0 : i32
    %c0_i32_2 = arith.constant 0 : i32
    return %c0_i32, %c0_i32_0, %c0_i32_1 : i32, i32, i32
  }
  func.func @transform_2(%arg0: i32) -> (i32, i32, i32) {
    %c0_i32 = arith.constant 0 : i32
    %c0_i32_0 = arith.constant 0 : i32
    %c0_i32_1 = arith.constant 0 : i32
    %c0_i32_2 = arith.constant 0 : i32
    return %c0_i32, %c0_i32_0, %c0_i32_1 : i32, i32, i32
  }
  func.func @transform_3(%arg0: i32) -> (i32, i32, i32) {
    %c0_i32 = arith.constant 0 : i32
    %c0_i32_0 = arith.constant 0 : i32
    %c0_i32_1 = arith.constant 0 : i32
    %c0_i32_2 = arith.constant 0 : i32
    return %c0_i32, %c0_i32_0, %c0_i32_1 : i32, i32, i32
  }
  func.func @transform_4(%arg0: i32) -> (i32, i32, i32) {
    %c0_i32 = arith.constant 0 : i32
    %c0_i32_0 = arith.constant 0 : i32
    %c0_i32_1 = arith.constant 0 : i32
    %c0_i32_2 = arith.constant 0 : i32
    return %c0_i32, %c0_i32_0, %c0_i32_1 : i32, i32, i32
  }
  func.func @transform_5(%arg0: i32) -> (i32, i32, i32) {
    %c0_i32 = arith.constant 0 : i32
    %c0_i32_0 = arith.constant 0 : i32
    %c0_i32_1 = arith.constant 0 : i32
    %c0_i32_2 = arith.constant 0 : i32
    return %c0_i32, %c0_i32_0, %c0_i32_1 : i32, i32, i32
  }
  func.func @transform_6(%arg0: i32) -> (i32, i32, i32) {
    %c0_i32 = arith.constant 0 : i32
    %c0_i32_0 = arith.constant 0 : i32
    %c0_i32_1 = arith.constant 0 : i32
    return %arg0, %c0_i32, %c0_i32_0 : i32, i32, i32
  }
  func.func @transform_7(%arg0: i32) -> (i32, i32, i32) {
    %c0_i32 = arith.constant 0 : i32
    %c0_i32_0 = arith.constant 0 : i32
    %c0_i32_1 = arith.constant 0 : i32
    %c0_i32_2 = arith.constant 0 : i32
    return %c0_i32, %c0_i32_0, %c0_i32_1 : i32, i32, i32
  }
}

</mosaic_0001>

<llo_original>
// kernel: cpcar_gru_forward.1
$region0: #{cpcar_gru_forward.1}
  #allocation0 [shape = 'u32[]', space=smem, size = 0x4, offset = 0x4, fixed_abs, tag = 'smem constant byte address 0x4 - core index']
  #allocation1 [shape = 'u32[72,128]{1,0:T(1,128)}', space=vmem, size = 0x9000, scoped, tag = 'internal scratch']
  #allocation2 [shape = 'f32[2,2,128]{2,1,0:T(2,128)}', space=vmem, size = 0x800, scoped, tag = 'scratch operand']
  %s0 = inlined_call_operand.vmem [shape: f32[8,2,384], index: 0, kind: input, shape index: {}]
  %s1 = inlined_call_operand.hbm [shape: f32[2,128,384], index: 1, kind: input, shape index: {}]
  %s2 = inlined_call_operand.vmem [shape: f32[2,1,128], index: 2, kind: input, shape index: {}]
  %s3 = inlined_call_operand.vmem [shape: f32[2,2,128], index: 3, kind: input, shape index: {}]
  %s4 = inlined_call_operand.hbm [shape: f32[1,128,384], index: 4, kind: input, shape index: {}]
  %s5 = inlined_call_operand.vmem [shape: f32[1,1,384], index: 5, kind: input, shape index: {}]
  %s6 = inlined_call_operand.hbm [shape: f32[8,2,128], index: 6, kind: output, shape index: {0}]
  %s7 = inlined_call_operand.hbm [shape: f32[2,2,128], index: 7, kind: output, shape index: {1}]
  %8 = xla_tuple %s6, %s7
  %s9 = sld [smem:[#allocation0]]
  $region54: #{cpcar_gru_forward.1} parent=0
    _
  %s11 = ssub.s32 1, %s9
  %s12 = scalar_select 0, %s11, %s9
  $region1: #{cpcar_gru_forward.1} parent=0
    #allocation3 [shape = 'u8[393216]{0}', space=vmem, size = 0x60000, scoped, tag = 'input window, operand 1, single buffered']
    #allocation4 [shape = 's32[1]{0}', space=sflag, size = 0x4, scoped, tag = 'scoped memory for cpcar_gru_forward.1']
    #allocation5 [shape = 's32[1]{0}', space=sflag, size = 0x4, scoped, tag = 'scoped memory for cpcar_gru_forward.1']
    #allocation6 [shape = 'u8[196608]{0}', space=vmem, size = 0x30000, scoped, tag = 'input window, operand 4, single buffered']
    #allocation7 [shape = 's32[1]{0}', space=sflag, size = 0x4, scoped, tag = 'scoped memory for cpcar_gru_forward.1']
    #allocation8 [shape = 'u8[8192]{0}', space=vmem, size = 0x2000, scoped, tag = 'output window, operand 0, single buffered']
    #allocation9 [shape = 'u8[2048]{0}', space=vmem, size = 0x800, scoped, tag = 'output window, operand 1, single buffered']
    #allocation10 [shape = 's32[1]{0}', space=sflag, size = 0x4, scoped, tag = 'scoped memory for cpcar_gru_forward.1']
    %13 = vsyncpa [#allocation4], 0
    %14 = vsyncpa [#allocation7], 0
    %15 = vsyncpa [#allocation5], 0
    %16 = vsyncpa [#allocation10], 0
    // Predicated region
    $region2: #{cpcar_gru_forward.1} parent=1 // pred_check
      _
    $region3: #{cpcar_gru_forward.1} parent=1 // pred_check_branch
      %18 = sbr.rel (0) target = $region5
    $region4: #{cpcar_gru_forward.1} parent=1 // pred_region
      _
    $region5: #{cpcar_gru_forward.1} parent=1 // pred_fallthru
      _
    // Predicated region
    $region6: #{cpcar_gru_forward.1} parent=1 // pred_check
      _
    $region7: #{cpcar_gru_forward.1} parent=1 // pred_check_branch
      %20 = sbr.rel (0) target = $region9
    $region8: #{cpcar_gru_forward.1} parent=1 // pred_region
      %22 = vsyncadd [#allocation4], 0
      %s23 = sshll.u32 %s1, 4
      %s24 = int_to_ptr.hbm [resolvable:$true] %s23
      %s25 = sshll.u32 [#allocation3], 4
      %s26 = int_to_ptr.vmem [resolvable:$true] %s25
      %31 = dma.hbm_to_vmem [thread:$0]  %s24, 12288, %s26, [#allocation4], 384, 384, 24
    $region9: #{cpcar_gru_forward.1} parent=1 // pred_fallthru
      _
    // Predicated region
    $region10: #{cpcar_gru_forward.1} parent=1 // pred_check
      _
    $region11: #{cpcar_gru_forward.1} parent=1 // pred_check_branch
      %33 = sbr.rel (0) target = $region13
    $region12: #{cpcar_gru_forward.1} parent=1 // pred_region
      _
    $region13: #{cpcar_gru_forward.1} parent=1 // pred_fallthru
      _
    // Predicated region
    $region14: #{cpcar_gru_forward.1} parent=1 // pred_check
      _
    $region15: #{cpcar_gru_forward.1} parent=1 // pred_check_branch
      %35 = sbr.rel (0) target = $region17
    $region16: #{cpcar_gru_forward.1} parent=1 // pred_region
      _
    $region17: #{cpcar_gru_forward.1} parent=1 // pred_fallthru
      _
    // Predicated region
    $region18: #{cpcar_gru_forward.1} parent=1 // pred_check
      _
    $region19: #{cpcar_gru_forward.1} parent=1 // pred_check_branch
      %37 = sbr.rel (0) target = $region21
    $region20: #{cpcar_gru_forward.1} parent=1 // pred_region
      %39 = vsyncadd [#allocation7], 0
      %s40 = sshll.u32 %s4, 4
      %s41 = int_to_ptr.hbm [resolvable:$true] %s40
      %s42 = sshll.u32 [#allocation6], 4
      %s43 = int_to_ptr.vmem [resolvable:$true] %s42
      %48 = dma.hbm_to_vmem [thread:$0]  %s41, 6144, %s43, [#allocation7], 384, 384, 24
    $region21: #{cpcar_gru_forward.1} parent=1 // pred_fallthru
      _
    // Predicated region
    $region22: #{cpcar_gru_forward.1} parent=1 // pred_check
      _
    $region23: #{cpcar_gru_forward.1} parent=1 // pred_check_branch
      %50 = sbr.rel (0) target = $region25
    $region24: #{cpcar_gru_forward.1} parent=1 // pred_region
      _
    $region25: #{cpcar_gru_forward.1} parent=1 // pred_fallthru
      _
    // Predicated region
    $region26: #{cpcar_gru_forward.1} parent=1 // pred_check
      _
    $region27: #{cpcar_gru_forward.1} parent=1 // pred_check_branch
      %52 = sbr.rel (0) target = $region29
    $region28: #{cpcar_gru_forward.1} parent=1 // pred_region
      %54 = dma.done [#allocation4], 12288
    $region29: #{cpcar_gru_forward.1} parent=1 // pred_fallthru
      _
    // Predicated region
    $region30: #{cpcar_gru_forward.1} parent=1 // pred_check
      _
    $region31: #{cpcar_gru_forward.1} parent=1 // pred_check_branch
      %56 = sbr.rel (0) target = $region33
    $region32: #{cpcar_gru_forward.1} parent=1 // pred_region
      %58 = dma.done [#allocation7], 6144
    $region33: #{cpcar_gru_forward.1} parent=1 // pred_fallthru
      _
    %p59 = scmp.eq.s32.totalorder 0, 0
    // Predicated region
    $region34: #{cpcar_gru_forward.1} parent=1 // pred_check
      %p60 = pneg %p59
    $region35: #{cpcar_gru_forward.1} parent=1 // pred_check_branch
      %62 = sbr.rel (%p60) target = $region37
    $region36: #{cpcar_gru_forward.1} parent=1 // pred_region
      %v63 = vld [vmem:[%s3] sm:$0x3]
      %v64 = vld [vmem:[%s3 + $0x2] sm:$0x3]
      %65 = vst [vmem:[#allocation2] sm:$0x3] %v63
      %66 = vst [vmem:[#allocation2 + $0x2] sm:$0x3] %v64
    $region37: #{cpcar_gru_forward.1} parent=1 // pred_fallthru
      _
    %v67 = vld [vmem:[#allocation3] sm:$0xff]
    %v68 = vld [vmem:[#allocation3 + $0x8] sm:$0xff]
    %v69 = vld [vmem:[#allocation3 + $0x10] sm:$0xff]
    %v70 = vld [vmem:[#allocation3 + $0x18] sm:$0xff]
    %v71 = vld [vmem:[#allocation3 + $0x20] sm:$0xff]
    %v72 = vld [vmem:[#allocation3 + $0x28] sm:$0xff]
    %v73 = vld [vmem:[#allocation3 + $0x30] sm:$0xff]
    %v74 = vld [vmem:[#allocation3 + $0x38] sm:$0xff]
    %v75 = vld [vmem:[#allocation3 + $0x40] sm:$0xff]
    %v76 = vld [vmem:[#allocation3 + $0x48] sm:$0xff]
    %v77 = vld [vmem:[#allocation3 + $0x50] sm:$0xff]
    %v78 = vld [vmem:[#allocation3 + $0x58] sm:$0xff]
    %v79 = vld [vmem:[#allocation3 + $0x60] sm:$0xff]
    %v80 = vld [vmem:[#allocation3 + $0x68] sm:$0xff]
    %v81 = vld [vmem:[#allocation3 + $0x70] sm:$0xff]
    %v82 = vld [vmem:[#allocation3 + $0x78] sm:$0xff]
    %v83 = vld [vmem:[#allocation3 + $0x80] sm:$0xff]
    %v84 = vld [vmem:[#allocation3 + $0x88] sm:$0xff]
    %v85 = vld [vmem:[#allocation3 + $0x90] sm:$0xff]
    %v86 = vld [vmem:[#allocation3 + $0x98] sm:$0xff]
    %v87 = vld [vmem:[#allocation3 + $0xa0] sm:$0xff]
    %v88 = vld [vmem:[#allocation3 + $0xa8] sm:$0xff]
    %v89 = vld [vmem:[#allocation3 + $0xb0] sm:$0xff]
    %v90 = vld [vmem:[#allocation3 + $0xb8] sm:$0xff]
    %v91 = vld [vmem:[#allocation3 + $0xc0] sm:$0xff]
    %v92 = vld [vmem:[#allocation3 + $0xc8] sm:$0xff]
    %v93 = vld [vmem:[#allocation3 + $0xd0] sm:$0xff]
    %v94 = vld [vmem:[#allocation3 + $0xd8] sm:$0xff]
    %v95 = vld [vmem:[#allocation3 + $0xe0] sm:$0xff]
    %v96 = vld [vmem:[#allocation3 + $0xe8] sm:$0xff]
    %v97 = vld [vmem:[#allocation3 + $0xf0] sm:$0xff]
    %v98 = vld [vmem:[#allocation3 + $0xf8] sm:$0xff]
    %v99 = vld [vmem:[#allocation3 + $0x100] sm:$0xff]
    %v100 = vld [vmem:[#allocation3 + $0x108] sm:$0xff]
    %v101 = vld [vmem:[#allocation3 + $0x110] sm:$0xff]
    %v102 = vld [vmem:[#allocation3 + $0x118] sm:$0xff]
    %v103 = vld [vmem:[#allocation3 + $0x120] sm:$0xff]
    %v104 = vld [vmem:[#allocation3 + $0x128] sm:$0xff]
    %v105 = vld [vmem:[#allocation3 + $0x130] sm:$0xff]
    %v106 = vld [vmem:[#allocation3 + $0x138] sm:$0xff]
    %v107 = vld [vmem:[#allocation3 + $0x140] sm:$0xff]
    %v108 = vld [vmem:[#allocation3 + $0x148] sm:$0xff]
    %v109 = vld [vmem:[#allocation3 + $0x150] sm:$0xff]
    %v110 = vld [vmem:[#allocation3 + $0x158] sm:$0xff]
    %v111 = vld [vmem:[#allocation3 + $0x160] sm:$0xff]
    %v112 = vld [vmem:[#allocation3 + $0x168] sm:$0xff]
    %v113 = vld [vmem:[#allocation3 + $0x170] sm:$0xff]
    %v114 = vld [vmem:[#allocation3 + $0x178] sm:$0xff]
    %s115 = scalar_lea.vmem [#allocation3], 384
    %v116 = vld [vmem:[%s115] sm:$0xff]
    %v117 = vld [vmem:[%s115 + $0x8] sm:$0xff]
    %v118 = vld [vmem:[%s115 + $0x10] sm:$0xff]
    %v119 = vld [vmem:[%s115 + $0x18] sm:$0xff]
    %v120 = vld [vmem:[%s115 + $0x20] sm:$0xff]
    %v121 = vld [vmem:[%s115 + $0x28] sm:$0xff]
    %v122 = vld [vmem:[%s115 + $0x30] sm:$0xff]
    %v123 = vld [vmem:[%s115 + $0x38] sm:$0xff]
    %v124 = vld [vmem:[%s115 + $0x40] sm:$0xff]
    %v125 = vld [vmem:[%s115 + $0x48] sm:$0xff]
    %v126 = vld [vmem:[%s115 + $0x50] sm:$0xff]
    %v127 = vld [vmem:[%s115 + $0x58] sm:$0xff]
    %v128 = vld [vmem:[%s115 + $0x60] sm:$0xff]
    %v129 = vld [vmem:[%s115 + $0x68] sm:$0xff]
    %v130 = vld [vmem:[%s115 + $0x70] sm:$0xff]
    %v131 = vld [vmem:[%s115 + $0x78] sm:$0xff]
    %v132 = vld [vmem:[%s115 + $0x80] sm:$0xff]
    %v133 = vld [vmem:[%s115 + $0x88] sm:$0xff]
    %v134 = vld [vmem:[%s115 + $0x90] sm:$0xff]
    %v135 = vld [vmem:[%s115 + $0x98] sm:$0xff]
    %v136 = vld [vmem:[%s115 + $0xa0] sm:$0xff]
    %v137 = vld [vmem:[%s115 + $0xa8] sm:$0xff]
    %v138 = vld [vmem:[%s115 + $0xb0] sm:$0xff]
    %v139 = vld [vmem:[%s115 + $0xb8] sm:$0xff]
    %v140 = vld [vmem:[%s115 + $0xc0] sm:$0xff]
    %v141 = vld [vmem:[%s115 + $0xc8] sm:$0xff]
    %v142 = vld [vmem:[%s115 + $0xd0] sm:$0xff]
    %v143 = vld [vmem:[%s115 + $0xd8] sm:$0xff]
    %v144 = vld [vmem:[%s115 + $0xe0] sm:$0xff]
    %v145 = vld [vmem:[%s115 + $0xe8] sm:$0xff]
    %v146 = vld [vmem:[%s115 + $0xf0] sm:$0xff]
    %v147 = vld [vmem:[%s115 + $0xf8] sm:$0xff]
    %v148 = vld [vmem:[%s115 + $0x100] sm:$0xff]
    %v149 = vld [vmem:[%s115 + $0x108] sm:$0xff]
    %v150 = vld [vmem:[%s115 + $0x110] sm:$0xff]
    %v151 = vld [vmem:[%s115 + $0x118] sm:$0xff]
    %v152 = vld [vmem:[%s115 + $0x120] sm:$0xff]
    %v153 = vld [vmem:[%s115 + $0x128] sm:$0xff]
    %v154 = vld [vmem:[%s115 + $0x130] sm:$0xff]
    %v155 = vld [vmem:[%s115 + $0x138] sm:$0xff]
    %v156 = vld [vmem:[%s115 + $0x140] sm:$0xff]
    %v157 = vld [vmem:[%s115 + $0x148] sm:$0xff]
    %v158 = vld [vmem:[%s115 + $0x150] sm:$0xff]
    %v159 = vld [vmem:[%s115 + $0x158] sm:$0xff]
    %v160 = vld [vmem:[%s115 + $0x160] sm:$0xff]
    %v161 = vld [vmem:[%s115 + $0x168] sm:$0xff]
    %v162 = vld [vmem:[%s115 + $0x170] sm:$0xff]
    %v163 = vld [vmem:[%s115 + $0x178] sm:$0xff]
    %v164 = vld [vmem:[%s2] sm:$0x1]
    %s165 = scalar_lea.vmem %s2, 1
    %v166 = vld [vmem:[%s165] sm:$0x1]
    %v167 = vld [vmem:[#allocation6] sm:$0xff]
    %v168 = vld [vmem:[#allocation6 + $0x8] sm:$0xff]
    %v169 = vld [vmem:[#allocation6 + $0x10] sm:$0xff]
    %v170 = vld [vmem:[#allocation6 + $0x18] sm:$0xff]
    %v171 = vld [vmem:[#allocation6 + $0x20] sm:$0xff]
    %v172 = vld [vmem:[#allocation6 + $0x28] sm:$0xff]
    %v173 = vld [vmem:[#allocation6 + $0x30] sm:$0xff]
    %v174 = vld [vmem:[#allocation6 + $0x38] sm:$0xff]
    %v175 = vld [vmem:[#allocation6 + $0x40] sm:$0xff]
    %v176 = vld [vmem:[#allocation6 + $0x48] sm:$0xff]
    %v177 = vld [vmem:[#allocation6 + $0x50] sm:$0xff]
    %v178 = vld [vmem:[#allocation6 + $0x58] sm:$0xff]
    %v179 = vld [vmem:[#allocation6 + $0x60] sm:$0xff]
    %v180 = vld [vmem:[#allocation6 + $0x68] sm:$0xff]
    %v181 = vld [vmem:[#allocation6 + $0x70] sm:$0xff]
    %v182 = vld [vmem:[#allocation6 + $0x78] sm:$0xff]
    %v183 = vld [vmem:[#allocation6 + $0x80] sm:$0xff]
    %v184 = vld [vmem:[#allocation6 + $0x88] sm:$0xff]
    %v185 = vld [vmem:[#allocation6 + $0x90] sm:$0xff]
    %v186 = vld [vmem:[#allocation6 + $0x98] sm:$0xff]
    %v187 = vld [vmem:[#allocation6 + $0xa0] sm:$0xff]
    %v188 = vld [vmem:[#allocation6 + $0xa8] sm:$0xff]
    %v189 = vld [vmem:[#allocation6 + $0xb0] sm:$0xff]
    %v190 = vld [vmem:[#allocation6 + $0xb8] sm:$0xff]
    %v191 = vld [vmem:[#allocation6 + $0xc0] sm:$0xff]
    %v192 = vld [vmem:[#allocation6 + $0xc8] sm:$0xff]
    %v193 = vld [vmem:[#allocation6 + $0xd0] sm:$0xff]
    %v194 = vld [vmem:[#allocation6 + $0xd8] sm:$0xff]
    %v195 = vld [vmem:[#allocation6 + $0xe0] sm:$0xff]
    %v196 = vld [vmem:[#allocation6 + $0xe8] sm:$0xff]
    %v197 = vld [vmem:[#allocation6 + $0xf0] sm:$0xff]
    %v198 = vld [vmem:[#allocation6 + $0xf8] sm:$0xff]
    %v199 = vld [vmem:[#allocation6 + $0x100] sm:$0xff]
    %v200 = vld [vmem:[#allocation6 + $0x108] sm:$0xff]
    %v201 = vld [vmem:[#allocation6 + $0x110] sm:$0xff]
    %v202 = vld [vmem:[#allocation6 + $0x118] sm:$0xff]
    %v203 = vld [vmem:[#allocation6 + $0x120] sm:$0xff]
    %v204 = vld [vmem:[#allocation6 + $0x128] sm:$0xff]
    %v205 = vld [vmem:[#allocation6 + $0x130] sm:$0xff]
    %v206 = vld [vmem:[#allocation6 + $0x138] sm:$0xff]
    %v207 = vld [vmem:[#allocation6 + $0x140] sm:$0xff]
    %v208 = vld [vmem:[#allocation6 + $0x148] sm:$0xff]
    %v209 = vld [vmem:[#allocation6 + $0x150] sm:$0xff]
    %v210 = vld [vmem:[#allocation6 + $0x158] sm:$0xff]
    %v211 = vld [vmem:[#allocation6 + $0x160] sm:$0xff]
    %v212 = vld [vmem:[#allocation6 + $0x168] sm:$0xff]
    %v213 = vld [vmem:[#allocation6 + $0x170] sm:$0xff]
    %v214 = vld [vmem:[#allocation6 + $0x178] sm:$0xff]
    %v215 = vld [vmem:[%s5] sm:$0x7]
    %v216 = vld [vmem:[#allocation2] sm:$0x3]
    %s217 = scalar_lea.vmem [#allocation2], 2
    %v218 = vld [vmem:[%s217] sm:$0x3]
    %s219 = smul.u32 0, 8
    %p220 = scmp.lt.s32.totalorder %s219, 8
    %v221 = vld [vmem:[%s0] sm:$0x3f]
    %222 = vmatpush.msra.mxu0 %v112
    %223 = vmatpush.msra.mxu0 %v109
    %224 = vmatpush.msra.mxu0 %v106
    %225 = vmatpush.msra.mxu0 %v103
    %226 = vmatpush.msra.mxu0 %v100
    %227 = vmatpush.msra.mxu0 %v97
    %228 = vmatpush.msra.mxu0 %v94
    %229 = vmatpush.msra.mxu0 %v91
    %230 = vmatpush.msra.mxu0 %v88
    %231 = vmatpush.msra.mxu0 %v85
    %232 = vmatpush.msra.mxu0 %v82
    %233 = vmatpush.msra.mxu0 %v79
    %234 = vmatpush.msra.mxu0 %v76
    %235 = vmatpush.msra.mxu0 %v73
    %236 = vmatpush.msra.mxu0 %v70
    %237 = vmatpush.msra.mxu0 %v67
    %238 = vmatmul.f32.gmra.mxu0 %v216
    %v239 = vpop.f32.mrf.mxu0
    %v240 = vadd.f32 0.0, %v239
    %241 = vdwg.mxu0
    %242 = vmatpush.msra.mxu0 %v113
    %243 = vmatpush.msra.mxu0 %v110
    %244 = vmatpush.msra.mxu0 %v107
    %245 = vmatpush.msra.mxu0 %v104
    %246 = vmatpush.msra.mxu0 %v101
    %247 = vmatpush.msra.mxu0 %v98
    %248 = vmatpush.msra.mxu0 %v95
    %249 = vmatpush.msra.mxu0 %v92
    %250 = vmatpush.msra.mxu0 %v89
    %251 = vmatpush.msra.mxu0 %v86
    %252 = vmatpush.msra.mxu0 %v83
    %253 = vmatpush.msra.mxu0 %v80
    %254 = vmatpush.msra.mxu0 %v77
    %255 = vmatpush.msra.mxu0 %v74
    %256 = vmatpush.msra.mxu0 %v71
    %257 = vmatpush.msra.mxu0 %v68
    %258 = vmatmul.f32.gmra.mxu0 %v216
    %v259 = vpop.f32.mrf.mxu0
    %v260 = vadd.f32 0.0, %v259
    %261 = vdwg.mxu0
    %262 = vmatpush.msra.mxu0 %v114
    %263 = vmatpush.msra.mxu0 %v111
    %264 = vmatpush.msra.mxu0 %v108
    %265 = vmatpush.msra.mxu0 %v105
    %266 = vmatpush.msra.mxu0 %v102
    %267 = vmatpush.msra.mxu0 %v99
    %268 = vmatpush.msra.mxu0 %v96
    %269 = vmatpush.msra.mxu0 %v93
    %270 = vmatpush.msra.mxu0 %v90
    %271 = vmatpush.msra.mxu0 %v87
    %272 = vmatpush.msra.mxu0 %v84
    %273 = vmatpush.msra.mxu0 %v81
    %274 = vmatpush.msra.mxu0 %v78
    %275 = vmatpush.msra.mxu0 %v75
    %276 = vmatpush.msra.mxu0 %v72
    %277 = vmatpush.msra.mxu0 %v69
    %278 = vmatmul.f32.gmra.mxu0 %v216
    %v279 = vpop.f32.mrf.mxu0
    %v280 = vadd.f32 0.0, %v279
    %281 = vdwg.mxu0
    %v282 = vadd.f32 %v221, %v240
    %v283 = vxor.u32 %v282, 2147483648
    %v284 = vmul.f32 %v283, 1.442695
    %v285 = vpow.pop %v284
    %v286 = vadd.f32 %v285, 1.0
    %v287 = vrcp.pop %v286
    %v288 = vmul.f32 %v286, %v287
    %v289 = vsub.f32 1.0, %v288
    %v290 = vmul.f32 %v287, %v289
    %v291 = vadd.f32 %v287, %v290
    %vm292 = vweird.f32 %v286
    %vm293 = vweird.f32 %v287
    %vm294 = vmor %vm292, %vm293
    %v295 = vsel %vm294, %v287, %v291
    %v296 = vand.u32 2147483647, %v286
    %vm297 = vcmp.eq.f32.partialorder %v296, 8.507059e+37
    %v298 = vand.u32 %v286, 2147483648
    %v299 = vor.u32 1.1754944e-38, %v298
    %v300 = vsel %vm297, %v299, %v295
    %v301 = vmul.f32 1.0, %v300
    %v303 = vrot.slane %v221, 2
    %v305 = vadd.f32 %v303, %v260
    %v306 = vxor.u32 %v305, 2147483648
    %v307 = vmul.f32 %v306, 1.442695
    %v308 = vpow.pop %v307
    %v309 = vadd.f32 %v308, 1.0
    %v310 = vrcp.pop %v309
    %v311 = vmul.f32 %v309, %v310
    %v312 = vsub.f32 1.0, %v311
    %v313 = vmul.f32 %v310, %v312
    %v314 = vadd.f32 %v310, %v313
    %vm315 = vweird.f32 %v309
    %vm316 = vweird.f32 %v310
    %vm317 = vmor %vm315, %vm316
    %v318 = vsel %vm317, %v310, %v314
    %v319 = vand.u32 2147483647, %v309
    %vm320 = vcmp.eq.f32.partialorder %v319, 8.507059e+37
    %v321 = vand.u32 %v309, 2147483648
    %v322 = vor.u32 1.1754944e-38, %v321
    %v323 = vsel %vm320, %v322, %v318
    %v324 = vmul.f32 1.0, %v323
    %v326 = vperm.slane %v164, 0
    %v328 = vadd.f32 %v280, %v326
    %v329 = vmul.f32 %v301, %v328
    %v330 = vrot.slane %v221, 4
    %v332 = vadd.f32 %v330, %v329
    %v333 = vtanh.pop %v332
    %v334 = vsub.f32 1.0, %v324
    %v335 = vmul.f32 %v334, %v333
    %v336 = vmul.f32 %v324, %v216
    %v337 = vadd.f32 %v335, %v336
    %s338 = scalar_select %p220, 1, 0
    %v339 = vstv %s338
    %vm340 = vcmp.eq.s32.totalorder %v339, 1
    %v341 = vsel %vm340, %v337, %v216
    %v343 = vperm.slane %v215, 0
    %v344 = vperm.slane %v215, 1
    %v345 = vperm.slane %v215, 2
    %349 = vmatpush.msra.mxu0 %v212
    %350 = vmatpush.msra.mxu0 %v209
    %351 = vmatpush.msra.mxu0 %v206
    %352 = vmatpush.msra.mxu0 %v203
    %353 = vmatpush.msra.mxu0 %v200
    %354 = vmatpush.msra.mxu0 %v197
    %355 = vmatpush.msra.mxu0 %v194
    %356 = vmatpush.msra.mxu0 %v191
    %357 = vmatpush.msra.mxu0 %v188
    %358 = vmatpush.msra.mxu0 %v185
    %359 = vmatpush.msra.mxu0 %v182
    %360 = vmatpush.msra.mxu0 %v179
    %361 = vmatpush.msra.mxu0 %v176
    %362 = vmatpush.msra.mxu0 %v173
    %363 = vmatpush.msra.mxu0 %v170
    %364 = vmatpush.msra.mxu0 %v167
    %365 = vmatmul.f32.gmra.mxu0 %v341
    %v366 = vpop.f32.mrf.mxu0
    %v367 = vadd.f32 %v343, %v366
    %368 = vdwg.mxu0
    %369 = vmatpush.msra.mxu0 %v213
    %370 = vmatpush.msra.mxu0 %v210
    %371 = vmatpush.msra.mxu0 %v207
    %372 = vmatpush.msra.mxu0 %v204
    %373 = vmatpush.msra.mxu0 %v201
    %374 = vmatpush.msra.mxu0 %v198
    %375 = vmatpush.msra.mxu0 %v195
    %376 = vmatpush.msra.mxu0 %v192
    %377 = vmatpush.msra.mxu0 %v189
    %378 = vmatpush.msra.mxu0 %v186
    %379 = vmatpush.msra.mxu0 %v183
    %380 = vmatpush.msra.mxu0 %v180
    %381 = vmatpush.msra.mxu0 %v177
    %382 = vmatpush.msra.mxu0 %v174
    %383 = vmatpush.msra.mxu0 %v171
    %384 = vmatpush.msra.mxu0 %v168
    %385 = vmatmul.f32.gmra.mxu0 %v341
    %v386 = vpop.f32.mrf.mxu0
    %v387 = vadd.f32 %v344, %v386
    %388 = vdwg.mxu0
    %389 = vmatpush.msra.mxu0 %v214
    %390 = vmatpush.msra.mxu0 %v211
    %391 = vmatpush.msra.mxu0 %v208
    %392 = vmatpush.msra.mxu0 %v205
    %393 = vmatpush.msra.mxu0 %v202
    %394 = vmatpush.msra.mxu0 %v199
    %395 = vmatpush.msra.mxu0 %v196
    %396 = vmatpush.msra.mxu0 %v193
    %397 = vmatpush.msra.mxu0 %v190
    %398 = vmatpush.msra.mxu0 %v187
    %399 = vmatpush.msra.mxu0 %v184
    %400 = vmatpush.msra.mxu0 %v181
    %401 = vmatpush.msra.mxu0 %v178
    %402 = vmatpush.msra.mxu0 %v175
    %403 = vmatpush.msra.mxu0 %v172
    %404 = vmatpush.msra.mxu0 %v169
    %405 = vmatmul.f32.gmra.mxu0 %v341
    %v406 = vpop.f32.mrf.mxu0
    %v407 = vadd.f32 %v345, %v406
    %408 = vdwg.mxu0
    %409 = vmatpush.msra.mxu0 %v161
    %410 = vmatpush.msra.mxu0 %v158
    %411 = vmatpush.msra.mxu0 %v155
    %412 = vmatpush.msra.mxu0 %v152
    %413 = vmatpush.msra.mxu0 %v149
    %414 = vmatpush.msra.mxu0 %v146
    %415 = vmatpush.msra.mxu0 %v143
    %416 = vmatpush.msra.mxu0 %v140
    %417 = vmatpush.msra.mxu0 %v137
    %418 = vmatpush.msra.mxu0 %v134
    %419 = vmatpush.msra.mxu0 %v131
    %420 = vmatpush.msra.mxu0 %v128
    %421 = vmatpush.msra.mxu0 %v125
    %422 = vmatpush.msra.mxu0 %v122
    %423 = vmatpush.msra.mxu0 %v119
    %424 = vmatpush.msra.mxu0 %v116
    %425 = vmatmul.f32.gmra.mxu0 %v218
    %v426 = vpop.f32.mrf.mxu0
    %v427 = vadd.f32 0.0, %v426
    %428 = vdwg.mxu0
    %429 = vmatpush.msra.mxu0 %v162
    %430 = vmatpush.msra.mxu0 %v159
    %431 = vmatpush.msra.mxu0 %v156
    %432 = vmatpush.msra.mxu0 %v153
    %433 = vmatpush.msra.mxu0 %v150
    %434 = vmatpush.msra.mxu0 %v147
    %435 = vmatpush.msra.mxu0 %v144
    %436 = vmatpush.msra.mxu0 %v141
    %437 = vmatpush.msra.mxu0 %v138
    %438 = vmatpush.msra.mxu0 %v135
    %439 = vmatpush.msra.mxu0 %v132
    %440 = vmatpush.msra.mxu0 %v129
    %441 = vmatpush.msra.mxu0 %v126
    %442 = vmatpush.msra.mxu0 %v123
    %443 = vmatpush.msra.mxu0 %v120
    %444 = vmatpush.msra.mxu0 %v117
    %445 = vmatmul.f32.gmra.mxu0 %v218
    %v446 = vpop.f32.mrf.mxu0
    %v447 = vadd.f32 0.0, %v446
    %448 = vdwg.mxu0
    %449 = vmatpush.msra.mxu0 %v163
    %450 = vmatpush.msra.mxu0 %v160
    %451 = vmatpush.msra.mxu0 %v157
    %452 = vmatpush.msra.mxu0 %v154
    %453 = vmatpush.msra.mxu0 %v151
    %454 = vmatpush.msra.mxu0 %v148
    %455 = vmatpush.msra.mxu0 %v145
    %456 = vmatpush.msra.mxu0 %v142
    %457 = vmatpush.msra.mxu0 %v139
    %458 = vmatpush.msra.mxu0 %v136
    %459 = vmatpush.msra.mxu0 %v133
    %460 = vmatpush.msra.mxu0 %v130
    %461 = vmatpush.msra.mxu0 %v127
    %462 = vmatpush.msra.mxu0 %v124
    %463 = vmatpush.msra.mxu0 %v121
    %464 = vmatpush.msra.mxu0 %v118
    %465 = vmatmul.f32.gmra.mxu0 %v218
    %v466 = vpop.f32.mrf.mxu0
    %v467 = vadd.f32 0.0, %v466
    %468 = vdwg.mxu0
    %v469 = vadd.f32 %v367, %v427
    %v470 = vxor.u32 %v469, 2147483648
    %v471 = vmul.f32 %v470, 1.442695
    %v472 = vpow.pop %v471
    %v473 = vadd.f32 %v472, 1.0
    %v474 = vrcp.pop %v473
    %v475 = vmul.f32 %v473, %v474
    %v476 = vsub.f32 1.0, %v475
    %v477 = vmul.f32 %v474, %v476
    %v478 = vadd.f32 %v474, %v477
    %vm479 = vweird.f32 %v473
    %vm480 = vweird.f32 %v474
    %vm481 = vmor %vm479, %vm480
    %v482 = vsel %vm481, %v474, %v478
    %v483 = vand.u32 2147483647, %v473
    %vm484 = vcmp.eq.f32.partialorder %v483, 8.507059e+37
    %v485 = vand.u32 %v473, 2147483648
    %v486 = vor.u32 1.1754944e-38, %v485
    %v487 = vsel %vm484, %v486, %v482
    %v488 = vmul.f32 1.0, %v487
    %v489 = vadd.f32 %v387, %v447
    %v490 = vxor.u32 %v489, 2147483648
    %v491 = vmul.f32 %v490, 1.442695
    %v492 = vpow.pop %v491
    %v493 = vadd.f32 %v492, 1.0
    %v494 = vrcp.pop %v493
    %v495 = vmul.f32 %v493, %v494
    %v496 = vsub.f32 1.0, %v495
    %v497 = vmul.f32 %v494, %v496
    %v498 = vadd.f32 %v494, %v497
    %vm499 = vweird.f32 %v493
    %vm500 = vweird.f32 %v494
    %vm501 = vmor %vm499, %vm500
    %v502 = vsel %vm501, %v494, %v498
    %v503 = vand.u32 2147483647, %v493
    %vm504 = vcmp.eq.f32.partialorder %v503, 8.507059e+37
    %v505 = vand.u32 %v493, 2147483648
    %v506 = vor.u32 1.1754944e-38, %v505
    %v507 = vsel %vm504, %v506, %v502
    %v508 = vmul.f32 1.0, %v507
    %v510 = vperm.slane %v166, 0
    %v512 = vadd.f32 %v467, %v510
    %v513 = vmul.f32 %v488, %v512
    %v514 = vadd.f32 %v407, %v513
    %v515 = vtanh.pop %v514
    %v516 = vsub.f32 1.0, %v508
    %v517 = vmul.f32 %v516, %v515
    %v518 = vmul.f32 %v508, %v218
    %v519 = vadd.f32 %v517, %v518
    %v520 = vsel %vm340, %v519, %v218
    %521 = vst [vmem:[#allocation8] sm:$0x3] %v520
    %s522 = sadd.s32 %s219, 1
    %p523 = scmp.lt.s32.totalorder %s522, 8
    %s524 = scalar_lea.vmem %s0, 6
    %v525 = vld [vmem:[%s524] sm:$0x3f]
    %526 = vmatpush.msra.mxu0 %v112
    %527 = vmatpush.msra.mxu0 %v109
    %528 = vmatpush.msra.mxu0 %v106
    %529 = vmatpush.msra.mxu0 %v103
    %530 = vmatpush.msra.mxu0 %v100
    %531 = vmatpush.msra.mxu0 %v97
    %532 = vmatpush.msra.mxu0 %v94
    %533 = vmatpush.msra.mxu0 %v91
    %534 = vmatpush.msra.mxu0 %v88
    %535 = vmatpush.msra.mxu0 %v85
    %536 = vmatpush.msra.mxu0 %v82
    %537 = vmatpush.msra.mxu0 %v79
    %538 = vmatpush.msra.mxu0 %v76
    %539 = vmatpush.msra.mxu0 %v73
    %540 = vmatpush.msra.mxu0 %v70
    %541 = vmatpush.msra.mxu0 %v67
    %542 = vmatmul.f32.gmra.mxu0 %v341
    %v543 = vpop.f32.mrf.mxu0
    %v544 = vadd.f32 0.0, %v543
    %545 = vdwg.mxu0
    %546 = vmatpush.msra.mxu0 %v113
    %547 = vmatpush.msra.mxu0 %v110
    %548 = vmatpush.msra.mxu0 %v107
    %549 = vmatpush.msra.mxu0 %v104
    %550 = vmatpush.msra.mxu0 %v101
    %551 = vmatpush.msra.mxu0 %v98
    %552 = vmatpush.msra.mxu0 %v95
    %553 = vmatpush.msra.mxu0 %v92
    %554 = vmatpush.msra.mxu0 %v89
    %555 = vmatpush.msra.mxu0 %v86
    %556 = vmatpush.msra.mxu0 %v83
    %557 = vmatpush.msra.mxu0 %v80
    %558 = vmatpush.msra.mxu0 %v77
    %559 = vmatpush.msra.mxu0 %v74
    %560 = vmatpush.msra.mxu0 %v71
    %561 = vmatpush.msra.mxu0 %v68
    %562 = vmatmul.f32.gmra.mxu0 %v341
    %v563 = vpop.f32.mrf.mxu0
    %v564 = vadd.f32 0.0, %v563
    %565 = vdwg.mxu0
    %566 = vmatpush.msra.mxu0 %v114
    %567 = vmatpush.msra.mxu0 %v111
    %568 = vmatpush.msra.mxu0 %v108
    %569 = vmatpush.msra.mxu0 %v105
    %570 = vmatpush.msra.mxu0 %v102
    %571 = vmatpush.msra.mxu0 %v99
    %572 = vmatpush.msra.mxu0 %v96
    %573 = vmatpush.msra.mxu0 %v93
    %574 = vmatpush.msra.mxu0 %v90
    %575 = vmatpush.msra.mxu0 %v87
    %576 = vmatpush.msra.mxu0 %v84
    %577 = vmatpush.msra.mxu0 %v81
    %578 = vmatpush.msra.mxu0 %v78
    %579 = vmatpush.msra.mxu0 %v75
    %580 = vmatpush.msra.mxu0 %v72
    %581 = vmatpush.msra.mxu0 %v69
    %582 = vmatmul.f32.gmra.mxu0 %v341
    %v583 = vpop.f32.mrf.mxu0
    %v584 = vadd.f32 0.0, %v583
    %585 = vdwg.mxu0
    %v586 = vadd.f32 %v525, %v544
    %v587 = vxor.u32 %v586, 2147483648
    %v588 = vmul.f32 %v587, 1.442695
    %v589 = vpow.pop %v588
    %v590 = vadd.f32 %v589, 1.0
    %v591 = vrcp.pop %v590
    %v592 = vmul.f32 %v590, %v591
    %v593 = vsub.f32 1.0, %v592
    %v594 = vmul.f32 %v591, %v593
    %v595 = vadd.f32 %v591, %v594
    %vm596 = vweird.f32 %v590
    %vm597 = vweird.f32 %v591
    %vm598 = vmor %vm596, %vm597
    %v599 = vsel %vm598, %v591, %v595
    %v600 = vand.u32 2147483647, %v590
    %vm601 = vcmp.eq.f32.partialorder %v600, 8.507059e+37
    %v602 = vand.u32 %v590, 2147483648
    %v603 = vor.u32 1.1754944e-38, %v602
    %v604 = vsel %vm601, %v603, %v599
    %v605 = vmul.f32 1.0, %v604
    %v607 = vrot.slane %v525, 2
    %v609 = vadd.f32 %v607, %v564
    %v610 = vxor.u32 %v609, 2147483648
    %v611 = vmul.f32 %v610, 1.442695
    %v612 = vpow.pop %v611
    %v613 = vadd.f32 %v612, 1.0
    %v614 = vrcp.pop %v613
    %v615 = vmul.f32 %v613, %v614
    %v616 = vsub.f32 1.0, %v615
    %v617 = vmul.f32 %v614, %v616
    %v618 = vadd.f32 %v614, %v617
    %vm619 = vweird.f32 %v613
    %vm620 = vweird.f32 %v614
    %vm621 = vmor %vm619, %vm620
    %v622 = vsel %vm621, %v614, %v618
    %v623 = vand.u32 2147483647, %v613
    %vm624 = vcmp.eq.f32.partialorder %v623, 8.507059e+37
    %v625 = vand.u32 %v613, 2147483648
    %v626 = vor.u32 1.1754944e-38, %v625
    %v627 = vsel %vm624, %v626, %v622
    %v628 = vmul.f32 1.0, %v627
    %v629 = vadd.f32 %v584, %v326
    %v630 = vmul.f32 %v605, %v629
    %v631 = vrot.slane %v525, 4
    %v633 = vadd.f32 %v631, %v630
    %v634 = vtanh.pop %v633
    %v635 = vsub.f32 1.0, %v628
    %v636 = vmul.f32 %v635, %v634
    %v637 = vmul.f32 %v628, %v341
    %v638 = vadd.f32 %v636, %v637
    %s639 = scalar_select %p523, 1, 0
    %v640 = vstv %s639
    %vm641 = vcmp.eq.s32.totalorder %v640, 1
    %v642 = vsel %vm641, %v638, %v341
    %643 = vmatpush.msra.mxu0 %v212
    %644 = vmatpush.msra.mxu0 %v209
    %645 = vmatpush.msra.mxu0 %v206
    %646 = vmatpush.msra.mxu0 %v203
    %647 = vmatpush.msra.mxu0 %v200
    %648 = vmatpush.msra.mxu0 %v197
    %649 = vmatpush.msra.mxu0 %v194
    %650 = vmatpush.msra.mxu0 %v191
    %651 = vmatpush.msra.mxu0 %v188
    %652 = vmatpush.msra.mxu0 %v185
    %653 = vmatpush.msra.mxu0 %v182
    %654 = vmatpush.msra.mxu0 %v179
    %655 = vmatpush.msra.mxu0 %v176
    %656 = vmatpush.msra.mxu0 %v173
    %657 = vmatpush.msra.mxu0 %v170
    %658 = vmatpush.msra.mxu0 %v167
    %659 = vmatmul.f32.gmra.mxu0 %v642
    %v660 = vpop.f32.mrf.mxu0
    %v661 = vadd.f32 %v343, %v660
    %662 = vdwg.mxu0
    %663 = vmatpush.msra.mxu0 %v213
    %664 = vmatpush.msra.mxu0 %v210
    %665 = vmatpush.msra.mxu0 %v207
    %666 = vmatpush.msra.mxu0 %v204
    %667 = vmatpush.msra.mxu0 %v201
    %668 = vmatpush.msra.mxu0 %v198
    %669 = vmatpush.msra.mxu0 %v195
    %670 = vmatpush.msra.mxu0 %v192
    %671 = vmatpush.msra.mxu0 %v189
    %672 = vmatpush.msra.mxu0 %v186
    %673 = vmatpush.msra.mxu0 %v183
    %674 = vmatpush.msra.mxu0 %v180
    %675 = vmatpush.msra.mxu0 %v177
    %676 = vmatpush.msra.mxu0 %v174
    %677 = vmatpush.msra.mxu0 %v171
    %678 = vmatpush.msra.mxu0 %v168
    %679 = vmatmul.f32.gmra.mxu0 %v642
    %v680 = vpop.f32.mrf.mxu0
    %v681 = vadd.f32 %v344, %v680
    %682 = vdwg.mxu0
    %683 = vmatpush.msra.mxu0 %v214
    %684 = vmatpush.msra.mxu0 %v211
    %685 = vmatpush.msra.mxu0 %v208
    %686 = vmatpush.msra.mxu0 %v205
    %687 = vmatpush.msra.mxu0 %v202
    %688 = vmatpush.msra.mxu0 %v199
    %689 = vmatpush.msra.mxu0 %v196
    %690 = vmatpush.msra.mxu0 %v193
    %691 = vmatpush.msra.mxu0 %v190
    %692 = vmatpush.msra.mxu0 %v187
    %693 = vmatpush.msra.mxu0 %v184
    %694 = vmatpush.msra.mxu0 %v181
    %695 = vmatpush.msra.mxu0 %v178
    %696 = vmatpush.msra.mxu0 %v175
    %697 = vmatpush.msra.mxu0 %v172
    %698 = vmatpush.msra.mxu0 %v169
    %699 = vmatmul.f32.gmra.mxu0 %v642
    %v700 = vpop.f32.mrf.mxu0
    %v701 = vadd.f32 %v345, %v700
    %702 = vdwg.mxu0
    %703 = vmatpush.msra.mxu0 %v161
    %704 = vmatpush.msra.mxu0 %v158
    %705 = vmatpush.msra.mxu0 %v155
    %706 = vmatpush.msra.mxu0 %v152
    %707 = vmatpush.msra.mxu0 %v149
    %708 = vmatpush.msra.mxu0 %v146
    %709 = vmatpush.msra.mxu0 %v143
    %710 = vmatpush.msra.mxu0 %v140
    %711 = vmatpush.msra.mxu0 %v137
    %712 = vmatpush.msra.mxu0 %v134
    %713 = vmatpush.msra.mxu0 %v131
    %714 = vmatpush.msra.mxu0 %v128
    %715 = vmatpush.msra.mxu0 %v125
    %716 = vmatpush.msra.mxu0 %v122
    %717 = vmatpush.msra.mxu0 %v119
    %718 = vmatpush.msra.mxu0 %v116
    %719 = vmatmul.f32.gmra.mxu0 %v520
    %v720 = vpop.f32.mrf.mxu0
    %v721 = vadd.f32 0.0, %v720
    %722 = vdwg.mxu0
    %723 = vmatpush.msra.mxu0 %v162
    %724 = vmatpush.msra.mxu0 %v159
    %725 = vmatpush.msra.mxu0 %v156
    %726 = vmatpush.msra.mxu0 %v153
    %727 = vmatpush.msra.mxu0 %v150
    %728 = vmatpush.msra.mxu0 %v147
    %729 = vmatpush.msra.mxu0 %v144
    %730 = vmatpush.msra.mxu0 %v141
    %731 = vmatpush.msra.mxu0 %v138
    %732 = vmatpush.msra.mxu0 %v135
    %733 = vmatpush.msra.mxu0 %v132
    %734 = vmatpush.msra.mxu0 %v129
    %735 = vmatpush.msra.mxu0 %v126
    %736 = vmatpush.msra.mxu0 %v123
    %737 = vmatpush.msra.mxu0 %v120
    %738 = vmatpush.msra.mxu0 %v117
    %739 = vmatmul.f32.gmra.mxu0 %v520
    %v740 = vpop.f32.mrf.mxu0
    %v741 = vadd.f32 0.0, %v740
    %742 = vdwg.mxu0
    %743 = vmatpush.msra.mxu0 %v163
    %744 = vmatpush.msra.mxu0 %v160
    %745 = vmatpush.msra.mxu0 %v157
    %746 = vmatpush.msra.mxu0 %v154
    %747 = vmatpush.msra.mxu0 %v151
    %748 = vmatpush.msra.mxu0 %v148
    %749 = vmatpush.msra.mxu0 %v145
    %750 = vmatpush.msra.mxu0 %v142
    %751 = vmatpush.msra.mxu0 %v139
    %752 = vmatpush.msra.mxu0 %v136
    %753 = vmatpush.msra.mxu0 %v133
    %754 = vmatpush.msra.mxu0 %v130
    %755 = vmatpush.msra.mxu0 %v127
    %756 = vmatpush.msra.mxu0 %v124
    %757 = vmatpush.msra.mxu0 %v121
    %758 = vmatpush.msra.mxu0 %v118
    %759 = vmatmul.f32.gmra.mxu0 %v520
    %v760 = vpop.f32.mrf.mxu0
    %v761 = vadd.f32 0.0, %v760
    %762 = vdwg.mxu0
    %v763 = vadd.f32 %v661, %v721
    %v764 = vxor.u32 %v763, 2147483648
    %v765 = vmul.f32 %v764, 1.442695
    %v766 = vpow.pop %v765
    %v767 = vadd.f32 %v766, 1.0
    %v768 = vrcp.pop %v767
    %v769 = vmul.f32 %v767, %v768
    %v770 = vsub.f32 1.0, %v769
    %v771 = vmul.f32 %v768, %v770
    %v772 = vadd.f32 %v768, %v771
    %vm773 = vweird.f32 %v767
    %vm774 = vweird.f32 %v768
    %vm775 = vmor %vm773, %vm774
    %v776 = vsel %vm775, %v768, %v772
    %v777 = vand.u32 2147483647, %v767
    %vm778 = vcmp.eq.f32.partialorder %v777, 8.507059e+37
    %v779 = vand.u32 %v767, 2147483648
    %v780 = vor.u32 1.1754944e-38, %v779
    %v781 = vsel %vm778, %v780, %v776
    %v782 = vmul.f32 1.0, %v781
    %v783 = vadd.f32 %v681, %v741
    %v784 = vxor.u32 %v783, 2147483648
    %v785 = vmul.f32 %v784, 1.442695
    %v786 = vpow.pop %v785
    %v787 = vadd.f32 %v786, 1.0
    %v788 = vrcp.pop %v787
    %v789 = vmul.f32 %v787, %v788
    %v790 = vsub.f32 1.0, %v789
    %v791 = vmul.f32 %v788, %v790
    %v792 = vadd.f32 %v788, %v791
    %vm793 = vweird.f32 %v787
    %vm794 = vweird.f32 %v788
    %vm795 = vmor %vm793, %vm794
    %v796 = vsel %vm795, %v788, %v792
    %v797 = vand.u32 2147483647, %v787
    %vm798 = vcmp.eq.f32.partialorder %v797, 8.507059e+37
    %v799 = vand.u32 %v787, 2147483648
    %v800 = vor.u32 1.1754944e-38, %v799
    %v801 = vsel %vm798, %v800, %v796
    %v802 = vmul.f32 1.0, %v801
    %v803 = vadd.f32 %v761, %v510
    %v804 = vmul.f32 %v782, %v803
    %v805 = vadd.f32 %v701, %v804
    %v806 = vtanh.pop %v805
    %v807 = vsub.f32 1.0, %v802
    %v808 = vmul.f32 %v807, %v806
    %v809 = vmul.f32 %v802, %v520
    %v810 = vadd.f32 %v808, %v809
    %v811 = vsel %vm641, %v810, %v520
    %s812 = scalar_lea.vmem [#allocation8], 2
    %813 = vst [vmem:[%s812] sm:$0x3] %v811
    %s814 = sadd.s32 %s219, 2
    %p815 = scmp.lt.s32.totalorder %s814, 8
    %s816 = scalar_lea.vmem %s0, 12
    %v817 = vld [vmem:[%s816] sm:$0x3f]
    %818 = vmatpush.msra.mxu0 %v112
    %819 = vmatpush.msra.mxu0 %v109
    %820 = vmatpush.msra.mxu0 %v106
    %821 = vmatpush.msra.mxu0 %v103
    %822 = vmatpush.msra.mxu0 %v100
    %823 = vmatpush.msra.mxu0 %v97
    %824 = vmatpush.msra.mxu0 %v94
    %825 = vmatpush.msra.mxu0 %v91
    %826 = vmatpush.msra.mxu0 %v88
    %827 = vmatpush.msra.mxu0 %v85
    %828 = vmatpush.msra.mxu0 %v82
    %829 = vmatpush.msra.mxu0 %v79
    %830 = vmatpush.msra.mxu0 %v76
    %831 = vmatpush.msra.mxu0 %v73
    %832 = vmatpush.msra.mxu0 %v70
    %833 = vmatpush.msra.mxu0 %v67
    %834 = vmatmul.f32.gmra.mxu0 %v642
    %v835 = vpop.f32.mrf.mxu0
    %v836 = vadd.f32 0.0, %v835
    %837 = vdwg.mxu0
    %838 = vmatpush.msra.mxu0 %v113
    %839 = vmatpush.msra.mxu0 %v110
    %840 = vmatpush.msra.mxu0 %v107
    %841 = vmatpush.msra.mxu0 %v104
    %842 = vmatpush.msra.mxu0 %v101
    %843 = vmatpush.msra.mxu0 %v98
    %844 = vmatpush.msra.mxu0 %v95
    %845 = vmatpush.msra.mxu0 %v92
    %846 = vmatpush.msra.mxu0 %v89
    %847 = vmatpush.msra.mxu0 %v86
    %848 = vmatpush.msra.mxu0 %v83
    %849 = vmatpush.msra.mxu0 %v80
    %850 = vmatpush.msra.mxu0 %v77
    %851 = vmatpush.msra.mxu0 %v74
    %852 = vmatpush.msra.mxu0 %v71
    %853 = vmatpush.msra.mxu0 %v68
    %854 = vmatmul.f32.gmra.mxu0 %v642
    %v855 = vpop.f32.mrf.mxu0
    %v856 = vadd.f32 0.0, %v855
    %857 = vdwg.mxu0
    %858 = vmatpush.msra.mxu0 %v114
    %859 = vmatpush.msra.mxu0 %v111
    %860 = vmatpush.msra.mxu0 %v108
    %861 = vmatpush.msra.mxu0 %v105
    %862 = vmatpush.msra.mxu0 %v102
    %863 = vmatpush.msra.mxu0 %v99
    %864 = vmatpush.msra.mxu0 %v96
    %865 = vmatpush.msra.mxu0 %v93
    %866 = vmatpush.msra.mxu0 %v90
    %867 = vmatpush.msra.mxu0 %v87
    %868 = vmatpush.msra.mxu0 %v84
    %869 = vmatpush.msra.mxu0 %v81
    %870 = vmatpush.msra.mxu0 %v78
    %871 = vmatpush.msra.mxu0 %v75
    %872 = vmatpush.msra.mxu0 %v72
    %873 = vmatpush.msra.mxu0 %v69
    %874 = vmatmul.f32.gmra.mxu0 %v642
    %v875 = vpop.f32.mrf.mxu0
    %v876 = vadd.f32 0.0, %v875
    %877 = vdwg.mxu0
    %v878 = vadd.f32 %v817, %v836
    %v879 = vxor.u32 %v878, 2147483648
    %v880 = vmul.f32 %v879, 1.442695
    %v881 = vpow.pop %v880
    %v882 = vadd.f32 %v881, 1.0
    %v883 = vrcp.pop %v882
    %v884 = vmul.f32 %v882, %v883
    %v885 = vsub.f32 1.0, %v884
    %v886 = vmul.f32 %v883, %v885
    %v887 = vadd.f32 %v883, %v886
    %vm888 = vweird.f32 %v882
    %vm889 = vweird.f32 %v883
    %vm890 = vmor %vm888, %vm889
    %v891 = vsel %vm890, %v883, %v887
    %v892 = vand.u32 2147483647, %v882
    %vm893 = vcmp.eq.f32.partialorder %v892, 8.507059e+37
    %v894 = vand.u32 %v882, 2147483648
    %v895 = vor.u32 1.1754944e-38, %v894
    %v896 = vsel %vm893, %v895, %v891
    %v897 = vmul.f32 1.0, %v896
    %v899 = vrot.slane %v817, 2
    %v901 = vadd.f32 %v899, %v856
    %v902 = vxor.u32 %v901, 2147483648
    %v903 = vmul.f32 %v902, 1.442695
    %v904 = vpow.pop %v903
    %v905 = vadd.f32 %v904, 1.0
    %v906 = vrcp.pop %v905
    %v907 = vmul.f32 %v905, %v906
    %v908 = vsub.f32 1.0, %v907
    %v909 = vmul.f32 %v906, %v908
    %v910 = vadd.f32 %v906, %v909
    %vm911 = vweird.f32 %v905
    %vm912 = vweird.f32 %v906
    %vm913 = vmor %vm911, %vm912
    %v914 = vsel %vm913, %v906, %v910
    %v915 = vand.u32 2147483647, %v905
    %vm916 = vcmp.eq.f32.partialorder %v915, 8.507059e+37
    %v917 = vand.u32 %v905, 2147483648
    %v918 = vor.u32 1.1754944e-38, %v917
    %v919 = vsel %vm916, %v918, %v914
    %v920 = vmul.f32 1.0, %v919
    %v921 = vadd.f32 %v876, %v326
    %v922 = vmul.f32 %v897, %v921
    %v923 = vrot.slane %v817, 4
    %v925 = vadd.f32 %v923, %v922
    %v926 = vtanh.pop %v925
    %v927 = vsub.f32 1.0, %v920
    %v928 = vmul.f32 %v927, %v926
    %v929 = vmul.f32 %v920, %v642
    %v930 = vadd.f32 %v928, %v929
    %s931 = scalar_select %p815, 1, 0
    %v932 = vstv %s931
    %vm933 = vcmp.eq.s32.totalorder %v932, 1
    %v934 = vsel %vm933, %v930, %v642
    %935 = vmatpush.msra.mxu0 %v212
    %936 = vmatpush.msra.mxu0 %v209
    %937 = vmatpush.msra.mxu0 %v206
    %938 = vmatpush.msra.mxu0 %v203
    %939 = vmatpush.msra.mxu0 %v200
    %940 = vmatpush.msra.mxu0 %v197
    %941 = vmatpush.msra.mxu0 %v194
    %942 = vmatpush.msra.mxu0 %v191
    %943 = vmatpush.msra.mxu0 %v188
    %944 = vmatpush.msra.mxu0 %v185
    %945 = vmatpush.msra.mxu0 %v182
    %946 = vmatpush.msra.mxu0 %v179
    %947 = vmatpush.msra.mxu0 %v176
    %948 = vmatpush.msra.mxu0 %v173
    %949 = vmatpush.msra.mxu0 %v170
    %950 = vmatpush.msra.mxu0 %v167
    %951 = vmatmul.f32.gmra.mxu0 %v934
    %v952 = vpop.f32.mrf.mxu0
    %v953 = vadd.f32 %v343, %v952
    %954 = vdwg.mxu0
    %955 = vmatpush.msra.mxu0 %v213
    %956 = vmatpush.msra.mxu0 %v210
    %957 = vmatpush.msra.mxu0 %v207
    %958 = vmatpush.msra.mxu0 %v204
    %959 = vmatpush.msra.mxu0 %v201
    %960 = vmatpush.msra.mxu0 %v198
    %961 = vmatpush.msra.mxu0 %v195
    %962 = vmatpush.msra.mxu0 %v192
    %963 = vmatpush.msra.mxu0 %v189
    %964 = vmatpush.msra.mxu0 %v186
    %965 = vmatpush.msra.mxu0 %v183
    %966 = vmatpush.msra.mxu0 %v180
    %967 = vmatpush.msra.mxu0 %v177
    %968 = vmatpush.msra.mxu0 %v174
    %969 = vmatpush.msra.mxu0 %v171
    %970 = vmatpush.msra.mxu0 %v168
    %971 = vmatmul.f32.gmra.mxu0 %v934
    %v972 = vpop.f32.mrf.mxu0
    %v973 = vadd.f32 %v344, %v972
    %974 = vdwg.mxu0
    %975 = vmatpush.msra.mxu0 %v214
    %976 = vmatpush.msra.mxu0 %v211
    %977 = vmatpush.msra.mxu0 %v208
    %978 = vmatpush.msra.mxu0 %v205
    %979 = vmatpush.msra.mxu0 %v202
    %980 = vmatpush.msra.mxu0 %v199
    %981 = vmatpush.msra.mxu0 %v196
    %982 = vmatpush.msra.mxu0 %v193
    %983 = vmatpush.msra.mxu0 %v190
    %984 = vmatpush.msra.mxu0 %v187
    %985 = vmatpush.msra.mxu0 %v184
    %986 = vmatpush.msra.mxu0 %v181
    %987 = vmatpush.msra.mxu0 %v178
    %988 = vmatpush.msra.mxu0 %v175
    %989 = vmatpush.msra.mxu0 %v172
    %990 = vmatpush.msra.mxu0 %v169
    %991 = vmatmul.f32.gmra.mxu0 %v934
    %v992 = vpop.f32.mrf.mxu0
    %v993 = vadd.f32 %v345, %v992
    %994 = vdwg.mxu0
    %995 = vmatpush.msra.mxu0 %v161
    %996 = vmatpush.msra.mxu0 %v158
    %997 = vmatpush.msra.mxu0 %v155
    %998 = vmatpush.msra.mxu0 %v152
    %999 = vmatpush.msra.mxu0 %v149
    %1000 = vmatpush.msra.mxu0 %v146
    %1001 = vmatpush.msra.mxu0 %v143
    %1002 = vmatpush.msra.mxu0 %v140
    %1003 = vmatpush.msra.mxu0 %v137
    %1004 = vmatpush.msra.mxu0 %v134
    %1005 = vmatpush.msra.mxu0 %v131
    %1006 = vmatpush.msra.mxu0 %v128
    %1007 = vmatpush.msra.mxu0 %v125
    %1008 = vmatpush.msra.mxu0 %v122
    %1009 = vmatpush.msra.mxu0 %v119
    %1010 = vmatpush.msra.mxu0 %v116
    %1011 = vmatmul.f32.gmra.mxu0 %v811
    %v1012 = vpop.f32.mrf.mxu0
    %v1013 = vadd.f32 0.0, %v1012
    %1014 = vdwg.mxu0
    %1015 = vmatpush.msra.mxu0 %v162
    %1016 = vmatpush.msra.mxu0 %v159
    %1017 = vmatpush.msra.mxu0 %v156
    %1018 = vmatpush.msra.mxu0 %v153
    %1019 = vmatpush.msra.mxu0 %v150
    %1020 = vmatpush.msra.mxu0 %v147
    %1021 = vmatpush.msra.mxu0 %v144
    %1022 = vmatpush.msra.mxu0 %v141
    %1023 = vmatpush.msra.mxu0 %v138
    %1024 = vmatpush.msra.mxu0 %v135
    %1025 = vmatpush.msra.mxu0 %v132
    %1026 = vmatpush.msra.mxu0 %v129
    %1027 = vmatpush.msra.mxu0 %v126
    %1028 = vmatpush.msra.mxu0 %v123
    %1029 = vmatpush.msra.mxu0 %v120
    %1030 = vmatpush.msra.mxu0 %v117
    %1031 = vmatmul.f32.gmra.mxu0 %v811
    %v1032 = vpop.f32.mrf.mxu0
    %v1033 = vadd.f32 0.0, %v1032
    %1034 = vdwg.mxu0
    %1035 = vmatpush.msra.mxu0 %v163
    %1036 = vmatpush.msra.mxu0 %v160
    %1037 = vmatpush.msra.mxu0 %v157
    %1038 = vmatpush.msra.mxu0 %v154
    %1039 = vmatpush.msra.mxu0 %v151
    %1040 = vmatpush.msra.mxu0 %v148
    %1041 = vmatpush.msra.mxu0 %v145
    %1042 = vmatpush.msra.mxu0 %v142
    %1043 = vmatpush.msra.mxu0 %v139
    %1044 = vmatpush.msra.mxu0 %v136
    %1045 = vmatpush.msra.mxu0 %v133
    %1046 = vmatpush.msra.mxu0 %v130
    %1047 = vmatpush.msra.mxu0 %v127
    %1048 = vmatpush.msra.mxu0 %v124
    %1049 = vmatpush.msra.mxu0 %v121
    %1050 = vmatpush.msra.mxu0 %v118
    %1051 = vmatmul.f32.gmra.mxu0 %v811
    %v1052 = vpop.f32.mrf.mxu0
    %v1053 = vadd.f32 0.0, %v1052
    %1054 = vdwg.mxu0
    %v1055 = vadd.f32 %v953, %v1013
    %v1056 = vxor.u32 %v1055, 2147483648
    %v1057 = vmul.f32 %v1056, 1.442695
    %v1058 = vpow.pop %v1057
    %v1059 = vadd.f32 %v1058, 1.0
    %v1060 = vrcp.pop %v1059
    %v1061 = vmul.f32 %v1059, %v1060
    %v1062 = vsub.f32 1.0, %v1061
    %v1063 = vmul.f32 %v1060, %v1062
    %v1064 = vadd.f32 %v1060, %v1063
    %vm1065 = vweird.f32 %v1059
    %vm1066 = vweird.f32 %v1060
    %vm1067 = vmor %vm1065, %vm1066
    %v1068 = vsel %vm1067, %v1060, %v1064
    %v1069 = vand.u32 2147483647, %v1059
    %vm1070 = vcmp.eq.f32.partialorder %v1069, 8.507059e+37
    %v1071 = vand.u32 %v1059, 2147483648
    %v1072 = vor.u32 1.1754944e-38, %v1071
    %v1073 = vsel %vm1070, %v1072, %v1068
    %v1074 = vmul.f32 1.0, %v1073
    %v1075 = vadd.f32 %v973, %v1033
    %v1076 = vxor.u32 %v1075, 2147483648
    %v1077 = vmul.f32 %v1076, 1.442695
    %v1078 = vpow.pop %v1077
    %v1079 = vadd.f32 %v1078, 1.0
    %v1080 = vrcp.pop %v1079
    %v1081 = vmul.f32 %v1079, %v1080
    %v1082 = vsub.f32 1.0, %v1081
    %v1083 = vmul.f32 %v1080, %v1082
    %v1084 = vadd.f32 %v1080, %v1083
    %vm1085 = vweird.f32 %v1079
    %vm1086 = vweird.f32 %v1080
    %vm1087 = vmor %vm1085, %vm1086
    %v1088 = vsel %vm1087, %v1080, %v1084
    %v1089 = vand.u32 2147483647, %v1079
    %vm1090 = vcmp.eq.f32.partialorder %v1089, 8.507059e+37
    %v1091 = vand.u32 %v1079, 2147483648
    %v1092 = vor.u32 1.1754944e-38, %v1091
    %v1093 = vsel %vm1090, %v1092, %v1088
    %v1094 = vmul.f32 1.0, %v1093
    %v1095 = vadd.f32 %v1053, %v510
    %v1096 = vmul.f32 %v1074, %v1095
    %v1097 = vadd.f32 %v993, %v1096
    %v1098 = vtanh.pop %v1097
    %v1099 = vsub.f32 1.0, %v1094
    %v1100 = vmul.f32 %v1099, %v1098
    %v1101 = vmul.f32 %v1094, %v811
    %v1102 = vadd.f32 %v1100, %v1101
    %v1103 = vsel %vm933, %v1102, %v811
    %s1104 = scalar_lea.vmem [#allocation8], 4
    %1105 = vst [vmem:[%s1104] sm:$0x3] %v1103
    %s1106 = sadd.s32 %s219, 3
    %p1107 = scmp.lt.s32.totalorder %s1106, 8
    %s1108 = scalar_lea.vmem %s0, 18
    %v1109 = vld [vmem:[%s1108] sm:$0x3f]
    %1110 = vmatpush.msra.mxu0 %v112
    %1111 = vmatpush.msra.mxu0 %v109
    %1112 = vmatpush.msra.mxu0 %v106
    %1113 = vmatpush.msra.mxu0 %v103
    %1114 = vmatpush.msra.mxu0 %v100
    %1115 = vmatpush.msra.mxu0 %v97
    %1116 = vmatpush.msra.mxu0 %v94
    %1117 = vmatpush.msra.mxu0 %v91
    %1118 = vmatpush.msra.mxu0 %v88
    %1119 = vmatpush.msra.mxu0 %v85
    %1120 = vmatpush.msra.mxu0 %v82
    %1121 = vmatpush.msra.mxu0 %v79
    %1122 = vmatpush.msra.mxu0 %v76
    %1123 = vmatpush.msra.mxu0 %v73
    %1124 = vmatpush.msra.mxu0 %v70
    %1125 = vmatpush.msra.mxu0 %v67
    %1126 = vmatmul.f32.gmra.mxu0 %v934
    %v1127 = vpop.f32.mrf.mxu0
    %v1128 = vadd.f32 0.0, %v1127
    %1129 = vdwg.mxu0
    %1130 = vmatpush.msra.mxu0 %v113
    %1131 = vmatpush.msra.mxu0 %v110
    %1132 = vmatpush.msra.mxu0 %v107
    %1133 = vmatpush.msra.mxu0 %v104
    %1134 = vmatpush.msra.mxu0 %v101
    %1135 = vmatpush.msra.mxu0 %v98
    %1136 = vmatpush.msra.mxu0 %v95
    %1137 = vmatpush.msra.mxu0 %v92
    %1138 = vmatpush.msra.mxu0 %v89
    %1139 = vmatpush.msra.mxu0 %v86
    %1140 = vmatpush.msra.mxu0 %v83
    %1141 = vmatpush.msra.mxu0 %v80
    %1142 = vmatpush.msra.mxu0 %v77
    %1143 = vmatpush.msra.mxu0 %v74
    %1144 = vmatpush.msra.mxu0 %v71
    %1145 = vmatpush.msra.mxu0 %v68
    %1146 = vmatmul.f32.gmra.mxu0 %v934
    %v1147 = vpop.f32.mrf.mxu0
    %v1148 = vadd.f32 0.0, %v1147
    %1149 = vdwg.mxu0
    %1150 = vmatpush.msra.mxu0 %v114
    %1151 = vmatpush.msra.mxu0 %v111
    %1152 = vmatpush.msra.mxu0 %v108
    %1153 = vmatpush.msra.mxu0 %v105
    %1154 = vmatpush.msra.mxu0 %v102
    %1155 = vmatpush.msra.mxu0 %v99
    %1156 = vmatpush.msra.mxu0 %v96
    %1157 = vmatpush.msra.mxu0 %v93
    %1158 = vmatpush.msra.mxu0 %v90
    %1159 = vmatpush.msra.mxu0 %v87
    %1160 = vmatpush.msra.mxu0 %v84
    %1161 = vmatpush.msra.mxu0 %v81
    %1162 = vmatpush.msra.mxu0 %v78
    %1163 = vmatpush.msra.mxu0 %v75
    %1164 = vmatpush.msra.mxu0 %v72
    %1165 = vmatpush.msra.mxu0 %v69
    %1166 = vmatmul.f32.gmra.mxu0 %v934
    %v1167 = vpop.f32.mrf.mxu0
    %v1168 = vadd.f32 0.0, %v1167
    %1169 = vdwg.mxu0
    %v1170 = vadd.f32 %v1109, %v1128
    %v1171 = vxor.u32 %v1170, 2147483648
    %v1172 = vmul.f32 %v1171, 1.442695
    %v1173 = vpow.pop %v1172
    %v1174 = vadd.f32 %v1173, 1.0
    %v1175 = vrcp.pop %v1174
    %v1176 = vmul.f32 %v1174, %v1175
    %v1177 = vsub.f32 1.0, %v1176
    %v1178 = vmul.f32 %v1175, %v1177
    %v1179 = vadd.f32 %v1175, %v1178
    %vm1180 = vweird.f32 %v1174
    %vm1181 = vweird.f32 %v1175
    %vm1182 = vmor %vm1180, %vm1181
    %v1183 = vsel %vm1182, %v1175, %v1179
    %v1184 = vand.u32 2147483647, %v1174
    %vm1185 = vcmp.eq.f32.partialorder %v1184, 8.507059e+37
    %v1186 = vand.u32 %v1174, 2147483648
    %v1187 = vor.u32 1.1754944e-38, %v1186
    %v1188 = vsel %vm1185, %v1187, %v1183
    %v1189 = vmul.f32 1.0, %v1188
    %v1191 = vrot.slane %v1109, 2
    %v1193 = vadd.f32 %v1191, %v1148
    %v1194 = vxor.u32 %v1193, 2147483648
    %v1195 = vmul.f32 %v1194, 1.442695
    %v1196 = vpow.pop %v1195
    %v1197 = vadd.f32 %v1196, 1.0
    %v1198 = vrcp.pop %v1197
    %v1199 = vmul.f32 %v1197, %v1198
    %v1200 = vsub.f32 1.0, %v1199
    %v1201 = vmul.f32 %v1198, %v1200
    %v1202 = vadd.f32 %v1198, %v1201
    %vm1203 = vweird.f32 %v1197
    %vm1204 = vweird.f32 %v1198
    %vm1205 = vmor %vm1203, %vm1204
    %v1206 = vsel %vm1205, %v1198, %v1202
    %v1207 = vand.u32 2147483647, %v1197
    %vm1208 = vcmp.eq.f32.partialorder %v1207, 8.507059e+37
    %v1209 = vand.u32 %v1197, 2147483648
    %v1210 = vor.u32 1.1754944e-38, %v1209
    %v1211 = vsel %vm1208, %v1210, %v1206
    %v1212 = vmul.f32 1.0, %v1211
    %v1213 = vadd.f32 %v1168, %v326
    %v1214 = vmul.f32 %v1189, %v1213
    %v1215 = vrot.slane %v1109, 4
    %v1217 = vadd.f32 %v1215, %v1214
    %v1218 = vtanh.pop %v1217
    %v1219 = vsub.f32 1.0, %v1212
    %v1220 = vmul.f32 %v1219, %v1218
    %v1221 = vmul.f32 %v1212, %v934
    %v1222 = vadd.f32 %v1220, %v1221
    %s1223 = scalar_select %p1107, 1, 0
    %v1224 = vstv %s1223
    %vm1225 = vcmp.eq.s32.totalorder %v1224, 1
    %v1226 = vsel %vm1225, %v1222, %v934
    %1227 = vmatpush.msra.mxu0 %v212
    %1228 = vmatpush.msra.mxu0 %v209
    %1229 = vmatpush.msra.mxu0 %v206
    %1230 = vmatpush.msra.mxu0 %v203
    %1231 = vmatpush.msra.mxu0 %v200
    %1232 = vmatpush.msra.mxu0 %v197
    %1233 = vmatpush.msra.mxu0 %v194
    %1234 = vmatpush.msra.mxu0 %v191
    %1235 = vmatpush.msra.mxu0 %v188
    %1236 = vmatpush.msra.mxu0 %v185
    %1237 = vmatpush.msra.mxu0 %v182
    %1238 = vmatpush.msra.mxu0 %v179
    %1239 = vmatpush.msra.mxu0 %v176
    %1240 = vmatpush.msra.mxu0 %v173
    %1241 = vmatpush.msra.mxu0 %v170
    %1242 = vmatpush.msra.mxu0 %v167
    %1243 = vmatmul.f32.gmra.mxu0 %v1226
    %v1244 = vpop.f32.mrf.mxu0
    %v1245 = vadd.f32 %v343, %v1244
    %1246 = vdwg.mxu0
    %1247 = vmatpush.msra.mxu0 %v213
    %1248 = vmatpush.msra.mxu0 %v210
    %1249 = vmatpush.msra.mxu0 %v207
    %1250 = vmatpush.msra.mxu0 %v204
    %1251 = vmatpush.msra.mxu0 %v201
    %1252 = vmatpush.msra.mxu0 %v198
    %1253 = vmatpush.msra.mxu0 %v195
    %1254 = vmatpush.msra.mxu0 %v192
    %1255 = vmatpush.msra.mxu0 %v189
    %1256 = vmatpush.msra.mxu0 %v186
    %1257 = vmatpush.msra.mxu0 %v183
    %1258 = vmatpush.msra.mxu0 %v180
    %1259 = vmatpush.msra.mxu0 %v177
    %1260 = vmatpush.msra.mxu0 %v174
    %1261 = vmatpush.msra.mxu0 %v171
    %1262 = vmatpush.msra.mxu0 %v168
    %1263 = vmatmul.f32.gmra.mxu0 %v1226
    %v1264 = vpop.f32.mrf.mxu0
    %v1265 = vadd.f32 %v344, %v1264
    %1266 = vdwg.mxu0
    %1267 = vmatpush.msra.mxu0 %v214
    %1268 = vmatpush.msra.mxu0 %v211
    %1269 = vmatpush.msra.mxu0 %v208
    %1270 = vmatpush.msra.mxu0 %v205
    %1271 = vmatpush.msra.mxu0 %v202
    %1272 = vmatpush.msra.mxu0 %v199
    %1273 = vmatpush.msra.mxu0 %v196
    %1274 = vmatpush.msra.mxu0 %v193
    %1275 = vmatpush.msra.mxu0 %v190
    %1276 = vmatpush.msra.mxu0 %v187
    %1277 = vmatpush.msra.mxu0 %v184
    %1278 = vmatpush.msra.mxu0 %v181
    %1279 = vmatpush.msra.mxu0 %v178
    %1280 = vmatpush.msra.mxu0 %v175
    %1281 = vmatpush.msra.mxu0 %v172
    %1282 = vmatpush.msra.mxu0 %v169
    %1283 = vmatmul.f32.gmra.mxu0 %v1226
    %v1284 = vpop.f32.mrf.mxu0
    %v1285 = vadd.f32 %v345, %v1284
    %1286 = vdwg.mxu0
    %1287 = vmatpush.msra.mxu0 %v161
    %1288 = vmatpush.msra.mxu0 %v158
    %1289 = vmatpush.msra.mxu0 %v155
    %1290 = vmatpush.msra.mxu0 %v152
    %1291 = vmatpush.msra.mxu0 %v149
    %1292 = vmatpush.msra.mxu0 %v146
    %1293 = vmatpush.msra.mxu0 %v143
    %1294 = vmatpush.msra.mxu0 %v140
    %1295 = vmatpush.msra.mxu0 %v137
    %1296 = vmatpush.msra.mxu0 %v134
    %1297 = vmatpush.msra.mxu0 %v131
    %1298 = vmatpush.msra.mxu0 %v128
    %1299 = vmatpush.msra.mxu0 %v125
    %1300 = vmatpush.msra.mxu0 %v122
    %1301 = vmatpush.msra.mxu0 %v119
    %1302 = vmatpush.msra.mxu0 %v116
    %1303 = vmatmul.f32.gmra.mxu0 %v1103
    %v1304 = vpop.f32.mrf.mxu0
    %v1305 = vadd.f32 0.0, %v1304
    %1306 = vdwg.mxu0
    %1307 = vmatpush.msra.mxu0 %v162
    %1308 = vmatpush.msra.mxu0 %v159
    %1309 = vmatpush.msra.mxu0 %v156
    %1310 = vmatpush.msra.mxu0 %v153
    %1311 = vmatpush.msra.mxu0 %v150
    %1312 = vmatpush.msra.mxu0 %v147
    %1313 = vmatpush.msra.mxu0 %v144
    %1314 = vmatpush.msra.mxu0 %v141
    %1315 = vmatpush.msra.mxu0 %v138
    %1316 = vmatpush.msra.mxu0 %v135
    %1317 = vmatpush.msra.mxu0 %v132
    %1318 = vmatpush.msra.mxu0 %v129
    %1319 = vmatpush.msra.mxu0 %v126
    %1320 = vmatpush.msra.mxu0 %v123
    %1321 = vmatpush.msra.mxu0 %v120
    %1322 = vmatpush.msra.mxu0 %v117
    %1323 = vmatmul.f32.gmra.mxu0 %v1103
    %v1324 = vpop.f32.mrf.mxu0
    %v1325 = vadd.f32 0.0, %v1324
    %1326 = vdwg.mxu0
    %1327 = vmatpush.msra.mxu0 %v163
    %1328 = vmatpush.msra.mxu0 %v160
    %1329 = vmatpush.msra.mxu0 %v157
    %1330 = vmatpush.msra.mxu0 %v154
    %1331 = vmatpush.msra.mxu0 %v151
    %1332 = vmatpush.msra.mxu0 %v148
    %1333 = vmatpush.msra.mxu0 %v145
    %1334 = vmatpush.msra.mxu0 %v142
    %1335 = vmatpush.msra.mxu0 %v139
    %1336 = vmatpush.msra.mxu0 %v136
    %1337 = vmatpush.msra.mxu0 %v133
    %1338 = vmatpush.msra.mxu0 %v130
    %1339 = vmatpush.msra.mxu0 %v127
    %1340 = vmatpush.msra.mxu0 %v124
    %1341 = vmatpush.msra.mxu0 %v121
    %1342 = vmatpush.msra.mxu0 %v118
    %1343 = vmatmul.f32.gmra.mxu0 %v1103
    %v1344 = vpop.f32.mrf.mxu0
    %v1345 = vadd.f32 0.0, %v1344
    %1346 = vdwg.mxu0
    %v1347 = vadd.f32 %v1245, %v1305
    %v1348 = vxor.u32 %v1347, 2147483648
    %v1349 = vmul.f32 %v1348, 1.442695
    %v1350 = vpow.pop %v1349
    %v1351 = vadd.f32 %v1350, 1.0
    %v1352 = vrcp.pop %v1351
    %v1353 = vmul.f32 %v1351, %v1352
    %v1354 = vsub.f32 1.0, %v1353
    %v1355 = vmul.f32 %v1352, %v1354
    %v1356 = vadd.f32 %v1352, %v1355
    %vm1357 = vweird.f32 %v1351
    %vm1358 = vweird.f32 %v1352
    %vm1359 = vmor %vm1357, %vm1358
    %v1360 = vsel %vm1359, %v1352, %v1356
    %v1361 = vand.u32 2147483647, %v1351
    %vm1362 = vcmp.eq.f32.partialorder %v1361, 8.507059e+37
    %v1363 = vand.u32 %v1351, 2147483648
    %v1364 = vor.u32 1.1754944e-38, %v1363
    %v1365 = vsel %vm1362, %v1364, %v1360
    %v1366 = vmul.f32 1.0, %v1365
    %v1367 = vadd.f32 %v1265, %v1325
    %v1368 = vxor.u32 %v1367, 2147483648
    %v1369 = vmul.f32 %v1368, 1.442695
    %v1370 = vpow.pop %v1369
    %v1371 = vadd.f32 %v1370, 1.0
    %v1372 = vrcp.pop %v1371
    %v1373 = vmul.f32 %v1371, %v1372
    %v1374 = vsub.f32 1.0, %v1373
    %v1375 = vmul.f32 %v1372, %v1374
    %v1376 = vadd.f32 %v1372, %v1375
    %vm1377 = vweird.f32 %v1371
    %vm1378 = vweird.f32 %v1372
    %vm1379 = vmor %vm1377, %vm1378
    %v1380 = vsel %vm1379, %v1372, %v1376
    %v1381 = vand.u32 2147483647, %v1371
    %vm1382 = vcmp.eq.f32.partialorder %v1381, 8.507059e+37
    %v1383 = vand.u32 %v1371, 2147483648
    %v1384 = vor.u32 1.1754944e-38, %v1383
    %v1385 = vsel %vm1382, %v1384, %v1380
    %v1386 = vmul.f32 1.0, %v1385
    %v1387 = vadd.f32 %v1345, %v510
    %v1388 = vmul.f32 %v1366, %v1387
    %v1389 = vadd.f32 %v1285, %v1388
    %v1390 = vtanh.pop %v1389
    %v1391 = vsub.f32 1.0, %v1386
    %v1392 = vmul.f32 %v1391, %v1390
    %v1393 = vmul.f32 %v1386, %v1103
    %v1394 = vadd.f32 %v1392, %v1393
    %v1395 = vsel %vm1225, %v1394, %v1103
    %s1396 = scalar_lea.vmem [#allocation8], 6
    %1397 = vst [vmem:[%s1396] sm:$0x3] %v1395
    %s1398 = sadd.s32 %s219, 4
    %p1399 = scmp.lt.s32.totalorder %s1398, 8
    %s1400 = scalar_lea.vmem %s0, 24
    %v1401 = vld [vmem:[%s1400] sm:$0x3f]
    %1402 = vmatpush.msra.mxu0 %v112
    %1403 = vmatpush.msra.mxu0 %v109
    %1404 = vmatpush.msra.mxu0 %v106
    %1405 = vmatpush.msra.mxu0 %v103
    %1406 = vmatpush.msra.mxu0 %v100
    %1407 = vmatpush.msra.mxu0 %v97
    %1408 = vmatpush.msra.mxu0 %v94
    %1409 = vmatpush.msra.mxu0 %v91
    %1410 = vmatpush.msra.mxu0 %v88
    %1411 = vmatpush.msra.mxu0 %v85
    %1412 = vmatpush.msra.mxu0 %v82
    %1413 = vmatpush.msra.mxu0 %v79
    %1414 = vmatpush.msra.mxu0 %v76
    %1415 = vmatpush.msra.mxu0 %v73
    %1416 = vmatpush.msra.mxu0 %v70
    %1417 = vmatpush.msra.mxu0 %v67
    %1418 = vmatmul.f32.gmra.mxu0 %v1226
    %v1419 = vpop.f32.mrf.mxu0
    %v1420 = vadd.f32 0.0, %v1419
    %1421 = vdwg.mxu0
    %1422 = vmatpush.msra.mxu0 %v113
    %1423 = vmatpush.msra.mxu0 %v110
    %1424 = vmatpush.msra.mxu0 %v107
    %1425 = vmatpush.msra.mxu0 %v104
    %1426 = vmatpush.msra.mxu0 %v101
    %1427 = vmatpush.msra.mxu0 %v98
    %1428 = vmatpush.msra.mxu0 %v95
    %1429 = vmatpush.msra.mxu0 %v92
    %1430 = vmatpush.msra.mxu0 %v89
    %1431 = vmatpush.msra.mxu0 %v86
    %1432 = vmatpush.msra.mxu0 %v83
    %1433 = vmatpush.msra.mxu0 %v80
    %1434 = vmatpush.msra.mxu0 %v77
    %1435 = vmatpush.msra.mxu0 %v74
    %1436 = vmatpush.msra.mxu0 %v71
    %1437 = vmatpush.msra.mxu0 %v68
    %1438 = vmatmul.f32.gmra.mxu0 %v1226
    %v1439 = vpop.f32.mrf.mxu0
    %v1440 = vadd.f32 0.0, %v1439
    %1441 = vdwg.mxu0
    %1442 = vmatpush.msra.mxu0 %v114
    %1443 = vmatpush.msra.mxu0 %v111
    %1444 = vmatpush.msra.mxu0 %v108
    %1445 = vmatpush.msra.mxu0 %v105
    %1446 = vmatpush.msra.mxu0 %v102
    %1447 = vmatpush.msra.mxu0 %v99
    %1448 = vmatpush.msra.mxu0 %v96
    %1449 = vmatpush.msra.mxu0 %v93
    %1450 = vmatpush.msra.mxu0 %v90
    %1451 = vmatpush.msra.mxu0 %v87
    %1452 = vmatpush.msra.mxu0 %v84
    %1453 = vmatpush.msra.mxu0 %v81
    %1454 = vmatpush.msra.mxu0 %v78
    %1455 = vmatpush.msra.mxu0 %v75
    %1456 = vmatpush.msra.mxu0 %v72
    %1457 = vmatpush.msra.mxu0 %v69
    %1458 = vmatmul.f32.gmra.mxu0 %v1226
    %v1459 = vpop.f32.mrf.mxu0
    %v1460 = vadd.f32 0.0, %v1459
    %1461 = vdwg.mxu0
    %v1462 = vadd.f32 %v1401, %v1420
    %v1463 = vxor.u32 %v1462, 2147483648
    %v1464 = vmul.f32 %v1463, 1.442695
    %v1465 = vpow.pop %v1464
    %v1466 = vadd.f32 %v1465, 1.0
    %v1467 = vrcp.pop %v1466
    %v1468 = vmul.f32 %v1466, %v1467
    %v1469 = vsub.f32 1.0, %v1468
    %v1470 = vmul.f32 %v1467, %v1469
    %v1471 = vadd.f32 %v1467, %v1470
    %vm1472 = vweird.f32 %v1466
    %vm1473 = vweird.f32 %v1467
    %vm1474 = vmor %vm1472, %vm1473
    %v1475 = vsel %vm1474, %v1467, %v1471
    %v1476 = vand.u32 2147483647, %v1466
    %vm1477 = vcmp.eq.f32.partialorder %v1476, 8.507059e+37
    %v1478 = vand.u32 %v1466, 2147483648
    %v1479 = vor.u32 1.1754944e-38, %v1478
    %v1480 = vsel %vm1477, %v1479, %v1475
    %v1481 = vmul.f32 1.0, %v1480
    %v1483 = vrot.slane %v1401, 2
    %v1485 = vadd.f32 %v1483, %v1440
    %v1486 = vxor.u32 %v1485, 2147483648
    %v1487 = vmul.f32 %v1486, 1.442695
    %v1488 = vpow.pop %v1487
    %v1489 = vadd.f32 %v1488, 1.0
    %v1490 = vrcp.pop %v1489
    %v1491 = vmul.f32 %v1489, %v1490
    %v1492 = vsub.f32 1.0, %v1491
    %v1493 = vmul.f32 %v1490, %v1492
    %v1494 = vadd.f32 %v1490, %v1493
    %vm1495 = vweird.f32 %v1489
    %vm1496 = vweird.f32 %v1490
    %vm1497 = vmor %vm1495, %vm1496
    %v1498 = vsel %vm1497, %v1490, %v1494
    %v1499 = vand.u32 2147483647, %v1489
    %vm1500 = vcmp.eq.f32.partialorder %v1499, 8.507059e+37
    %v1501 = vand.u32 %v1489, 2147483648
    %v1502 = vor.u32 1.1754944e-38, %v1501
    %v1503 = vsel %vm1500, %v1502, %v1498
    %v1504 = vmul.f32 1.0, %v1503
    %v1505 = vadd.f32 %v1460, %v326
    %v1506 = vmul.f32 %v1481, %v1505
    %v1507 = vrot.slane %v1401, 4
    %v1509 = vadd.f32 %v1507, %v1506
    %v1510 = vtanh.pop %v1509
    %v1511 = vsub.f32 1.0, %v1504
    %v1512 = vmul.f32 %v1511, %v1510
    %v1513 = vmul.f32 %v1504, %v1226
    %v1514 = vadd.f32 %v1512, %v1513
    %s1515 = scalar_select %p1399, 1, 0
    %v1516 = vstv %s1515
    %vm1517 = vcmp.eq.s32.totalorder %v1516, 1
    %v1518 = vsel %vm1517, %v1514, %v1226
    %1519 = vmatpush.msra.mxu0 %v212
    %1520 = vmatpush.msra.mxu0 %v209
    %1521 = vmatpush.msra.mxu0 %v206
    %1522 = vmatpush.msra.mxu0 %v203
    %1523 = vmatpush.msra.mxu0 %v200
    %1524 = vmatpush.msra.mxu0 %v197
    %1525 = vmatpush.msra.mxu0 %v194
    %1526 = vmatpush.msra.mxu0 %v191
    %1527 = vmatpush.msra.mxu0 %v188
    %1528 = vmatpush.msra.mxu0 %v185
    %1529 = vmatpush.msra.mxu0 %v182
    %1530 = vmatpush.msra.mxu0 %v179
    %1531 = vmatpush.msra.mxu0 %v176
    %1532 = vmatpush.msra.mxu0 %v173
    %1533 = vmatpush.msra.mxu0 %v170
    %1534 = vmatpush.msra.mxu0 %v167
    %1535 = vmatmul.f32.gmra.mxu0 %v1518
    %v1536 = vpop.f32.mrf.mxu0
    %v1537 = vadd.f32 %v343, %v1536
    %1538 = vdwg.mxu0
    %1539 = vmatpush.msra.mxu0 %v213
    %1540 = vmatpush.msra.mxu0 %v210
    %1541 = vmatpush.msra.mxu0 %v207
    %1542 = vmatpush.msra.mxu0 %v204
    %1543 = vmatpush.msra.mxu0 %v201
    %1544 = vmatpush.msra.mxu0 %v198
    %1545 = vmatpush.msra.mxu0 %v195
    %1546 = vmatpush.msra.mxu0 %v192
    %1547 = vmatpush.msra.mxu0 %v189
    %1548 = vmatpush.msra.mxu0 %v186
    %1549 = vmatpush.msra.mxu0 %v183
    %1550 = vmatpush.msra.mxu0 %v180
    %1551 = vmatpush.msra.mxu0 %v177
    %1552 = vmatpush.msra.mxu0 %v174
    %1553 = vmatpush.msra.mxu0 %v171
    %1554 = vmatpush.msra.mxu0 %v168
    %1555 = vmatmul.f32.gmra.mxu0 %v1518
    %v1556 = vpop.f32.mrf.mxu0
    %v1557 = vadd.f32 %v344, %v1556
    %1558 = vdwg.mxu0
    %1559 = vmatpush.msra.mxu0 %v214
    %1560 = vmatpush.msra.mxu0 %v211
    %1561 = vmatpush.msra.mxu0 %v208
    %1562 = vmatpush.msra.mxu0 %v205
    %1563 = vmatpush.msra.mxu0 %v202
    %1564 = vmatpush.msra.mxu0 %v199
    %1565 = vmatpush.msra.mxu0 %v196
    %1566 = vmatpush.msra.mxu0 %v193
    %1567 = vmatpush.msra.mxu0 %v190
    %1568 = vmatpush.msra.mxu0 %v187
    %1569 = vmatpush.msra.mxu0 %v184
    %1570 = vmatpush.msra.mxu0 %v181
    %1571 = vmatpush.msra.mxu0 %v178
    %1572 = vmatpush.msra.mxu0 %v175
    %1573 = vmatpush.msra.mxu0 %v172
    %1574 = vmatpush.msra.mxu0 %v169
    %1575 = vmatmul.f32.gmra.mxu0 %v1518
    %v1576 = vpop.f32.mrf.mxu0
    %v1577 = vadd.f32 %v345, %v1576
    %1578 = vdwg.mxu0
    %1579 = vmatpush.msra.mxu0 %v161
    %1580 = vmatpush.msra.mxu0 %v158
    %1581 = vmatpush.msra.mxu0 %v155
    %1582 = vmatpush.msra.mxu0 %v152
    %1583 = vmatpush.msra.mxu0 %v149
    %1584 = vmatpush.msra.mxu0 %v146
    %1585 = vmatpush.msra.mxu0 %v143
    %1586 = vmatpush.msra.mxu0 %v140
    %1587 = vmatpush.msra.mxu0 %v137
    %1588 = vmatpush.msra.mxu0 %v134
    %1589 = vmatpush.msra.mxu0 %v131
    %1590 = vmatpush.msra.mxu0 %v128
    %1591 = vmatpush.msra.mxu0 %v125
    %1592 = vmatpush.msra.mxu0 %v122
    %1593 = vmatpush.msra.mxu0 %v119
    %1594 = vmatpush.msra.mxu0 %v116
    %1595 = vmatmul.f32.gmra.mxu0 %v1395
    %v1596 = vpop.f32.mrf.mxu0
    %v1597 = vadd.f32 0.0, %v1596
    %1598 = vdwg.mxu0
    %1599 = vmatpush.msra.mxu0 %v162
    %1600 = vmatpush.msra.mxu0 %v159
    %1601 = vmatpush.msra.mxu0 %v156
    %1602 = vmatpush.msra.mxu0 %v153
    %1603 = vmatpush.msra.mxu0 %v150
    %1604 = vmatpush.msra.mxu0 %v147
    %1605 = vmatpush.msra.mxu0 %v144
    %1606 = vmatpush.msra.mxu0 %v141
    %1607 = vmatpush.msra.mxu0 %v138
    %1608 = vmatpush.msra.mxu0 %v135
    %1609 = vmatpush.msra.mxu0 %v132
    %1610 = vmatpush.msra.mxu0 %v129
    %1611 = vmatpush.msra.mxu0 %v126
    %1612 = vmatpush.msra.mxu0 %v123
    %1613 = vmatpush.msra.mxu0 %v120
    %1614 = vmatpush.msra.mxu0 %v117
    %1615 = vmatmul.f32.gmra.mxu0 %v1395
    %v1616 = vpop.f32.mrf.mxu0
    %v1617 = vadd.f32 0.0, %v1616
    %1618 = vdwg.mxu0
    %1619 = vmatpush.msra.mxu0 %v163
    %1620 = vmatpush.msra.mxu0 %v160
    %1621 = vmatpush.msra.mxu0 %v157
    %1622 = vmatpush.msra.mxu0 %v154
    %1623 = vmatpush.msra.mxu0 %v151
    %1624 = vmatpush.msra.mxu0 %v148
    %1625 = vmatpush.msra.mxu0 %v145
    %1626 = vmatpush.msra.mxu0 %v142
    %1627 = vmatpush.msra.mxu0 %v139
    %1628 = vmatpush.msra.mxu0 %v136
    %1629 = vmatpush.msra.mxu0 %v133
    %1630 = vmatpush.msra.mxu0 %v130
    %1631 = vmatpush.msra.mxu0 %v127
    %1632 = vmatpush.msra.mxu0 %v124
    %1633 = vmatpush.msra.mxu0 %v121
    %1634 = vmatpush.msra.mxu0 %v118
    %1635 = vmatmul.f32.gmra.mxu0 %v1395
    %v1636 = vpop.f32.mrf.mxu0
    %v1637 = vadd.f32 0.0, %v1636
    %1638 = vdwg.mxu0
    %v1639 = vadd.f32 %v1537, %v1597
    %v1640 = vxor.u32 %v1639, 2147483648
    %v1641 = vmul.f32 %v1640, 1.442695
    %v1642 = vpow.pop %v1641
    %v1643 = vadd.f32 %v1642, 1.0
    %v1644 = vrcp.pop %v1643
    %v1645 = vmul.f32 %v1643, %v1644
    %v1646 = vsub.f32 1.0, %v1645
    %v1647 = vmul.f32 %v1644, %v1646
    %v1648 = vadd.f32 %v1644, %v1647
    %vm1649 = vweird.f32 %v1643
    %vm1650 = vweird.f32 %v1644
    %vm1651 = vmor %vm1649, %vm1650
    %v1652 = vsel %vm1651, %v1644, %v1648
    %v1653 = vand.u32 2147483647, %v1643
    %vm1654 = vcmp.eq.f32.partialorder %v1653, 8.507059e+37
    %v1655 = vand.u32 %v1643, 2147483648
    %v1656 = vor.u32 1.1754944e-38, %v1655
    %v1657 = vsel %vm1654, %v1656, %v1652
    %v1658 = vmul.f32 1.0, %v1657
    %v1659 = vadd.f32 %v1557, %v1617
    %v1660 = vxor.u32 %v1659, 2147483648
    %v1661 = vmul.f32 %v1660, 1.442695
    %v1662 = vpow.pop %v1661
    %v1663 = vadd.f32 %v1662, 1.0
    %v1664 = vrcp.pop %v1663
    %v1665 = vmul.f32 %v1663, %v1664
    %v1666 = vsub.f32 1.0, %v1665
    %v1667 = vmul.f32 %v1664, %v1666
    %v1668 = vadd.f32 %v1664, %v1667
    %vm1669 = vweird.f32 %v1663
    %vm1670 = vweird.f32 %v1664
    %vm1671 = vmor %vm1669, %vm1670
    %v1672 = vsel %vm1671, %v1664, %v1668
    %v1673 = vand.u32 2147483647, %v1663
    %vm1674 = vcmp.eq.f32.partialorder %v1673, 8.507059e+37
    %v1675 = vand.u32 %v1663, 2147483648
    %v1676 = vor.u32 1.1754944e-38, %v1675
    %v1677 = vsel %vm1674, %v1676, %v1672
    %v1678 = vmul.f32 1.0, %v1677
    %v1679 = vadd.f32 %v1637, %v510
    %v1680 = vmul.f32 %v1658, %v1679
    %v1681 = vadd.f32 %v1577, %v1680
    %v1682 = vtanh.pop %v1681
    %v1683 = vsub.f32 1.0, %v1678
    %v1684 = vmul.f32 %v1683, %v1682
    %v1685 = vmul.f32 %v1678, %v1395
    %v1686 = vadd.f32 %v1684, %v1685
    %v1687 = vsel %vm1517, %v1686, %v1395
    %s1688 = scalar_lea.vmem [#allocation8], 8
    %1689 = vst [vmem:[%s1688] sm:$0x3] %v1687
    %s1690 = sadd.s32 %s219, 5
    %p1691 = scmp.lt.s32.totalorder %s1690, 8
    %s1692 = scalar_lea.vmem %s0, 30
    %v1693 = vld [vmem:[%s1692] sm:$0x3f]
    %1694 = vmatpush.msra.mxu0 %v112
    %1695 = vmatpush.msra.mxu0 %v109
    %1696 = vmatpush.msra.mxu0 %v106
    %1697 = vmatpush.msra.mxu0 %v103
    %1698 = vmatpush.msra.mxu0 %v100
    %1699 = vmatpush.msra.mxu0 %v97
    %1700 = vmatpush.msra.mxu0 %v94
    %1701 = vmatpush.msra.mxu0 %v91
    %1702 = vmatpush.msra.mxu0 %v88
    %1703 = vmatpush.msra.mxu0 %v85
    %1704 = vmatpush.msra.mxu0 %v82
    %1705 = vmatpush.msra.mxu0 %v79
    %1706 = vmatpush.msra.mxu0 %v76
    %1707 = vmatpush.msra.mxu0 %v73
    %1708 = vmatpush.msra.mxu0 %v70
    %1709 = vmatpush.msra.mxu0 %v67
    %1710 = vmatmul.f32.gmra.mxu0 %v1518
    %v1711 = vpop.f32.mrf.mxu0
    %v1712 = vadd.f32 0.0, %v1711
    %1713 = vdwg.mxu0
    %1714 = vmatpush.msra.mxu0 %v113
    %1715 = vmatpush.msra.mxu0 %v110
    %1716 = vmatpush.msra.mxu0 %v107
    %1717 = vmatpush.msra.mxu0 %v104
    %1718 = vmatpush.msra.mxu0 %v101
    %1719 = vmatpush.msra.mxu0 %v98
    %1720 = vmatpush.msra.mxu0 %v95
    %1721 = vmatpush.msra.mxu0 %v92
    %1722 = vmatpush.msra.mxu0 %v89
    %1723 = vmatpush.msra.mxu0 %v86
    %1724 = vmatpush.msra.mxu0 %v83
    %1725 = vmatpush.msra.mxu0 %v80
    %1726 = vmatpush.msra.mxu0 %v77
    %1727 = vmatpush.msra.mxu0 %v74
    %1728 = vmatpush.msra.mxu0 %v71
    %1729 = vmatpush.msra.mxu0 %v68
    %1730 = vmatmul.f32.gmra.mxu0 %v1518
    %v1731 = vpop.f32.mrf.mxu0
    %v1732 = vadd.f32 0.0, %v1731
    %1733 = vdwg.mxu0
    %1734 = vmatpush.msra.mxu0 %v114
    %1735 = vmatpush.msra.mxu0 %v111
    %1736 = vmatpush.msra.mxu0 %v108
    %1737 = vmatpush.msra.mxu0 %v105
    %1738 = vmatpush.msra.mxu0 %v102
    %1739 = vmatpush.msra.mxu0 %v99
    %1740 = vmatpush.msra.mxu0 %v96
    %1741 = vmatpush.msra.mxu0 %v93
    %1742 = vmatpush.msra.mxu0 %v90
    %1743 = vmatpush.msra.mxu0 %v87
    %1744 = vmatpush.msra.mxu0 %v84
    %1745 = vmatpush.msra.mxu0 %v81
    %1746 = vmatpush.msra.mxu0 %v78
    %1747 = vmatpush.msra.mxu0 %v75
    %1748 = vmatpush.msra.mxu0 %v72
    %1749 = vmatpush.msra.mxu0 %v69
    %1750 = vmatmul.f32.gmra.mxu0 %v1518
    %v1751 = vpop.f32.mrf.mxu0
    %v1752 = vadd.f32 0.0, %v1751
    %1753 = vdwg.mxu0
    %v1754 = vadd.f32 %v1693, %v1712
    %v1755 = vxor.u32 %v1754, 2147483648
    %v1756 = vmul.f32 %v1755, 1.442695
    %v1757 = vpow.pop %v1756
    %v1758 = vadd.f32 %v1757, 1.0
    %v1759 = vrcp.pop %v1758
    %v1760 = vmul.f32 %v1758, %v1759
    %v1761 = vsub.f32 1.0, %v1760
    %v1762 = vmul.f32 %v1759, %v1761
    %v1763 = vadd.f32 %v1759, %v1762
    %vm1764 = vweird.f32 %v1758
    %vm1765 = vweird.f32 %v1759
    %vm1766 = vmor %vm1764, %vm1765
    %v1767 = vsel %vm1766, %v1759, %v1763
    %v1768 = vand.u32 2147483647, %v1758
    %vm1769 = vcmp.eq.f32.partialorder %v1768, 8.507059e+37
    %v1770 = vand.u32 %v1758, 2147483648
    %v1771 = vor.u32 1.1754944e-38, %v1770
    %v1772 = vsel %vm1769, %v1771, %v1767
    %v1773 = vmul.f32 1.0, %v1772
    %v1775 = vrot.slane %v1693, 2
    %v1777 = vadd.f32 %v1775, %v1732
    %v1778 = vxor.u32 %v1777, 2147483648
    %v1779 = vmul.f32 %v1778, 1.442695
    %v1780 = vpow.pop %v1779
    %v1781 = vadd.f32 %v1780, 1.0
    %v1782 = vrcp.pop %v1781
    %v1783 = vmul.f32 %v1781, %v1782
    %v1784 = vsub.f32 1.0, %v1783
    %v1785 = vmul.f32 %v1782, %v1784
    %v1786 = vadd.f32 %v1782, %v1785
    %vm1787 = vweird.f32 %v1781
    %vm1788 = vweird.f32 %v1782
    %vm1789 = vmor %vm1787, %vm1788
    %v1790 = vsel %vm1789, %v1782, %v1786
    %v1791 = vand.u32 2147483647, %v1781
    %vm1792 = vcmp.eq.f32.partialorder %v1791, 8.507059e+37
    %v1793 = vand.u32 %v1781, 2147483648
    %v1794 = vor.u32 1.1754944e-38, %v1793
    %v1795 = vsel %vm1792, %v1794, %v1790
    %v1796 = vmul.f32 1.0, %v1795
    %v1797 = vadd.f32 %v1752, %v326
    %v1798 = vmul.f32 %v1773, %v1797
    %v1799 = vrot.slane %v1693, 4
    %v1801 = vadd.f32 %v1799, %v1798
    %v1802 = vtanh.pop %v1801
    %v1803 = vsub.f32 1.0, %v1796
    %v1804 = vmul.f32 %v1803, %v1802
    %v1805 = vmul.f32 %v1796, %v1518
    %v1806 = vadd.f32 %v1804, %v1805
    %s1807 = scalar_select %p1691, 1, 0
    %v1808 = vstv %s1807
    %vm1809 = vcmp.eq.s32.totalorder %v1808, 1
    %v1810 = vsel %vm1809, %v1806, %v1518
    %1811 = vmatpush.msra.mxu0 %v212
    %1812 = vmatpush.msra.mxu0 %v209
    %1813 = vmatpush.msra.mxu0 %v206
    %1814 = vmatpush.msra.mxu0 %v203
    %1815 = vmatpush.msra.mxu0 %v200
    %1816 = vmatpush.msra.mxu0 %v197
    %1817 = vmatpush.msra.mxu0 %v194
    %1818 = vmatpush.msra.mxu0 %v191
    %1819 = vmatpush.msra.mxu0 %v188
    %1820 = vmatpush.msra.mxu0 %v185
    %1821 = vmatpush.msra.mxu0 %v182
    %1822 = vmatpush.msra.mxu0 %v179
    %1823 = vmatpush.msra.mxu0 %v176
    %1824 = vmatpush.msra.mxu0 %v173
    %1825 = vmatpush.msra.mxu0 %v170
    %1826 = vmatpush.msra.mxu0 %v167
    %1827 = vmatmul.f32.gmra.mxu0 %v1810
    %v1828 = vpop.f32.mrf.mxu0
    %v1829 = vadd.f32 %v343, %v1828
    %1830 = vdwg.mxu0
    %1831 = vmatpush.msra.mxu0 %v213
    %1832 = vmatpush.msra.mxu0 %v210
    %1833 = vmatpush.msra.mxu0 %v207
    %1834 = vmatpush.msra.mxu0 %v204
    %1835 = vmatpush.msra.mxu0 %v201
    %1836 = vmatpush.msra.mxu0 %v198
    %1837 = vmatpush.msra.mxu0 %v195
    %1838 = vmatpush.msra.mxu0 %v192
    %1839 = vmatpush.msra.mxu0 %v189
    %1840 = vmatpush.msra.mxu0 %v186
    %1841 = vmatpush.msra.mxu0 %v183
    %1842 = vmatpush.msra.mxu0 %v180
    %1843 = vmatpush.msra.mxu0 %v177
    %1844 = vmatpush.msra.mxu0 %v174
    %1845 = vmatpush.msra.mxu0 %v171
    %1846 = vmatpush.msra.mxu0 %v168
    %1847 = vmatmul.f32.gmra.mxu0 %v1810
    %v1848 = vpop.f32.mrf.mxu0
    %v1849 = vadd.f32 %v344, %v1848
    %1850 = vdwg.mxu0
    %1851 = vmatpush.msra.mxu0 %v214
    %1852 = vmatpush.msra.mxu0 %v211
    %1853 = vmatpush.msra.mxu0 %v208
    %1854 = vmatpush.msra.mxu0 %v205
    %1855 = vmatpush.msra.mxu0 %v202
    %1856 = vmatpush.msra.mxu0 %v199
    %1857 = vmatpush.msra.mxu0 %v196
    %1858 = vmatpush.msra.mxu0 %v193
    %1859 = vmatpush.msra.mxu0 %v190
    %1860 = vmatpush.msra.mxu0 %v187
    %1861 = vmatpush.msra.mxu0 %v184
    %1862 = vmatpush.msra.mxu0 %v181
    %1863 = vmatpush.msra.mxu0 %v178
    %1864 = vmatpush.msra.mxu0 %v175
    %1865 = vmatpush.msra.mxu0 %v172
    %1866 = vmatpush.msra.mxu0 %v169
    %1867 = vmatmul.f32.gmra.mxu0 %v1810
    %v1868 = vpop.f32.mrf.mxu0
    %v1869 = vadd.f32 %v345, %v1868
    %1870 = vdwg.mxu0
    %1871 = vmatpush.msra.mxu0 %v161
    %1872 = vmatpush.msra.mxu0 %v158
    %1873 = vmatpush.msra.mxu0 %v155
    %1874 = vmatpush.msra.mxu0 %v152
    %1875 = vmatpush.msra.mxu0 %v149
    %1876 = vmatpush.msra.mxu0 %v146
    %1877 = vmatpush.msra.mxu0 %v143
    %1878 = vmatpush.msra.mxu0 %v140
    %1879 = vmatpush.msra.mxu0 %v137
    %1880 = vmatpush.msra.mxu0 %v134
    %1881 = vmatpush.msra.mxu0 %v131
    %1882 = vmatpush.msra.mxu0 %v128
    %1883 = vmatpush.msra.mxu0 %v125
    %1884 = vmatpush.msra.mxu0 %v122
    %1885 = vmatpush.msra.mxu0 %v119
    %1886 = vmatpush.msra.mxu0 %v116
    %1887 = vmatmul.f32.gmra.mxu0 %v1687
    %v1888 = vpop.f32.mrf.mxu0
    %v1889 = vadd.f32 0.0, %v1888
    %1890 = vdwg.mxu0
    %1891 = vmatpush.msra.mxu0 %v162
    %1892 = vmatpush.msra.mxu0 %v159
    %1893 = vmatpush.msra.mxu0 %v156
    %1894 = vmatpush.msra.mxu0 %v153
    %1895 = vmatpush.msra.mxu0 %v150
    %1896 = vmatpush.msra.mxu0 %v147
    %1897 = vmatpush.msra.mxu0 %v144
    %1898 = vmatpush.msra.mxu0 %v141
    %1899 = vmatpush.msra.mxu0 %v138
    %1900 = vmatpush.msra.mxu0 %v135
    %1901 = vmatpush.msra.mxu0 %v132
    %1902 = vmatpush.msra.mxu0 %v129
    %1903 = vmatpush.msra.mxu0 %v126
    %1904 = vmatpush.msra.mxu0 %v123
    %1905 = vmatpush.msra.mxu0 %v120
    %1906 = vmatpush.msra.mxu0 %v117
    %1907 = vmatmul.f32.gmra.mxu0 %v1687
    %v1908 = vpop.f32.mrf.mxu0
    %v1909 = vadd.f32 0.0, %v1908
    %1910 = vdwg.mxu0
    %1911 = vmatpush.msra.mxu0 %v163
    %1912 = vmatpush.msra.mxu0 %v160
    %1913 = vmatpush.msra.mxu0 %v157
    %1914 = vmatpush.msra.mxu0 %v154
    %1915 = vmatpush.msra.mxu0 %v151
    %1916 = vmatpush.msra.mxu0 %v148
    %1917 = vmatpush.msra.mxu0 %v145
    %1918 = vmatpush.msra.mxu0 %v142
    %1919 = vmatpush.msra.mxu0 %v139
    %1920 = vmatpush.msra.mxu0 %v136
    %1921 = vmatpush.msra.mxu0 %v133
    %1922 = vmatpush.msra.mxu0 %v130
    %1923 = vmatpush.msra.mxu0 %v127
    %1924 = vmatpush.msra.mxu0 %v124
    %1925 = vmatpush.msra.mxu0 %v121
    %1926 = vmatpush.msra.mxu0 %v118
    %1927 = vmatmul.f32.gmra.mxu0 %v1687
    %v1928 = vpop.f32.mrf.mxu0
    %v1929 = vadd.f32 0.0, %v1928
    %1930 = vdwg.mxu0
    %v1931 = vadd.f32 %v1829, %v1889
    %v1932 = vxor.u32 %v1931, 2147483648
    %v1933 = vmul.f32 %v1932, 1.442695
    %v1934 = vpow.pop %v1933
    %v1935 = vadd.f32 %v1934, 1.0
    %v1936 = vrcp.pop %v1935
    %v1937 = vmul.f32 %v1935, %v1936
    %v1938 = vsub.f32 1.0, %v1937
    %v1939 = vmul.f32 %v1936, %v1938
    %v1940 = vadd.f32 %v1936, %v1939
    %vm1941 = vweird.f32 %v1935
    %vm1942 = vweird.f32 %v1936
    %vm1943 = vmor %vm1941, %vm1942
    %v1944 = vsel %vm1943, %v1936, %v1940
    %v1945 = vand.u32 2147483647, %v1935
    %vm1946 = vcmp.eq.f32.partialorder %v1945, 8.507059e+37
    %v1947 = vand.u32 %v1935, 2147483648
    %v1948 = vor.u32 1.1754944e-38, %v1947
    %v1949 = vsel %vm1946, %v1948, %v1944
    %v1950 = vmul.f32 1.0, %v1949
    %v1951 = vadd.f32 %v1849, %v1909
    %v1952 = vxor.u32 %v1951, 2147483648
    %v1953 = vmul.f32 %v1952, 1.442695
    %v1954 = vpow.pop %v1953
    %v1955 = vadd.f32 %v1954, 1.0
    %v1956 = vrcp.pop %v1955
    %v1957 = vmul.f32 %v1955, %v1956
    %v1958 = vsub.f32 1.0, %v1957
    %v1959 = vmul.f32 %v1956, %v1958
    %v1960 = vadd.f32 %v1956, %v1959
    %vm1961 = vweird.f32 %v1955
    %vm1962 = vweird.f32 %v1956
    %vm1963 = vmor %vm1961, %vm1962
    %v1964 = vsel %vm1963, %v1956, %v1960
    %v1965 = vand.u32 2147483647, %v1955
    %vm1966 = vcmp.eq.f32.partialorder %v1965, 8.507059e+37
    %v1967 = vand.u32 %v1955, 2147483648
    %v1968 = vor.u32 1.1754944e-38, %v1967
    %v1969 = vsel %vm1966, %v1968, %v1964
    %v1970 = vmul.f32 1.0, %v1969
    %v1971 = vadd.f32 %v1929, %v510
    %v1972 = vmul.f32 %v1950, %v1971
    %v1973 = vadd.f32 %v1869, %v1972
    %v1974 = vtanh.pop %v1973
    %v1975 = vsub.f32 1.0, %v1970
    %v1976 = vmul.f32 %v1975, %v1974
    %v1977 = vmul.f32 %v1970, %v1687
    %v1978 = vadd.f32 %v1976, %v1977
    %v1979 = vsel %vm1809, %v1978, %v1687
    %s1980 = scalar_lea.vmem [#allocation8], 10
    %1981 = vst [vmem:[%s1980] sm:$0x3] %v1979
    %s1982 = sadd.s32 %s219, 6
    %p1983 = scmp.lt.s32.totalorder %s1982, 8
    %s1984 = scalar_lea.vmem %s0, 36
    %v1985 = vld [vmem:[%s1984] sm:$0x3f]
    %1986 = vmatpush.msra.mxu0 %v112
    %1987 = vmatpush.msra.mxu0 %v109
    %1988 = vmatpush.msra.mxu0 %v106
    %1989 = vmatpush.msra.mxu0 %v103
    %1990 = vmatpush.msra.mxu0 %v100
    %1991 = vmatpush.msra.mxu0 %v97
    %1992 = vmatpush.msra.mxu0 %v94
    %1993 = vmatpush.msra.mxu0 %v91
    %1994 = vmatpush.msra.mxu0 %v88
    %1995 = vmatpush.msra.mxu0 %v85
    %1996 = vmatpush.msra.mxu0 %v82
    %1997 = vmatpush.msra.mxu0 %v79
    %1998 = vmatpush.msra.mxu0 %v76
    %1999 = vmatpush.msra.mxu0 %v73
    %2000 = vmatpush.msra.mxu0 %v70
    %2001 = vmatpush.msra.mxu0 %v67
    %2002 = vmatmul.f32.gmra.mxu0 %v1810
    %v2003 = vpop.f32.mrf.mxu0
    %v2004 = vadd.f32 0.0, %v2003
    %2005 = vdwg.mxu0
    %2006 = vmatpush.msra.mxu0 %v113
    %2007 = vmatpush.msra.mxu0 %v110
    %2008 = vmatpush.msra.mxu0 %v107
    %2009 = vmatpush.msra.mxu0 %v104
    %2010 = vmatpush.msra.mxu0 %v101
    %2011 = vmatpush.msra.mxu0 %v98
    %2012 = vmatpush.msra.mxu0 %v95
    %2013 = vmatpush.msra.mxu0 %v92
    %2014 = vmatpush.msra.mxu0 %v89
    %2015 = vmatpush.msra.mxu0 %v86
    %2016 = vmatpush.msra.mxu0 %v83
    %2017 = vmatpush.msra.mxu0 %v80
    %2018 = vmatpush.msra.mxu0 %v77
    %2019 = vmatpush.msra.mxu0 %v74
    %2020 = vmatpush.msra.mxu0 %v71
    %2021 = vmatpush.msra.mxu0 %v68
    %2022 = vmatmul.f32.gmra.mxu0 %v1810
    %v2023 = vpop.f32.mrf.mxu0
    %v2024 = vadd.f32 0.0, %v2023
    %2025 = vdwg.mxu0
    %2026 = vmatpush.msra.mxu0 %v114
    %2027 = vmatpush.msra.mxu0 %v111
    %2028 = vmatpush.msra.mxu0 %v108
    %2029 = vmatpush.msra.mxu0 %v105
    %2030 = vmatpush.msra.mxu0 %v102
    %2031 = vmatpush.msra.mxu0 %v99
    %2032 = vmatpush.msra.mxu0 %v96
    %2033 = vmatpush.msra.mxu0 %v93
    %2034 = vmatpush.msra.mxu0 %v90
    %2035 = vmatpush.msra.mxu0 %v87
    %2036 = vmatpush.msra.mxu0 %v84
    %2037 = vmatpush.msra.mxu0 %v81
    %2038 = vmatpush.msra.mxu0 %v78
    %2039 = vmatpush.msra.mxu0 %v75
    %2040 = vmatpush.msra.mxu0 %v72
    %2041 = vmatpush.msra.mxu0 %v69
    %2042 = vmatmul.f32.gmra.mxu0 %v1810
    %v2043 = vpop.f32.mrf.mxu0
    %v2044 = vadd.f32 0.0, %v2043
    %2045 = vdwg.mxu0
    %v2046 = vadd.f32 %v1985, %v2004
    %v2047 = vxor.u32 %v2046, 2147483648
    %v2048 = vmul.f32 %v2047, 1.442695
    %v2049 = vpow.pop %v2048
    %v2050 = vadd.f32 %v2049, 1.0
    %v2051 = vrcp.pop %v2050
    %v2052 = vmul.f32 %v2050, %v2051
    %v2053 = vsub.f32 1.0, %v2052
    %v2054 = vmul.f32 %v2051, %v2053
    %v2055 = vadd.f32 %v2051, %v2054
    %vm2056 = vweird.f32 %v2050
    %vm2057 = vweird.f32 %v2051
    %vm2058 = vmor %vm2056, %vm2057
    %v2059 = vsel %vm2058, %v2051, %v2055
    %v2060 = vand.u32 2147483647, %v2050
    %vm2061 = vcmp.eq.f32.partialorder %v2060, 8.507059e+37
    %v2062 = vand.u32 %v2050, 2147483648
    %v2063 = vor.u32 1.1754944e-38, %v2062
    %v2064 = vsel %vm2061, %v2063, %v2059
    %v2065 = vmul.f32 1.0, %v2064
    %v2067 = vrot.slane %v1985, 2
    %v2069 = vadd.f32 %v2067, %v2024
    %v2070 = vxor.u32 %v2069, 2147483648
    %v2071 = vmul.f32 %v2070, 1.442695
    %v2072 = vpow.pop %v2071
    %v2073 = vadd.f32 %v2072, 1.0
    %v2074 = vrcp.pop %v2073
    %v2075 = vmul.f32 %v2073, %v2074
    %v2076 = vsub.f32 1.0, %v2075
    %v2077 = vmul.f32 %v2074, %v2076
    %v2078 = vadd.f32 %v2074, %v2077
    %vm2079 = vweird.f32 %v2073
    %vm2080 = vweird.f32 %v2074
    %vm2081 = vmor %vm2079, %vm2080
    %v2082 = vsel %vm2081, %v2074, %v2078
    %v2083 = vand.u32 2147483647, %v2073
    %vm2084 = vcmp.eq.f32.partialorder %v2083, 8.507059e+37
    %v2085 = vand.u32 %v2073, 2147483648
    %v2086 = vor.u32 1.1754944e-38, %v2085
    %v2087 = vsel %vm2084, %v2086, %v2082
    %v2088 = vmul.f32 1.0, %v2087
    %v2089 = vadd.f32 %v2044, %v326
    %v2090 = vmul.f32 %v2065, %v2089
    %v2091 = vrot.slane %v1985, 4
    %v2093 = vadd.f32 %v2091, %v2090
    %v2094 = vtanh.pop %v2093
    %v2095 = vsub.f32 1.0, %v2088
    %v2096 = vmul.f32 %v2095, %v2094
    %v2097 = vmul.f32 %v2088, %v1810
    %v2098 = vadd.f32 %v2096, %v2097
    %s2099 = scalar_select %p1983, 1, 0
    %v2100 = vstv %s2099
    %vm2101 = vcmp.eq.s32.totalorder %v2100, 1
    %v2102 = vsel %vm2101, %v2098, %v1810
    %2103 = vmatpush.msra.mxu0 %v212
    %2104 = vmatpush.msra.mxu0 %v209
    %2105 = vmatpush.msra.mxu0 %v206
    %2106 = vmatpush.msra.mxu0 %v203
    %2107 = vmatpush.msra.mxu0 %v200
    %2108 = vmatpush.msra.mxu0 %v197
    %2109 = vmatpush.msra.mxu0 %v194
    %2110 = vmatpush.msra.mxu0 %v191
    %2111 = vmatpush.msra.mxu0 %v188
    %2112 = vmatpush.msra.mxu0 %v185
    %2113 = vmatpush.msra.mxu0 %v182
    %2114 = vmatpush.msra.mxu0 %v179
    %2115 = vmatpush.msra.mxu0 %v176
    %2116 = vmatpush.msra.mxu0 %v173
    %2117 = vmatpush.msra.mxu0 %v170
    %2118 = vmatpush.msra.mxu0 %v167
    %2119 = vmatmul.f32.gmra.mxu0 %v2102
    %v2120 = vpop.f32.mrf.mxu0
    %v2121 = vadd.f32 %v343, %v2120
    %2122 = vdwg.mxu0
    %2123 = vmatpush.msra.mxu0 %v213
    %2124 = vmatpush.msra.mxu0 %v210
    %2125 = vmatpush.msra.mxu0 %v207
    %2126 = vmatpush.msra.mxu0 %v204
    %2127 = vmatpush.msra.mxu0 %v201
    %2128 = vmatpush.msra.mxu0 %v198
    %2129 = vmatpush.msra.mxu0 %v195
    %2130 = vmatpush.msra.mxu0 %v192
    %2131 = vmatpush.msra.mxu0 %v189
    %2132 = vmatpush.msra.mxu0 %v186
    %2133 = vmatpush.msra.mxu0 %v183
    %2134 = vmatpush.msra.mxu0 %v180
    %2135 = vmatpush.msra.mxu0 %v177
    %2136 = vmatpush.msra.mxu0 %v174
    %2137 = vmatpush.msra.mxu0 %v171
    %2138 = vmatpush.msra.mxu0 %v168
    %2139 = vmatmul.f32.gmra.mxu0 %v2102
    %v2140 = vpop.f32.mrf.mxu0
    %v2141 = vadd.f32 %v344, %v2140
    %2142 = vdwg.mxu0
    %2143 = vmatpush.msra.mxu0 %v214
    %2144 = vmatpush.msra.mxu0 %v211
    %2145 = vmatpush.msra.mxu0 %v208
    %2146 = vmatpush.msra.mxu0 %v205
    %2147 = vmatpush.msra.mxu0 %v202
    %2148 = vmatpush.msra.mxu0 %v199
    %2149 = vmatpush.msra.mxu0 %v196
    %2150 = vmatpush.msra.mxu0 %v193
    %2151 = vmatpush.msra.mxu0 %v190
    %2152 = vmatpush.msra.mxu0 %v187
    %2153 = vmatpush.msra.mxu0 %v184
    %2154 = vmatpush.msra.mxu0 %v181
    %2155 = vmatpush.msra.mxu0 %v178
    %2156 = vmatpush.msra.mxu0 %v175
    %2157 = vmatpush.msra.mxu0 %v172
    %2158 = vmatpush.msra.mxu0 %v169
    %2159 = vmatmul.f32.gmra.mxu0 %v2102
    %v2160 = vpop.f32.mrf.mxu0
    %v2161 = vadd.f32 %v345, %v2160
    %2162 = vdwg.mxu0
    %2163 = vmatpush.msra.mxu0 %v161
    %2164 = vmatpush.msra.mxu0 %v158
    %2165 = vmatpush.msra.mxu0 %v155
    %2166 = vmatpush.msra.mxu0 %v152
    %2167 = vmatpush.msra.mxu0 %v149
    %2168 = vmatpush.msra.mxu0 %v146
    %2169 = vmatpush.msra.mxu0 %v143
    %2170 = vmatpush.msra.mxu0 %v140
    %2171 = vmatpush.msra.mxu0 %v137
    %2172 = vmatpush.msra.mxu0 %v134
    %2173 = vmatpush.msra.mxu0 %v131
    %2174 = vmatpush.msra.mxu0 %v128
    %2175 = vmatpush.msra.mxu0 %v125
    %2176 = vmatpush.msra.mxu0 %v122
    %2177 = vmatpush.msra.mxu0 %v119
    %2178 = vmatpush.msra.mxu0 %v116
    %2179 = vmatmul.f32.gmra.mxu0 %v1979
    %v2180 = vpop.f32.mrf.mxu0
    %v2181 = vadd.f32 0.0, %v2180
    %2182 = vdwg.mxu0
    %2183 = vmatpush.msra.mxu0 %v162
    %2184 = vmatpush.msra.mxu0 %v159
    %2185 = vmatpush.msra.mxu0 %v156
    %2186 = vmatpush.msra.mxu0 %v153
    %2187 = vmatpush.msra.mxu0 %v150
    %2188 = vmatpush.msra.mxu0 %v147
    %2189 = vmatpush.msra.mxu0 %v144
    %2190 = vmatpush.msra.mxu0 %v141
    %2191 = vmatpush.msra.mxu0 %v138
    %2192 = vmatpush.msra.mxu0 %v135
    %2193 = vmatpush.msra.mxu0 %v132
    %2194 = vmatpush.msra.mxu0 %v129
    %2195 = vmatpush.msra.mxu0 %v126
    %2196 = vmatpush.msra.mxu0 %v123
    %2197 = vmatpush.msra.mxu0 %v120
    %2198 = vmatpush.msra.mxu0 %v117
    %2199 = vmatmul.f32.gmra.mxu0 %v1979
    %v2200 = vpop.f32.mrf.mxu0
    %v2201 = vadd.f32 0.0, %v2200
    %2202 = vdwg.mxu0
    %2203 = vmatpush.msra.mxu0 %v163
    %2204 = vmatpush.msra.mxu0 %v160
    %2205 = vmatpush.msra.mxu0 %v157
    %2206 = vmatpush.msra.mxu0 %v154
    %2207 = vmatpush.msra.mxu0 %v151
    %2208 = vmatpush.msra.mxu0 %v148
    %2209 = vmatpush.msra.mxu0 %v145
    %2210 = vmatpush.msra.mxu0 %v142
    %2211 = vmatpush.msra.mxu0 %v139
    %2212 = vmatpush.msra.mxu0 %v136
    %2213 = vmatpush.msra.mxu0 %v133
    %2214 = vmatpush.msra.mxu0 %v130
    %2215 = vmatpush.msra.mxu0 %v127
    %2216 = vmatpush.msra.mxu0 %v124
    %2217 = vmatpush.msra.mxu0 %v121
    %2218 = vmatpush.msra.mxu0 %v118
    %2219 = vmatmul.f32.gmra.mxu0 %v1979
    %v2220 = vpop.f32.mrf.mxu0
    %v2221 = vadd.f32 0.0, %v2220
    %2222 = vdwg.mxu0
    %v2223 = vadd.f32 %v2121, %v2181
    %v2224 = vxor.u32 %v2223, 2147483648
    %v2225 = vmul.f32 %v2224, 1.442695
    %v2226 = vpow.pop %v2225
    %v2227 = vadd.f32 %v2226, 1.0
    %v2228 = vrcp.pop %v2227
    %v2229 = vmul.f32 %v2227, %v2228
    %v2230 = vsub.f32 1.0, %v2229
    %v2231 = vmul.f32 %v2228, %v2230
    %v2232 = vadd.f32 %v2228, %v2231
    %vm2233 = vweird.f32 %v2227
    %vm2234 = vweird.f32 %v2228
    %vm2235 = vmor %vm2233, %vm2234
    %v2236 = vsel %vm2235, %v2228, %v2232
    %v2237 = vand.u32 2147483647, %v2227
    %vm2238 = vcmp.eq.f32.partialorder %v2237, 8.507059e+37
    %v2239 = vand.u32 %v2227, 2147483648
    %v2240 = vor.u32 1.1754944e-38, %v2239
    %v2241 = vsel %vm2238, %v2240, %v2236
    %v2242 = vmul.f32 1.0, %v2241
    %v2243 = vadd.f32 %v2141, %v2201
    %v2244 = vxor.u32 %v2243, 2147483648
    %v2245 = vmul.f32 %v2244, 1.442695
    %v2246 = vpow.pop %v2245
    %v2247 = vadd.f32 %v2246, 1.0
    %v2248 = vrcp.pop %v2247
    %v2249 = vmul.f32 %v2247, %v2248
    %v2250 = vsub.f32 1.0, %v2249
    %v2251 = vmul.f32 %v2248, %v2250
    %v2252 = vadd.f32 %v2248, %v2251
    %vm2253 = vweird.f32 %v2247
    %vm2254 = vweird.f32 %v2248
    %vm2255 = vmor %vm2253, %vm2254
    %v2256 = vsel %vm2255, %v2248, %v2252
    %v2257 = vand.u32 2147483647, %v2247
    %vm2258 = vcmp.eq.f32.partialorder %v2257, 8.507059e+37
    %v2259 = vand.u32 %v2247, 2147483648
    %v2260 = vor.u32 1.1754944e-38, %v2259
    %v2261 = vsel %vm2258, %v2260, %v2256
    %v2262 = vmul.f32 1.0, %v2261
    %v2263 = vadd.f32 %v2221, %v510
    %v2264 = vmul.f32 %v2242, %v2263
    %v2265 = vadd.f32 %v2161, %v2264
    %v2266 = vtanh.pop %v2265
    %v2267 = vsub.f32 1.0, %v2262
    %v2268 = vmul.f32 %v2267, %v2266
    %v2269 = vmul.f32 %v2262, %v1979
    %v2270 = vadd.f32 %v2268, %v2269
    %v2271 = vsel %vm2101, %v2270, %v1979
    %s2272 = scalar_lea.vmem [#allocation8], 12
    %2273 = vst [vmem:[%s2272] sm:$0x3] %v2271
    %s2274 = sadd.s32 %s219, 7
    %p2275 = scmp.lt.s32.totalorder %s2274, 8
    %s2276 = scalar_lea.vmem %s0, 42
    %v2277 = vld [vmem:[%s2276] sm:$0x3f]
    %2278 = vmatpush.msra.mxu0 %v112
    %2279 = vmatpush.msra.mxu0 %v109
    %2280 = vmatpush.msra.mxu0 %v106
    %2281 = vmatpush.msra.mxu0 %v103
    %2282 = vmatpush.msra.mxu0 %v100
    %2283 = vmatpush.msra.mxu0 %v97
    %2284 = vmatpush.msra.mxu0 %v94
    %2285 = vmatpush.msra.mxu0 %v91
    %2286 = vmatpush.msra.mxu0 %v88
    %2287 = vmatpush.msra.mxu0 %v85
    %2288 = vmatpush.msra.mxu0 %v82
    %2289 = vmatpush.msra.mxu0 %v79
    %2290 = vmatpush.msra.mxu0 %v76
    %2291 = vmatpush.msra.mxu0 %v73
    %2292 = vmatpush.msra.mxu0 %v70
    %2293 = vmatpush.msra.mxu0 %v67
    %2294 = vmatmul.f32.gmra.mxu0 %v2102
    %v2295 = vpop.f32.mrf.mxu0
    %v2296 = vadd.f32 0.0, %v2295
    %2297 = vdwg.mxu0
    %2298 = vmatpush.msra.mxu0 %v113
    %2299 = vmatpush.msra.mxu0 %v110
    %2300 = vmatpush.msra.mxu0 %v107
    %2301 = vmatpush.msra.mxu0 %v104
    %2302 = vmatpush.msra.mxu0 %v101
    %2303 = vmatpush.msra.mxu0 %v98
    %2304 = vmatpush.msra.mxu0 %v95
    %2305 = vmatpush.msra.mxu0 %v92
    %2306 = vmatpush.msra.mxu0 %v89
    %2307 = vmatpush.msra.mxu0 %v86
    %2308 = vmatpush.msra.mxu0 %v83
    %2309 = vmatpush.msra.mxu0 %v80
    %2310 = vmatpush.msra.mxu0 %v77
    %2311 = vmatpush.msra.mxu0 %v74
    %2312 = vmatpush.msra.mxu0 %v71
    %2313 = vmatpush.msra.mxu0 %v68
    %2314 = vmatmul.f32.gmra.mxu0 %v2102
    %v2315 = vpop.f32.mrf.mxu0
    %v2316 = vadd.f32 0.0, %v2315
    %2317 = vdwg.mxu0
    %2318 = vmatpush.msra.mxu0 %v114
    %2319 = vmatpush.msra.mxu0 %v111
    %2320 = vmatpush.msra.mxu0 %v108
    %2321 = vmatpush.msra.mxu0 %v105
    %2322 = vmatpush.msra.mxu0 %v102
    %2323 = vmatpush.msra.mxu0 %v99
    %2324 = vmatpush.msra.mxu0 %v96
    %2325 = vmatpush.msra.mxu0 %v93
    %2326 = vmatpush.msra.mxu0 %v90
    %2327 = vmatpush.msra.mxu0 %v87
    %2328 = vmatpush.msra.mxu0 %v84
    %2329 = vmatpush.msra.mxu0 %v81
    %2330 = vmatpush.msra.mxu0 %v78
    %2331 = vmatpush.msra.mxu0 %v75
    %2332 = vmatpush.msra.mxu0 %v72
    %2333 = vmatpush.msra.mxu0 %v69
    %2334 = vmatmul.f32.gmra.mxu0 %v2102
    %v2335 = vpop.f32.mrf.mxu0
    %v2336 = vadd.f32 0.0, %v2335
    %2337 = vdwg.mxu0
    %v2338 = vadd.f32 %v2277, %v2296
    %v2339 = vxor.u32 %v2338, 2147483648
    %v2340 = vmul.f32 %v2339, 1.442695
    %v2341 = vpow.pop %v2340
    %v2342 = vadd.f32 %v2341, 1.0
    %v2343 = vrcp.pop %v2342
    %v2344 = vmul.f32 %v2342, %v2343
    %v2345 = vsub.f32 1.0, %v2344
    %v2346 = vmul.f32 %v2343, %v2345
    %v2347 = vadd.f32 %v2343, %v2346
    %vm2348 = vweird.f32 %v2342
    %vm2349 = vweird.f32 %v2343
    %vm2350 = vmor %vm2348, %vm2349
    %v2351 = vsel %vm2350, %v2343, %v2347
    %v2352 = vand.u32 2147483647, %v2342
    %vm2353 = vcmp.eq.f32.partialorder %v2352, 8.507059e+37
    %v2354 = vand.u32 %v2342, 2147483648
    %v2355 = vor.u32 1.1754944e-38, %v2354
    %v2356 = vsel %vm2353, %v2355, %v2351
    %v2357 = vmul.f32 1.0, %v2356
    %v2359 = vrot.slane %v2277, 2
    %v2361 = vadd.f32 %v2359, %v2316
    %v2362 = vxor.u32 %v2361, 2147483648
    %v2363 = vmul.f32 %v2362, 1.442695
    %v2364 = vpow.pop %v2363
    %v2365 = vadd.f32 %v2364, 1.0
    %v2366 = vrcp.pop %v2365
    %v2367 = vmul.f32 %v2365, %v2366
    %v2368 = vsub.f32 1.0, %v2367
    %v2369 = vmul.f32 %v2366, %v2368
    %v2370 = vadd.f32 %v2366, %v2369
    %vm2371 = vweird.f32 %v2365
    %vm2372 = vweird.f32 %v2366
    %vm2373 = vmor %vm2371, %vm2372
    %v2374 = vsel %vm2373, %v2366, %v2370
    %v2375 = vand.u32 2147483647, %v2365
    %vm2376 = vcmp.eq.f32.partialorder %v2375, 8.507059e+37
    %v2377 = vand.u32 %v2365, 2147483648
    %v2378 = vor.u32 1.1754944e-38, %v2377
    %v2379 = vsel %vm2376, %v2378, %v2374
    %v2380 = vmul.f32 1.0, %v2379
    %v2381 = vadd.f32 %v2336, %v326
    %v2382 = vmul.f32 %v2357, %v2381
    %v2383 = vrot.slane %v2277, 4
    %v2385 = vadd.f32 %v2383, %v2382
    %v2386 = vtanh.pop %v2385
    %v2387 = vsub.f32 1.0, %v2380
    %v2388 = vmul.f32 %v2387, %v2386
    %v2389 = vmul.f32 %v2380, %v2102
    %v2390 = vadd.f32 %v2388, %v2389
    %s2391 = scalar_select %p2275, 1, 0
    %v2392 = vstv %s2391
    %vm2393 = vcmp.eq.s32.totalorder %v2392, 1
    %v2394 = vsel %vm2393, %v2390, %v2102
    %2395 = vmatpush.msra.mxu0 %v212
    %2396 = vmatpush.msra.mxu0 %v209
    %2397 = vmatpush.msra.mxu0 %v206
    %2398 = vmatpush.msra.mxu0 %v203
    %2399 = vmatpush.msra.mxu0 %v200
    %2400 = vmatpush.msra.mxu0 %v197
    %2401 = vmatpush.msra.mxu0 %v194
    %2402 = vmatpush.msra.mxu0 %v191
    %2403 = vmatpush.msra.mxu0 %v188
    %2404 = vmatpush.msra.mxu0 %v185
    %2405 = vmatpush.msra.mxu0 %v182
    %2406 = vmatpush.msra.mxu0 %v179
    %2407 = vmatpush.msra.mxu0 %v176
    %2408 = vmatpush.msra.mxu0 %v173
    %2409 = vmatpush.msra.mxu0 %v170
    %2410 = vmatpush.msra.mxu0 %v167
    %2411 = vmatmul.f32.gmra.mxu0 %v2394
    %v2412 = vpop.f32.mrf.mxu0
    %v2413 = vadd.f32 %v343, %v2412
    %2414 = vdwg.mxu0
    %2415 = vmatpush.msra.mxu0 %v213
    %2416 = vmatpush.msra.mxu0 %v210
    %2417 = vmatpush.msra.mxu0 %v207
    %2418 = vmatpush.msra.mxu0 %v204
    %2419 = vmatpush.msra.mxu0 %v201
    %2420 = vmatpush.msra.mxu0 %v198
    %2421 = vmatpush.msra.mxu0 %v195
    %2422 = vmatpush.msra.mxu0 %v192
    %2423 = vmatpush.msra.mxu0 %v189
    %2424 = vmatpush.msra.mxu0 %v186
    %2425 = vmatpush.msra.mxu0 %v183
    %2426 = vmatpush.msra.mxu0 %v180
    %2427 = vmatpush.msra.mxu0 %v177
    %2428 = vmatpush.msra.mxu0 %v174
    %2429 = vmatpush.msra.mxu0 %v171
    %2430 = vmatpush.msra.mxu0 %v168
    %2431 = vmatmul.f32.gmra.mxu0 %v2394
    %v2432 = vpop.f32.mrf.mxu0
    %v2433 = vadd.f32 %v344, %v2432
    %2434 = vdwg.mxu0
    %2435 = vmatpush.msra.mxu0 %v214
    %2436 = vmatpush.msra.mxu0 %v211
    %2437 = vmatpush.msra.mxu0 %v208
    %2438 = vmatpush.msra.mxu0 %v205
    %2439 = vmatpush.msra.mxu0 %v202
    %2440 = vmatpush.msra.mxu0 %v199
    %2441 = vmatpush.msra.mxu0 %v196
    %2442 = vmatpush.msra.mxu0 %v193
    %2443 = vmatpush.msra.mxu0 %v190
    %2444 = vmatpush.msra.mxu0 %v187
    %2445 = vmatpush.msra.mxu0 %v184
    %2446 = vmatpush.msra.mxu0 %v181
    %2447 = vmatpush.msra.mxu0 %v178
    %2448 = vmatpush.msra.mxu0 %v175
    %2449 = vmatpush.msra.mxu0 %v172
    %2450 = vmatpush.msra.mxu0 %v169
    %2451 = vmatmul.f32.gmra.mxu0 %v2394
    %v2452 = vpop.f32.mrf.mxu0
    %v2453 = vadd.f32 %v345, %v2452
    %2454 = vdwg.mxu0
    %2455 = vmatpush.msra.mxu0 %v161
    %2456 = vmatpush.msra.mxu0 %v158
    %2457 = vmatpush.msra.mxu0 %v155
    %2458 = vmatpush.msra.mxu0 %v152
    %2459 = vmatpush.msra.mxu0 %v149
    %2460 = vmatpush.msra.mxu0 %v146
    %2461 = vmatpush.msra.mxu0 %v143
    %2462 = vmatpush.msra.mxu0 %v140
    %2463 = vmatpush.msra.mxu0 %v137
    %2464 = vmatpush.msra.mxu0 %v134
    %2465 = vmatpush.msra.mxu0 %v131
    %2466 = vmatpush.msra.mxu0 %v128
    %2467 = vmatpush.msra.mxu0 %v125
    %2468 = vmatpush.msra.mxu0 %v122
    %2469 = vmatpush.msra.mxu0 %v119
    %2470 = vmatpush.msra.mxu0 %v116
    %2471 = vmatmul.f32.gmra.mxu0 %v2271
    %v2472 = vpop.f32.mrf.mxu0
    %v2473 = vadd.f32 0.0, %v2472
    %2474 = vdwg.mxu0
    %2475 = vmatpush.msra.mxu0 %v162
    %2476 = vmatpush.msra.mxu0 %v159
    %2477 = vmatpush.msra.mxu0 %v156
    %2478 = vmatpush.msra.mxu0 %v153
    %2479 = vmatpush.msra.mxu0 %v150
    %2480 = vmatpush.msra.mxu0 %v147
    %2481 = vmatpush.msra.mxu0 %v144
    %2482 = vmatpush.msra.mxu0 %v141
    %2483 = vmatpush.msra.mxu0 %v138
    %2484 = vmatpush.msra.mxu0 %v135
    %2485 = vmatpush.msra.mxu0 %v132
    %2486 = vmatpush.msra.mxu0 %v129
    %2487 = vmatpush.msra.mxu0 %v126
    %2488 = vmatpush.msra.mxu0 %v123
    %2489 = vmatpush.msra.mxu0 %v120
    %2490 = vmatpush.msra.mxu0 %v117
    %2491 = vmatmul.f32.gmra.mxu0 %v2271
    %v2492 = vpop.f32.mrf.mxu0
    %v2493 = vadd.f32 0.0, %v2492
    %2494 = vdwg.mxu0
    %2495 = vmatpush.msra.mxu0 %v163
    %2496 = vmatpush.msra.mxu0 %v160
    %2497 = vmatpush.msra.mxu0 %v157
    %2498 = vmatpush.msra.mxu0 %v154
    %2499 = vmatpush.msra.mxu0 %v151
    %2500 = vmatpush.msra.mxu0 %v148
    %2501 = vmatpush.msra.mxu0 %v145
    %2502 = vmatpush.msra.mxu0 %v142
    %2503 = vmatpush.msra.mxu0 %v139
    %2504 = vmatpush.msra.mxu0 %v136
    %2505 = vmatpush.msra.mxu0 %v133
    %2506 = vmatpush.msra.mxu0 %v130
    %2507 = vmatpush.msra.mxu0 %v127
    %2508 = vmatpush.msra.mxu0 %v124
    %2509 = vmatpush.msra.mxu0 %v121
    %2510 = vmatpush.msra.mxu0 %v118
    %2511 = vmatmul.f32.gmra.mxu0 %v2271
    %v2512 = vpop.f32.mrf.mxu0
    %v2513 = vadd.f32 0.0, %v2512
    %2514 = vdwg.mxu0
    %v2515 = vadd.f32 %v2413, %v2473
    %v2516 = vxor.u32 %v2515, 2147483648
    %v2517 = vmul.f32 %v2516, 1.442695
    %v2518 = vpow.pop %v2517
    %v2519 = vadd.f32 %v2518, 1.0
    %v2520 = vrcp.pop %v2519
    %v2521 = vmul.f32 %v2519, %v2520
    %v2522 = vsub.f32 1.0, %v2521
    %v2523 = vmul.f32 %v2520, %v2522
    %v2524 = vadd.f32 %v2520, %v2523
    %vm2525 = vweird.f32 %v2519
    %vm2526 = vweird.f32 %v2520
    %vm2527 = vmor %vm2525, %vm2526
    %v2528 = vsel %vm2527, %v2520, %v2524
    %v2529 = vand.u32 2147483647, %v2519
    %vm2530 = vcmp.eq.f32.partialorder %v2529, 8.507059e+37
    %v2531 = vand.u32 %v2519, 2147483648
    %v2532 = vor.u32 1.1754944e-38, %v2531
    %v2533 = vsel %vm2530, %v2532, %v2528
    %v2534 = vmul.f32 1.0, %v2533
    %v2535 = vadd.f32 %v2433, %v2493
    %v2536 = vxor.u32 %v2535, 2147483648
    %v2537 = vmul.f32 %v2536, 1.442695
    %v2538 = vpow.pop %v2537
    %v2539 = vadd.f32 %v2538, 1.0
    %v2540 = vrcp.pop %v2539
    %v2541 = vmul.f32 %v2539, %v2540
    %v2542 = vsub.f32 1.0, %v2541
    %v2543 = vmul.f32 %v2540, %v2542
    %v2544 = vadd.f32 %v2540, %v2543
    %vm2545 = vweird.f32 %v2539
    %vm2546 = vweird.f32 %v2540
    %vm2547 = vmor %vm2545, %vm2546
    %v2548 = vsel %vm2547, %v2540, %v2544
    %v2549 = vand.u32 2147483647, %v2539
    %vm2550 = vcmp.eq.f32.partialorder %v2549, 8.507059e+37
    %v2551 = vand.u32 %v2539, 2147483648
    %v2552 = vor.u32 1.1754944e-38, %v2551
    %v2553 = vsel %vm2550, %v2552, %v2548
    %v2554 = vmul.f32 1.0, %v2553
    %v2555 = vadd.f32 %v2513, %v510
    %v2556 = vmul.f32 %v2534, %v2555
    %v2557 = vadd.f32 %v2453, %v2556
    %v2558 = vtanh.pop %v2557
    %v2559 = vsub.f32 1.0, %v2554
    %v2560 = vmul.f32 %v2559, %v2558
    %v2561 = vmul.f32 %v2554, %v2271
    %v2562 = vadd.f32 %v2560, %v2561
    %v2563 = vsel %vm2393, %v2562, %v2271
    %s2564 = scalar_lea.vmem [#allocation8], 14
    %2565 = vst [vmem:[%s2564] sm:$0x3] %v2563
    %2566 = vst [vmem:[#allocation2] sm:$0x3] %v2394
    %2567 = vst [vmem:[%s217] sm:$0x3] %v2563
    %v2568 = vld [vmem:[#allocation2] sm:$0x3]
    %v2569 = vld [vmem:[#allocation2 + $0x2] sm:$0x3]
    %2570 = vst [vmem:[#allocation9] sm:$0x3] %v2568
    %2571 = vst [vmem:[#allocation9 + $0x2] sm:$0x3] %v2569
    // Predicated region
    $region38: #{cpcar_gru_forward.1} parent=1 // pred_check
      _
    $region39: #{cpcar_gru_forward.1} parent=1 // pred_check_branch
      %2573 = sbr.rel (0) target = $region41
    $region40: #{cpcar_gru_forward.1} parent=1 // pred_region
      %2575 = vsyncadd [#allocation5], 0
      %s2576 = sshll.u32 [#allocation8], 4
      %s2577 = int_to_ptr.vmem [resolvable:$true] %s2576
      %s2578 = sshll.u32 %s6, 4
      %s2579 = int_to_ptr.hbm [resolvable:$true] %s2578
      %2584 = dma.vmem_to_hbm [thread:$0]  %s2577, 256, %s2579, [#allocation5], 32, 32, 2
    $region41: #{cpcar_gru_forward.1} parent=1 // pred_fallthru
      _
    // Predicated region
    $region42: #{cpcar_gru_forward.1} parent=1 // pred_check
      _
    $region43: #{cpcar_gru_forward.1} parent=1 // pred_check_branch
      %2586 = sbr.rel (0) target = $region45
    $region44: #{cpcar_gru_forward.1} parent=1 // pred_region
      %2588 = vsyncadd [#allocation10], 0
      %s2589 = sshll.u32 [#allocation9], 4
      %s2590 = int_to_ptr.vmem [resolvable:$true] %s2589
      %s2591 = sshll.u32 %s7, 4
      %s2592 = int_to_ptr.hbm [resolvable:$true] %s2591
      %2597 = dma.vmem_to_hbm [thread:$0]  %s2590, 64, %s2592, [#allocation10], 32, 32, 2
    $region45: #{cpcar_gru_forward.1} parent=1 // pred_fallthru
      _
    // Predicated region
    $region46: #{cpcar_gru_forward.1} parent=1 // pred_check
      _
    $region47: #{cpcar_gru_forward.1} parent=1 // pred_check_branch
      %2599 = sbr.rel (0) target = $region49
    $region48: #{cpcar_gru_forward.1} parent=1 // pred_region
      %2601 = dma.done [#allocation5], 256
    $region49: #{cpcar_gru_forward.1} parent=1 // pred_fallthru
      _
    // Predicated region
    $region50: #{cpcar_gru_forward.1} parent=1 // pred_check
      _
    $region51: #{cpcar_gru_forward.1} parent=1 // pred_check_branch
      %2603 = sbr.rel (0) target = $region53
    $region52: #{cpcar_gru_forward.1} parent=1 // pred_region
      %2605 = dma.done [#allocation10], 64
    $region53: #{cpcar_gru_forward.1} parent=1 // pred_fallthru
      _
    %2606 = vsyncpa [#allocation4], 1
    %2607 = vsyncpa [#allocation7], 1
    %2608 = vsyncpa [#allocation5], 1
    %2609 = vsyncpa [#allocation10], 1

</llo_original>
